<compile_context>
chip_gen: v5e
topology: v5e:2x2
jax: 0.10.0
libtpu: 0.0.40
codegen_flags: <defaults>
</compile_context>

<pallas_src>
import jax
import jax.numpy as jnp
from jax.experimental import pallas as pl
from jax.experimental.pallas import tpu as pltpu


# ---------------------------------------------------------------------------
# Fused conv(GEMM) + BatchNorm(train) + ReLU (+ residual) Pallas kernel.
# ---------------------------------------------------------------------------
def _make_conv_kernel(use_bn, relu, add_residual, eps):
    def kernel(*refs):
        it = iter(refs)
        p_ref = next(it)                              # (R, K)  im2col patches
        w_ref = next(it)                              # (K, C)  weight matrix
        g_ref = next(it) if use_bn else None          # (1, C)
        b_ref = next(it) if use_bn else None          # (1, C)
        r_ref = next(it) if add_residual else None    # (R, C)
        o_ref = next(it)                              # (R, C)

        y = jnp.dot(p_ref[...], w_ref[...], preferred_element_type=jnp.float32)
        if use_bn:
            # training-mode BatchNorm: per-channel stats over all rows (N*H*W)
            mean = jnp.mean(y, axis=0, keepdims=True)
            var = jnp.mean(jnp.square(y - mean), axis=0, keepdims=True)
            y = (y - mean) * (jax.lax.rsqrt(var + eps) * g_ref[...]) + b_ref[...]
        if relu:
            y = jnp.maximum(y, 0.0)
        if add_residual:
            y = y + r_ref[...].astype(jnp.float32)
        o_ref[...] = y.astype(o_ref.dtype)

    return kernel


def conv2d_bn_act(x_nhwc, w_oihw, *, stride=1, pad=0, pad_mode='zero',
                  gamma=None, beta=None, relu=False, residual=None, eps=1e-5):
    """Conv2d (+ BatchNorm + ReLU + residual) in NHWC via one fused Pallas GEMM."""
    N, H, W, Cin = x_nhwc.shape
    Cout, Cin_w, KH, KW = w_oihw.shape
    assert Cin == Cin_w
    if pad > 0:
        mode = 'reflect' if pad_mode == 'reflect' else 'constant'
        x_nhwc = jnp.pad(x_nhwc, ((0, 0), (pad, pad), (pad, pad), (0, 0)), mode=mode)
    Hp, Wp = x_nhwc.shape[1], x_nhwc.shape[2]
    Ho = (Hp - KH) // stride + 1
    Wo = (Wp - KW) // stride + 1

    # im2col: pure data-movement glue feeding the Pallas GEMM (channels last).
    taps = []
    for i in range(KH):
        for j in range(KW):
            taps.append(x_nhwc[:, i:i + stride * (Ho - 1) + 1:stride,
                               j:j + stride * (Wo - 1) + 1:stride, :])
    patches = jnp.stack(taps, axis=3).reshape(N * Ho * Wo, KH * KW * Cin)
    wmat = jnp.transpose(w_oihw, (2, 3, 1, 0)).reshape(KH * KW * Cin, Cout)

    R, K = patches.shape
    use_bn = gamma is not None
    add_residual = residual is not None

    operands = [patches, wmat]
    in_specs = [pl.BlockSpec((R, K), lambda i: (0, 0)),
                pl.BlockSpec((K, Cout), lambda i: (0, 0))]
    if use_bn:
        operands += [gamma.reshape(1, Cout).astype(jnp.float32),
                     beta.reshape(1, Cout).astype(jnp.float32)]
        in_specs += [pl.BlockSpec((1, Cout), lambda i: (0, 0)),
                     pl.BlockSpec((1, Cout), lambda i: (0, 0))]
    if add_residual:
        operands.append(residual.reshape(R, Cout))
        in_specs.append(pl.BlockSpec((R, Cout), lambda i: (0, 0)))

    bytes_accessed = int(sum(op.size * op.dtype.itemsize for op in operands)
                         + R * Cout * x_nhwc.dtype.itemsize)

    out2d = pl.pallas_call(
        _make_conv_kernel(use_bn, relu, add_residual, eps),
        out_shape=jax.ShapeDtypeStruct((R, Cout), x_nhwc.dtype),
        # Activations are tiny at these shapes: a single lane-dense full-array
        # block (biggest block that fits VMEM -> fewest grid steps).
        grid=(1,),
        in_specs=in_specs,
        out_specs=pl.BlockSpec((R, Cout), lambda i: (0, 0)),
        compiler_params=pltpu.CompilerParams(dimension_semantics=("arbitrary",)),
        cost_estimate=pl.CostEstimate(flops=2 * R * K * Cout, transcendentals=0,
                                      bytes_accessed=bytes_accessed),
    )(*operands)
    return out2d.reshape(N, Ho, Wo, Cout)


# ---------------------------------------------------------------------------
# Encoder forward (Pallas) and pure-JAX reference.
# ---------------------------------------------------------------------------
def encoder_forward(x_nchw, params):
    x = jnp.transpose(x_nchw, (0, 2, 3, 1))                      # NCHW -> NHWC
    stem = params['stem']
    pad0 = (stem['w'].shape[-1] - 1) // 2
    h = conv2d_bn_act(x, stem['w'], stride=1, pad=pad0, pad_mode='reflect',
                      gamma=stem['gamma'], beta=stem['beta'], relu=True)
    for lyr in params['down']:
        h = conv2d_bn_act(h, lyr['w'], stride=2, pad=1, pad_mode='zero',
                          gamma=lyr['gamma'], beta=lyr['beta'], relu=True)
    for blk in params['blocks']:
        r = h
        t = conv2d_bn_act(h, blk['w1'], stride=1, pad=1, pad_mode='reflect',
                          gamma=blk['g1'], beta=blk['b1'], relu=True)
        h = conv2d_bn_act(t, blk['w2'], stride=1, pad=1, pad_mode='reflect',
                          gamma=blk['g2'], beta=blk['b2'], relu=False, residual=r)
    z = conv2d_bn_act(h, params['proj_w'], stride=1, pad=1, pad_mode='zero')
    return jnp.transpose(z, (0, 3, 1, 2))                        # NHWC -> NCHW


def _ref_conv(x, w_oihw, stride, pad, pad_mode):
    if pad > 0:
        mode = 'reflect' if pad_mode == 'reflect' else 'constant'
        x = jnp.pad(x, ((0, 0), (pad, pad), (pad, pad), (0, 0)), mode=mode)
    w = jnp.transpose(w_oihw, (2, 3, 1, 0))                      # HWIO
    return jax.lax.conv_general_dilated(
        x, w, window_strides=(stride, stride), padding='VALID',
        dimension_numbers=('NHWC', 'HWIO', 'NHWC'),
        precision=jax.lax.Precision.HIGHEST)


def _ref_bn(x, gamma, beta, eps=1e-5):
    mean = jnp.mean(x, axis=(0, 1, 2), keepdims=True)
    var = jnp.mean(jnp.square(x - mean), axis=(0, 1, 2), keepdims=True)
    return (x - mean) * jax.lax.rsqrt(var + eps) * gamma + beta


def encoder_forward_ref(x_nchw, params, eps=1e-5):
    x = jnp.transpose(x_nchw, (0, 2, 3, 1))
    stem = params['stem']
    pad0 = (stem['w'].shape[-1] - 1) // 2
    h = _ref_conv(x, stem['w'], 1, pad0, 'reflect')
    h = jnp.maximum(_ref_bn(h, stem['gamma'], stem['beta'], eps), 0.0)
    for lyr in params['down']:
        h = _ref_conv(h, lyr['w'], 2, 1, 'zero')
        h = jnp.maximum(_ref_bn(h, lyr['gamma'], lyr['beta'], eps), 0.0)
    for blk in params['blocks']:
        r = h
        t = _ref_conv(h, blk['w1'], 1, 1, 'reflect')
        t = jnp.maximum(_ref_bn(t, blk['g1'], blk['b1'], eps), 0.0)
        t = _ref_conv(t, blk['w2'], 1, 1, 'reflect')
        h = r + _ref_bn(t, blk['g2'], blk['b2'], eps)
    z = _ref_conv(h, params['proj_w'], 1, 1, 'zero')
    return jnp.transpose(z, (0, 3, 1, 2))


def init_encoder_params(key, input_nc=3, ngf=32, max_ngf=512, C_channel=16,
                        n_blocks=2, n_downsampling=2, first_kernel=7):
    keys = iter(jax.random.split(key, 64))

    def conv_w(cout, cin, k):
        return jax.random.normal(next(keys), (cout, cin, k, k),
                                 jnp.float32) / ((cin * k * k) ** 0.5)

    def bn(c):
        g = 1.0 + 0.1 * jax.random.normal(next(keys), (c,), jnp.float32)
        b = 0.1 * jax.random.normal(next(keys), (c,), jnp.float32)
        return g, b

    c0 = min(ngf, max_ngf)
    g, b = bn(c0)
    params = {'stem': {'w': conv_w(c0, input_nc, first_kernel), 'gamma': g, 'beta': b},
              'down': [], 'blocks': []}
    c_in = c0
    for i in range(n_downsampling):
        c_out = min(ngf * (2 ** i) * 2, max_ngf)
        g, b = bn(c_out)
        params['down'].append({'w': conv_w(c_out, c_in, 3), 'gamma': g, 'beta': b})
        c_in = c_out
    for _ in range(n_blocks):
        g1, b1 = bn(c_in)
        g2, b2 = bn(c_in)
        params['blocks'].append({'w1': conv_w(c_in, c_in, 3), 'g1': g1, 'b1': b1,
                                 'w2': conv_w(c_in, c_in, 3), 'g2': g2, 'b2': b2})
    params['proj_w'] = conv_w(C_channel, c_in, 3)
    return params


# ---------------------------------------------------------------------------
# The previously-reviewed nearest-neighbour 2x upsample kernel, optimized per
# the performance feedback (lane-dense output, batched planes, parallel grid).
# ---------------------------------------------------------------------------
def _upsample2x_kernel(x_ref, r_ref, o_ref):
    # x_ref: (B*H, W) rows of B planes; r_ref: (W, 2W) one-hot interleave
    # (r[w, 2w] = r[w, 2w+1] = 1); o_ref: (B*H, 4W) lane-dense output.
    # Width duplication happens in-register (MXU lane interleave); row
    # duplication falls out of the layout: output rows 2i and 2i+1 are
    # identical, so one stored row of length 4W holds both -> every store is a
    # full, unmasked lane-dense vst.
    xw = jnp.dot(x_ref[...], r_ref[...],
                 preferred_element_type=jnp.float32).astype(o_ref.dtype)
    o_ref[...] = jnp.concatenate([xw, xw], axis=-1)


def upsample_nearest_2x(x, planes_per_block=None):
    """Nearest-neighbour 2x spatial upsample of an NCHW tensor."""
    N, C, H, W = x.shape
    NC = N * C
    xf = x.reshape(NC * H, W)

    if planes_per_block is None:
        plane_bytes = H * W * x.dtype.itemsize
        planes_per_block = max(1, min(NC, (1 << 20) // max(1, plane_bytes)))
        if planes_per_block == NC and NC >= 2:
            planes_per_block = max(1, NC // 2)   # >=2 grid steps (2 TCs on v7x)
    B = max(1, min(NC, planes_per_block))
    while NC % B:
        B -= 1
    if (B * H) % 8 and B != NC:                  # keep sublane-aligned blocks
        B = NC
    rows = B * H
    grid = (NC // B,)

    interleave = (jnp.arange(2 * W)[None, :] // 2
                  == jnp.arange(W)[:, None]).astype(x.dtype)

    out = pl.pallas_call(
        _upsample2x_kernel,
        out_shape=jax.ShapeDtypeStruct((NC * H, 4 * W), x.dtype),
        grid=grid,
        in_specs=[pl.BlockSpec((rows, W), lambda i: (i, 0)),
                  pl.BlockSpec((W, 2 * W), lambda i: (0, 0))],
        out_specs=pl.BlockSpec((rows, 4 * W), lambda i: (i, 0)),
        compiler_params=pltpu.CompilerParams(dimension_semantics=("parallel",)),
        cost_estimate=pl.CostEstimate(flops=0, transcendentals=0,
                                      bytes_accessed=5 * NC * H * W * x.dtype.itemsize),
    )(xf, interleave)
    # (NC*H, 4W) -> (N, C, 2H, 2W) is an exact row-major regroup (free).
    return out.reshape(N, C, 2 * H, 2 * W)


if __name__ == "__main__":
    key = jax.random.PRNGKey(0)
    k_x, k_p, k_u = jax.random.split(key, 3)

    # Encoder at small, spec-consistent shapes: batch=2, input_nc=3, 16x16
    # images, ngf=32 (channels 32 -> 64 -> 128), n_downsampling=2, n_blocks=2,
    # C_channel=16, first_kernel=7.  Output: (2, 16, 4, 4).
    x = jax.random.normal(k_x, (2, 3, 16, 16), dtype=jnp.float32)
    params = init_encoder_params(k_p, input_nc=3, ngf=32, max_ngf=512,
                                 C_channel=16, n_blocks=2, n_downsampling=2,
                                 first_kernel=7)

    z = jax.jit(encoder_forward)(x, params)
    jax.block_until_ready(z)
    z_ref = encoder_forward_ref(x, params)
    assert z.shape == (2, 16, 4, 4), z.shape
    assert z.dtype == x.dtype
    assert bool(jnp.allclose(z, z_ref, rtol=2e-2, atol=2e-2)), (
        float(jnp.max(jnp.abs(z - z_ref))))

    # Reviewed upsample kernel check (inputs rounded through bf16 so the
    # one-hot MXU interleave is bit-exact regardless of matmul pass count).
    xu = jax.random.normal(k_u, (2, 4, 16, 16), dtype=jnp.float32)
    xu = xu.astype(jnp.bfloat16).astype(jnp.float32)
    yu = upsample_nearest_2x(xu)
    jax.block_until_ready(yu)
    ref_u = jnp.repeat(jnp.repeat(xu, 2, axis=2), 2, axis=3)
    assert yu.shape == (2, 4, 32, 32), yu.shape
    assert bool(jnp.allclose(yu, ref_u)), "upsample mismatch"

    print("KERNEL_OK")
</pallas_src>

<mosaic_0001>
module attributes {stable_mosaic.version = 11 : i64} {
  func.func @kernel(%arg0: i32, %arg1: memref<512x147xf32, #tpu.memory_space<vmem>>, %arg2: memref<147x32xf32, #tpu.memory_space<vmem>>, %arg3: memref<1x32xf32, #tpu.memory_space<vmem>>, %arg4: memref<1x32xf32, #tpu.memory_space<vmem>>, %arg5: memref<512x32xf32, #tpu.memory_space<vmem>>) attributes {dimension_semantics = [#tpu.dimension_semantics<arbitrary>], iteration_bounds = array<i64: 1>, scalar_prefetch = 0 : i64, scratch_operands = 0 : i64, tpu.core_type = #tpu.core_type<tc>, window_params = [{pipeline_mode = #tpu.pipeline_mode<synchronous>, transform_indices = @transform_0, window_bounds = array<i64: 512, 147>}, {pipeline_mode = #tpu.pipeline_mode<synchronous>, transform_indices = @transform_1, window_bounds = array<i64: 147, 32>}, {pipeline_mode = #tpu.pipeline_mode<synchronous>, transform_indices = @transform_2, window_bounds = array<i64: 1, 32>}, {pipeline_mode = #tpu.pipeline_mode<synchronous>, transform_indices = @transform_3, window_bounds = array<i64: 1, 32>}, {pipeline_mode = #tpu.pipeline_mode<synchronous>, transform_indices = @transform_4, window_bounds = array<i64: 512, 32>}]} {
    %c0 = arith.constant 0 : index
    %c0_0 = arith.constant 0 : index
    %0 = vector.load %arg1[%c0, %c0_0] : memref<512x147xf32, #tpu.memory_space<vmem>>, vector<512x147xf32>
    %c0_1 = arith.constant 0 : index
    %c0_2 = arith.constant 0 : index
    %1 = vector.load %arg2[%c0_1, %c0_2] : memref<147x32xf32, #tpu.memory_space<vmem>>, vector<147x32xf32>
    %cst = arith.constant dense<0.000000e+00> : vector<512x32xf32>
    %2 = tpu.matmul %0, %1, %cst {dimension_numbers = #tpu.dot_dimension_numbers<[1], [0], [0], [1], [0, 0, 1, 1], [], []>} : vector<512x147xf32>, vector<147x32xf32>, vector<512x32xf32> -> vector<512x32xf32>
    %cst_3 = arith.constant dense<0.000000e+00> : vector<32xf32>
    %3 = vector.multi_reduction <add>, %2, %cst_3 [0] : vector<512x32xf32> to vector<32xf32>
    %4 = vector.shape_cast %3 : vector<32xf32> to vector<1x32xf32>
    %cst_4 = arith.constant 5.120000e+02 : f32
    %5 = vector.broadcast %cst_4 : f32 to vector<1x32xf32>
    %6 = arith.divf %4, %5 : vector<1x32xf32>
    %7 = vector.broadcast %6 : vector<1x32xf32> to vector<512x32xf32>
    %8 = arith.subf %2, %7 : vector<512x32xf32>
    %9 = arith.mulf %8, %8 : vector<512x32xf32>
    %cst_5 = arith.constant dense<0.000000e+00> : vector<32xf32>
    %10 = vector.multi_reduction <add>, %9, %cst_5 [0] : vector<512x32xf32> to vector<32xf32>
    %11 = vector.shape_cast %10 : vector<32xf32> to vector<1x32xf32>
    %cst_6 = arith.constant 5.120000e+02 : f32
    %12 = vector.broadcast %cst_6 : f32 to vector<1x32xf32>
    %13 = arith.divf %11, %12 : vector<1x32xf32>
    %14 = vector.broadcast %6 : vector<1x32xf32> to vector<512x32xf32>
    %15 = arith.subf %2, %14 : vector<512x32xf32>
    %cst_7 = arith.constant 9.99999974E-6 : f32
    %16 = vector.broadcast %cst_7 : f32 to vector<1x32xf32>
    %17 = arith.addf %13, %16 : vector<1x32xf32>
    %18 = math.rsqrt %17 : vector<1x32xf32>
    %c0_8 = arith.constant 0 : index
    %c0_9 = arith.constant 0 : index
    %19 = vector.load %arg3[%c0_8, %c0_9] : memref<1x32xf32, #tpu.memory_space<vmem>>, vector<1x32xf32>
    %20 = arith.mulf %18, %19 : vector<1x32xf32>
    %21 = vector.broadcast %20 : vector<1x32xf32> to vector<512x32xf32>
    %22 = arith.mulf %15, %21 : vector<512x32xf32>
    %c0_10 = arith.constant 0 : index
    %c0_11 = arith.constant 0 : index
    %23 = vector.load %arg4[%c0_10, %c0_11] : memref<1x32xf32, #tpu.memory_space<vmem>>, vector<1x32xf32>
    %24 = vector.broadcast %23 : vector<1x32xf32> to vector<512x32xf32>
    %25 = arith.addf %22, %24 : vector<512x32xf32>
    %cst_12 = arith.constant 0.000000e+00 : f32
    %26 = vector.broadcast %cst_12 : f32 to vector<512x32xf32>
    %27 = arith.maximumf %25, %26 : vector<512x32xf32>
    %c0_13 = arith.constant 0 : index
    %c0_14 = arith.constant 0 : index
    %28 = vector.load %arg5[%c0_13, %c0_14] : memref<512x32xf32, #tpu.memory_space<vmem>>, vector<512x32xf32>
    tpu.vector_store %arg5[%c0_13, %c0_14], %27 {strides = array<i32>} : memref<512x32xf32, #tpu.memory_space<vmem>>, vector<512x32xf32>,
    return
  }
  func.func @transform_0(%arg0: i32) -> (i32, i32) {
    %c0_i32 = arith.constant 0 : i32
    %c0_i32_0 = arith.constant 0 : i32
    %c0_i32_1 = arith.constant 0 : i32
    return %c0_i32, %c0_i32_0 : i32, i32
  }
  func.func @transform_1(%arg0: i32) -> (i32, i32) {
    %c0_i32 = arith.constant 0 : i32
    %c0_i32_0 = arith.constant 0 : i32
    %c0_i32_1 = arith.constant 0 : i32
    return %c0_i32, %c0_i32_0 : i32, i32
  }
  func.func @transform_2(%arg0: i32) -> (i32, i32) {
    %c0_i32 = arith.constant 0 : i32
    %c0_i32_0 = arith.constant 0 : i32
    %c0_i32_1 = arith.constant 0 : i32
    return %c0_i32, %c0_i32_0 : i32, i32
  }
  func.func @transform_3(%arg0: i32) -> (i32, i32) {
    %c0_i32 = arith.constant 0 : i32
    %c0_i32_0 = arith.constant 0 : i32
    %c0_i32_1 = arith.constant 0 : i32
    return %c0_i32, %c0_i32_0 : i32, i32
  }
  func.func @transform_4(%arg0: i32) -> (i32, i32) {
    %c0_i32 = arith.constant 0 : i32
    %c0_i32_0 = arith.constant 0 : i32
    %c0_i32_1 = arith.constant 0 : i32
    return %c0_i32, %c0_i32_0 : i32, i32
  }
}

module attributes {stable_mosaic.version = 11 : i64} {
  func.func @kernel(%arg0: i32, %arg1: memref<128x288xf32, #tpu.memory_space<vmem>>, %arg2: memref<288x64xf32, #tpu.memory_space<vmem>>, %arg3: memref<1x64xf32, #tpu.memory_space<vmem>>, %arg4: memref<1x64xf32, #tpu.memory_space<vmem>>, %arg5: memref<128x64xf32, #tpu.memory_space<vmem>>) attributes {dimension_semantics = [#tpu.dimension_semantics<arbitrary>], iteration_bounds = array<i64: 1>, scalar_prefetch = 0 : i64, scratch_operands = 0 : i64, tpu.core_type = #tpu.core_type<tc>, window_params = [{pipeline_mode = #tpu.pipeline_mode<synchronous>, transform_indices = @transform_0, window_bounds = array<i64: 128, 288>}, {pipeline_mode = #tpu.pipeline_mode<synchronous>, transform_indices = @transform_1, window_bounds = array<i64: 288, 64>}, {pipeline_mode = #tpu.pipeline_mode<synchronous>, transform_indices = @transform_2, window_bounds = array<i64: 1, 64>}, {pipeline_mode = #tpu.pipeline_mode<synchronous>, transform_indices = @transform_3, window_bounds = array<i64: 1, 64>}, {pipeline_mode = #tpu.pipeline_mode<synchronous>, transform_indices = @transform_4, window_bounds = array<i64: 128, 64>}]} {
    %c0 = arith.constant 0 : index
    %c0_0 = arith.constant 0 : index
    %0 = vector.load %arg1[%c0, %c0_0] : memref<128x288xf32, #tpu.memory_space<vmem>>, vector<128x288xf32>
    %c0_1 = arith.constant 0 : index
    %c0_2 = arith.constant 0 : index
    %1 = vector.load %arg2[%c0_1, %c0_2] : memref<288x64xf32, #tpu.memory_space<vmem>>, vector<288x64xf32>
    %cst = arith.constant dense<0.000000e+00> : vector<128x64xf32>
    %2 = tpu.matmul %0, %1, %cst {dimension_numbers = #tpu.dot_dimension_numbers<[1], [0], [0], [1], [0, 0, 1, 1], [], []>} : vector<128x288xf32>, vector<288x64xf32>, vector<128x64xf32> -> vector<128x64xf32>
    %cst_3 = arith.constant dense<0.000000e+00> : vector<64xf32>
    %3 = vector.multi_reduction <add>, %2, %cst_3 [0] : vector<128x64xf32> to vector<64xf32>
    %4 = vector.shape_cast %3 : vector<64xf32> to vector<1x64xf32>
    %cst_4 = arith.constant 1.280000e+02 : f32
    %5 = vector.broadcast %cst_4 : f32 to vector<1x64xf32>
    %6 = arith.divf %4, %5 : vector<1x64xf32>
    %7 = vector.broadcast %6 : vector<1x64xf32> to vector<128x64xf32>
    %8 = arith.subf %2, %7 : vector<128x64xf32>
    %9 = arith.mulf %8, %8 : vector<128x64xf32>
    %cst_5 = arith.constant dense<0.000000e+00> : vector<64xf32>
    %10 = vector.multi_reduction <add>, %9, %cst_5 [0] : vector<128x64xf32> to vector<64xf32>
    %11 = vector.shape_cast %10 : vector<64xf32> to vector<1x64xf32>
    %cst_6 = arith.constant 1.280000e+02 : f32
    %12 = vector.broadcast %cst_6 : f32 to vector<1x64xf32>
    %13 = arith.divf %11, %12 : vector<1x64xf32>
    %14 = vector.broadcast %6 : vector<1x64xf32> to vector<128x64xf32>
    %15 = arith.subf %2, %14 : vector<128x64xf32>
    %cst_7 = arith.constant 9.99999974E-6 : f32
    %16 = vector.broadcast %cst_7 : f32 to vector<1x64xf32>
    %17 = arith.addf %13, %16 : vector<1x64xf32>
    %18 = math.rsqrt %17 : vector<1x64xf32>
    %c0_8 = arith.constant 0 : index
    %c0_9 = arith.constant 0 : index
    %19 = vector.load %arg3[%c0_8, %c0_9] : memref<1x64xf32, #tpu.memory_space<vmem>>, vector<1x64xf32>
    %20 = arith.mulf %18, %19 : vector<1x64xf32>
    %21 = vector.broadcast %20 : vector<1x64xf32> to vector<128x64xf32>
    %22 = arith.mulf %15, %21 : vector<128x64xf32>
    %c0_10 = arith.constant 0 : index
    %c0_11 = arith.constant 0 : index
    %23 = vector.load %arg4[%c0_10, %c0_11] : memref<1x64xf32, #tpu.memory_space<vmem>>, vector<1x64xf32>
    %24 = vector.broadcast %23 : vector<1x64xf32> to vector<128x64xf32>
    %25 = arith.addf %22, %24 : vector<128x64xf32>
    %cst_12 = arith.constant 0.000000e+00 : f32
    %26 = vector.broadcast %cst_12 : f32 to vector<128x64xf32>
    %27 = arith.maximumf %25, %26 : vector<128x64xf32>
    %c0_13 = arith.constant 0 : index
    %c0_14 = arith.constant 0 : index
    %28 = vector.load %arg5[%c0_13, %c0_14] : memref<128x64xf32, #tpu.memory_space<vmem>>, vector<128x64xf32>
    tpu.vector_store %arg5[%c0_13, %c0_14], %27 {strides = array<i32>} : memref<128x64xf32, #tpu.memory_space<vmem>>, vector<128x64xf32>,
    return
  }
  func.func @transform_0(%arg0: i32) -> (i32, i32) {
    %c0_i32 = arith.constant 0 : i32
    %c0_i32_0 = arith.constant 0 : i32
    %c0_i32_1 = arith.constant 0 : i32
    return %c0_i32, %c0_i32_0 : i32, i32
  }
  func.func @transform_1(%arg0: i32) -> (i32, i32) {
    %c0_i32 = arith.constant 0 : i32
    %c0_i32_0 = arith.constant 0 : i32
    %c0_i32_1 = arith.constant 0 : i32
    return %c0_i32, %c0_i32_0 : i32, i32
  }
  func.func @transform_2(%arg0: i32) -> (i32, i32) {
    %c0_i32 = arith.constant 0 : i32
    %c0_i32_0 = arith.constant 0 : i32
    %c0_i32_1 = arith.constant 0 : i32
    return %c0_i32, %c0_i32_0 : i32, i32
  }
  func.func @transform_3(%arg0: i32) -> (i32, i32) {
    %c0_i32 = arith.constant 0 : i32
    %c0_i32_0 = arith.constant 0 : i32
    %c0_i32_1 = arith.constant 0 : i32
    return %c0_i32, %c0_i32_0 : i32, i32
  }
  func.func @transform_4(%arg0: i32) -> (i32, i32) {
    %c0_i32 = arith.constant 0 : i32
    %c0_i32_0 = arith.constant 0 : i32
    %c0_i32_1 = arith.constant 0 : i32
    return %c0_i32, %c0_i32_0 : i32, i32
  }
}

module attributes {stable_mosaic.version = 11 : i64} {
  func.func @kernel(%arg0: i32, %arg1: memref<32x576xf32, #tpu.memory_space<vmem>>, %arg2: memref<576x128xf32, #tpu.memory_space<vmem>>, %arg3: memref<1x128xf32, #tpu.memory_space<vmem>>, %arg4: memref<1x128xf32, #tpu.memory_space<vmem>>, %arg5: memref<32x128xf32, #tpu.memory_space<vmem>>) attributes {dimension_semantics = [#tpu.dimension_semantics<arbitrary>], iteration_bounds = array<i64: 1>, scalar_prefetch = 0 : i64, scratch_operands = 0 : i64, tpu.core_type = #tpu.core_type<tc>, window_params = [{pipeline_mode = #tpu.pipeline_mode<synchronous>, transform_indices = @transform_0, window_bounds = array<i64: 32, 576>}, {pipeline_mode = #tpu.pipeline_mode<synchronous>, transform_indices = @transform_1, window_bounds = array<i64: 576, 128>}, {pipeline_mode = #tpu.pipeline_mode<synchronous>, transform_indices = @transform_2, window_bounds = array<i64: 1, 128>}, {pipeline_mode = #tpu.pipeline_mode<synchronous>, transform_indices = @transform_3, window_bounds = array<i64: 1, 128>}, {pipeline_mode = #tpu.pipeline_mode<synchronous>, transform_indices = @transform_4, window_bounds = array<i64: 32, 128>}]} {
    %c0 = arith.constant 0 : index
    %c0_0 = arith.constant 0 : index
    %0 = vector.load %arg1[%c0, %c0_0] : memref<32x576xf32, #tpu.memory_space<vmem>>, vector<32x576xf32>
    %c0_1 = arith.constant 0 : index
    %c0_2 = arith.constant 0 : index
    %1 = vector.load %arg2[%c0_1, %c0_2] : memref<576x128xf32, #tpu.memory_space<vmem>>, vector<576x128xf32>
    %cst = arith.constant dense<0.000000e+00> : vector<32x128xf32>
    %2 = tpu.matmul %0, %1, %cst {dimension_numbers = #tpu.dot_dimension_numbers<[1], [0], [0], [1], [0, 0, 1, 1], [], []>} : vector<32x576xf32>, vector<576x128xf32>, vector<32x128xf32> -> vector<32x128xf32>
    %cst_3 = arith.constant dense<0.000000e+00> : vector<128xf32>
    %3 = vector.multi_reduction <add>, %2, %cst_3 [0] : vector<32x128xf32> to vector<128xf32>
    %4 = vector.shape_cast %3 : vector<128xf32> to vector<1x128xf32>
    %cst_4 = arith.constant 3.200000e+01 : f32
    %5 = vector.broadcast %cst_4 : f32 to vector<1x128xf32>
    %6 = arith.divf %4, %5 : vector<1x128xf32>
    %7 = vector.broadcast %6 : vector<1x128xf32> to vector<32x128xf32>
    %8 = arith.subf %2, %7 : vector<32x128xf32>
    %9 = arith.mulf %8, %8 : vector<32x128xf32>
    %cst_5 = arith.constant dense<0.000000e+00> : vector<128xf32>
    %10 = vector.multi_reduction <add>, %9, %cst_5 [0] : vector<32x128xf32> to vector<128xf32>
    %11 = vector.shape_cast %10 : vector<128xf32> to vector<1x128xf32>
    %cst_6 = arith.constant 3.200000e+01 : f32
    %12 = vector.broadcast %cst_6 : f32 to vector<1x128xf32>
    %13 = arith.divf %11, %12 : vector<1x128xf32>
    %14 = vector.broadcast %6 : vector<1x128xf32> to vector<32x128xf32>
    %15 = arith.subf %2, %14 : vector<32x128xf32>
    %cst_7 = arith.constant 9.99999974E-6 : f32
    %16 = vector.broadcast %cst_7 : f32 to vector<1x128xf32>
    %17 = arith.addf %13, %16 : vector<1x128xf32>
    %18 = math.rsqrt %17 : vector<1x128xf32>
    %c0_8 = arith.constant 0 : index
    %c0_9 = arith.constant 0 : index
    %19 = vector.load %arg3[%c0_8, %c0_9] : memref<1x128xf32, #tpu.memory_space<vmem>>, vector<1x128xf32>
    %20 = arith.mulf %18, %19 : vector<1x128xf32>
    %21 = vector.broadcast %20 : vector<1x128xf32> to vector<32x128xf32>
    %22 = arith.mulf %15, %21 : vector<32x128xf32>
    %c0_10 = arith.constant 0 : index
    %c0_11 = arith.constant 0 : index
    %23 = vector.load %arg4[%c0_10, %c0_11] : memref<1x128xf32, #tpu.memory_space<vmem>>, vector<1x128xf32>
    %24 = vector.broadcast %23 : vector<1x128xf32> to vector<32x128xf32>
    %25 = arith.addf %22, %24 : vector<32x128xf32>
    %cst_12 = arith.constant 0.000000e+00 : f32
    %26 = vector.broadcast %cst_12 : f32 to vector<32x128xf32>
    %27 = arith.maximumf %25, %26 : vector<32x128xf32>
    %c0_13 = arith.constant 0 : index
    %c0_14 = arith.constant 0 : index
    %28 = vector.load %arg5[%c0_13, %c0_14] : memref<32x128xf32, #tpu.memory_space<vmem>>, vector<32x128xf32>
    tpu.vector_store %arg5[%c0_13, %c0_14], %27 {strides = array<i32>} : memref<32x128xf32, #tpu.memory_space<vmem>>, vector<32x128xf32>,
    return
  }
  func.func @transform_0(%arg0: i32) -> (i32, i32) {
    %c0_i32 = arith.constant 0 : i32
    %c0_i32_0 = arith.constant 0 : i32
    %c0_i32_1 = arith.constant 0 : i32
    return %c0_i32, %c0_i32_0 : i32, i32
  }
  func.func @transform_1(%arg0: i32) -> (i32, i32) {
    %c0_i32 = arith.constant 0 : i32
    %c0_i32_0 = arith.constant 0 : i32
    %c0_i32_1 = arith.constant 0 : i32
    return %c0_i32, %c0_i32_0 : i32, i32
  }
  func.func @transform_2(%arg0: i32) -> (i32, i32) {
    %c0_i32 = arith.constant 0 : i32
    %c0_i32_0 = arith.constant 0 : i32
    %c0_i32_1 = arith.constant 0 : i32
    return %c0_i32, %c0_i32_0 : i32, i32
  }
  func.func @transform_3(%arg0: i32) -> (i32, i32) {
    %c0_i32 = arith.constant 0 : i32
    %c0_i32_0 = arith.constant 0 : i32
    %c0_i32_1 = arith.constant 0 : i32
    return %c0_i32, %c0_i32_0 : i32, i32
  }
  func.func @transform_4(%arg0: i32) -> (i32, i32) {
    %c0_i32 = arith.constant 0 : i32
    %c0_i32_0 = arith.constant 0 : i32
    %c0_i32_1 = arith.constant 0 : i32
    return %c0_i32, %c0_i32_0 : i32, i32
  }
}

module attributes {stable_mosaic.version = 11 : i64} {
  func.func @kernel(%arg0: i32, %arg1: memref<32x1152xf32, #tpu.memory_space<vmem>>, %arg2: memref<1152x128xf32, #tpu.memory_space<vmem>>, %arg3: memref<1x128xf32, #tpu.memory_space<vmem>>, %arg4: memref<1x128xf32, #tpu.memory_space<vmem>>, %arg5: memref<32x128xf32, #tpu.memory_space<vmem>>) attributes {dimension_semantics = [#tpu.dimension_semantics<arbitrary>], iteration_bounds = array<i64: 1>, scalar_prefetch = 0 : i64, scratch_operands = 0 : i64, tpu.core_type = #tpu.core_type<tc>, window_params = [{pipeline_mode = #tpu.pipeline_mode<synchronous>, transform_indices = @transform_0, window_bounds = array<i64: 32, 1152>}, {pipeline_mode = #tpu.pipeline_mode<synchronous>, transform_indices = @transform_1, window_bounds = array<i64: 1152, 128>}, {pipeline_mode = #tpu.pipeline_mode<synchronous>, transform_indices = @transform_2, window_bounds = array<i64: 1, 128>}, {pipeline_mode = #tpu.pipeline_mode<synchronous>, transform_indices = @transform_3, window_bounds = array<i64: 1, 128>}, {pipeline_mode = #tpu.pipeline_mode<synchronous>, transform_indices = @transform_4, window_bounds = array<i64: 32, 128>}]} {
    %c0 = arith.constant 0 : index
    %c0_0 = arith.constant 0 : index
    %0 = vector.load %arg1[%c0, %c0_0] : memref<32x1152xf32, #tpu.memory_space<vmem>>, vector<32x1152xf32>
    %c0_1 = arith.constant 0 : index
    %c0_2 = arith.constant 0 : index
    %1 = vector.load %arg2[%c0_1, %c0_2] : memref<1152x128xf32, #tpu.memory_space<vmem>>, vector<1152x128xf32>
    %cst = arith.constant dense<0.000000e+00> : vector<32x128xf32>
    %2 = tpu.matmul %0, %1, %cst {dimension_numbers = #tpu.dot_dimension_numbers<[1], [0], [0], [1], [0, 0, 1, 1], [], []>} : vector<32x1152xf32>, vector<1152x128xf32>, vector<32x128xf32> -> vector<32x128xf32>
    %cst_3 = arith.constant dense<0.000000e+00> : vector<128xf32>
    %3 = vector.multi_reduction <add>, %2, %cst_3 [0] : vector<32x128xf32> to vector<128xf32>
    %4 = vector.shape_cast %3 : vector<128xf32> to vector<1x128xf32>
    %cst_4 = arith.constant 3.200000e+01 : f32
    %5 = vector.broadcast %cst_4 : f32 to vector<1x128xf32>
    %6 = arith.divf %4, %5 : vector<1x128xf32>
    %7 = vector.broadcast %6 : vector<1x128xf32> to vector<32x128xf32>
    %8 = arith.subf %2, %7 : vector<32x128xf32>
    %9 = arith.mulf %8, %8 : vector<32x128xf32>
    %cst_5 = arith.constant dense<0.000000e+00> : vector<128xf32>
    %10 = vector.multi_reduction <add>, %9, %cst_5 [0] : vector<32x128xf32> to vector<128xf32>
    %11 = vector.shape_cast %10 : vector<128xf32> to vector<1x128xf32>
    %cst_6 = arith.constant 3.200000e+01 : f32
    %12 = vector.broadcast %cst_6 : f32 to vector<1x128xf32>
    %13 = arith.divf %11, %12 : vector<1x128xf32>
    %14 = vector.broadcast %6 : vector<1x128xf32> to vector<32x128xf32>
    %15 = arith.subf %2, %14 : vector<32x128xf32>
    %cst_7 = arith.constant 9.99999974E-6 : f32
    %16 = vector.broadcast %cst_7 : f32 to vector<1x128xf32>
    %17 = arith.addf %13, %16 : vector<1x128xf32>
    %18 = math.rsqrt %17 : vector<1x128xf32>
    %c0_8 = arith.constant 0 : index
    %c0_9 = arith.constant 0 : index
    %19 = vector.load %arg3[%c0_8, %c0_9] : memref<1x128xf32, #tpu.memory_space<vmem>>, vector<1x128xf32>
    %20 = arith.mulf %18, %19 : vector<1x128xf32>
    %21 = vector.broadcast %20 : vector<1x128xf32> to vector<32x128xf32>
    %22 = arith.mulf %15, %21 : vector<32x128xf32>
    %c0_10 = arith.constant 0 : index
    %c0_11 = arith.constant 0 : index
    %23 = vector.load %arg4[%c0_10, %c0_11] : memref<1x128xf32, #tpu.memory_space<vmem>>, vector<1x128xf32>
    %24 = vector.broadcast %23 : vector<1x128xf32> to vector<32x128xf32>
    %25 = arith.addf %22, %24 : vector<32x128xf32>
    %cst_12 = arith.constant 0.000000e+00 : f32
    %26 = vector.broadcast %cst_12 : f32 to vector<32x128xf32>
    %27 = arith.maximumf %25, %26 : vector<32x128xf32>
    %c0_13 = arith.constant 0 : index
    %c0_14 = arith.constant 0 : index
    %28 = vector.load %arg5[%c0_13, %c0_14] : memref<32x128xf32, #tpu.memory_space<vmem>>, vector<32x128xf32>
    tpu.vector_store %arg5[%c0_13, %c0_14], %27 {strides = array<i32>} : memref<32x128xf32, #tpu.memory_space<vmem>>, vector<32x128xf32>,
    return
  }
  func.func @transform_0(%arg0: i32) -> (i32, i32) {
    %c0_i32 = arith.constant 0 : i32
    %c0_i32_0 = arith.constant 0 : i32
    %c0_i32_1 = arith.constant 0 : i32
    return %c0_i32, %c0_i32_0 : i32, i32
  }
  func.func @transform_1(%arg0: i32) -> (i32, i32) {
    %c0_i32 = arith.constant 0 : i32
    %c0_i32_0 = arith.constant 0 : i32
    %c0_i32_1 = arith.constant 0 : i32
    return %c0_i32, %c0_i32_0 : i32, i32
  }
  func.func @transform_2(%arg0: i32) -> (i32, i32) {
    %c0_i32 = arith.constant 0 : i32
    %c0_i32_0 = arith.constant 0 : i32
    %c0_i32_1 = arith.constant 0 : i32
    return %c0_i32, %c0_i32_0 : i32, i32
  }
  func.func @transform_3(%arg0: i32) -> (i32, i32) {
    %c0_i32 = arith.constant 0 : i32
    %c0_i32_0 = arith.constant 0 : i32
    %c0_i32_1 = arith.constant 0 : i32
    return %c0_i32, %c0_i32_0 : i32, i32
  }
  func.func @transform_4(%arg0: i32) -> (i32, i32) {
    %c0_i32 = arith.constant 0 : i32
    %c0_i32_0 = arith.constant 0 : i32
    %c0_i32_1 = arith.constant 0 : i32
    return %c0_i32, %c0_i32_0 : i32, i32
  }
}

module attributes {stable_mosaic.version = 11 : i64} {
  func.func @kernel(%arg0: i32, %arg1: memref<32x1152xf32, #tpu.memory_space<vmem>>, %arg2: memref<1152x128xf32, #tpu.memory_space<vmem>>, %arg3: memref<1x128xf32, #tpu.memory_space<vmem>>, %arg4: memref<1x128xf32, #tpu.memory_space<vmem>>, %arg5: memref<32x128xf32, #tpu.memory_space<vmem>>, %arg6: memref<32x128xf32, #tpu.memory_space<vmem>>) attributes {dimension_semantics = [#tpu.dimension_semantics<arbitrary>], iteration_bounds = array<i64: 1>, scalar_prefetch = 0 : i64, scratch_operands = 0 : i64, tpu.core_type = #tpu.core_type<tc>, window_params = [{pipeline_mode = #tpu.pipeline_mode<synchronous>, transform_indices = @transform_0, window_bounds = array<i64: 32, 1152>}, {pipeline_mode = #tpu.pipeline_mode<synchronous>, transform_indices = @transform_1, window_bounds = array<i64: 1152, 128>}, {pipeline_mode = #tpu.pipeline_mode<synchronous>, transform_indices = @transform_2, window_bounds = array<i64: 1, 128>}, {pipeline_mode = #tpu.pipeline_mode<synchronous>, transform_indices = @transform_3, window_bounds = array<i64: 1, 128>}, {pipeline_mode = #tpu.pipeline_mode<synchronous>, transform_indices = @transform_4, window_bounds = array<i64: 32, 128>}, {pipeline_mode = #tpu.pipeline_mode<synchronous>, transform_indices = @transform_5, window_bounds = array<i64: 32, 128>}]} {
    %c0 = arith.constant 0 : index
    %c0_0 = arith.constant 0 : index
    %0 = vector.load %arg1[%c0, %c0_0] : memref<32x1152xf32, #tpu.memory_space<vmem>>, vector<32x1152xf32>
    %c0_1 = arith.constant 0 : index
    %c0_2 = arith.constant 0 : index
    %1 = vector.load %arg2[%c0_1, %c0_2] : memref<1152x128xf32, #tpu.memory_space<vmem>>, vector<1152x128xf32>
    %cst = arith.constant dense<0.000000e+00> : vector<32x128xf32>
    %2 = tpu.matmul %0, %1, %cst {dimension_numbers = #tpu.dot_dimension_numbers<[1], [0], [0], [1], [0, 0, 1, 1], [], []>} : vector<32x1152xf32>, vector<1152x128xf32>, vector<32x128xf32> -> vector<32x128xf32>
    %cst_3 = arith.constant dense<0.000000e+00> : vector<128xf32>
    %3 = vector.multi_reduction <add>, %2, %cst_3 [0] : vector<32x128xf32> to vector<128xf32>
    %4 = vector.shape_cast %3 : vector<128xf32> to vector<1x128xf32>
    %cst_4 = arith.constant 3.200000e+01 : f32
    %5 = vector.broadcast %cst_4 : f32 to vector<1x128xf32>
    %6 = arith.divf %4, %5 : vector<1x128xf32>
    %7 = vector.broadcast %6 : vector<1x128xf32> to vector<32x128xf32>
    %8 = arith.subf %2, %7 : vector<32x128xf32>
    %9 = arith.mulf %8, %8 : vector<32x128xf32>
    %cst_5 = arith.constant dense<0.000000e+00> : vector<128xf32>
    %10 = vector.multi_reduction <add>, %9, %cst_5 [0] : vector<32x128xf32> to vector<128xf32>
    %11 = vector.shape_cast %10 : vector<128xf32> to vector<1x128xf32>
    %cst_6 = arith.constant 3.200000e+01 : f32
    %12 = vector.broadcast %cst_6 : f32 to vector<1x128xf32>
    %13 = arith.divf %11, %12 : vector<1x128xf32>
    %14 = vector.broadcast %6 : vector<1x128xf32> to vector<32x128xf32>
    %15 = arith.subf %2, %14 : vector<32x128xf32>
    %cst_7 = arith.constant 9.99999974E-6 : f32
    %16 = vector.broadcast %cst_7 : f32 to vector<1x128xf32>
    %17 = arith.addf %13, %16 : vector<1x128xf32>
    %18 = math.rsqrt %17 : vector<1x128xf32>
    %c0_8 = arith.constant 0 : index
    %c0_9 = arith.constant 0 : index
    %19 = vector.load %arg3[%c0_8, %c0_9] : memref<1x128xf32, #tpu.memory_space<vmem>>, vector<1x128xf32>
    %20 = arith.mulf %18, %19 : vector<1x128xf32>
    %21 = vector.broadcast %20 : vector<1x128xf32> to vector<32x128xf32>
    %22 = arith.mulf %15, %21 : vector<32x128xf32>
    %c0_10 = arith.constant 0 : index
    %c0_11 = arith.constant 0 : index
    %23 = vector.load %arg4[%c0_10, %c0_11] : memref<1x128xf32, #tpu.memory_space<vmem>>, vector<1x128xf32>
    %24 = vector.broadcast %23 : vector<1x128xf32> to vector<32x128xf32>
    %25 = arith.addf %22, %24 : vector<32x128xf32>
    %c0_12 = arith.constant 0 : index
    %c0_13 = arith.constant 0 : index
    %26 = vector.load %arg5[%c0_12, %c0_13] : memref<32x128xf32, #tpu.memory_space<vmem>>, vector<32x128xf32>
    %27 = arith.addf %25, %26 : vector<32x128xf32>
    %c0_14 = arith.constant 0 : index
    %c0_15 = arith.constant 0 : index
    %28 = vector.load %arg6[%c0_14, %c0_15] : memref<32x128xf32, #tpu.memory_space<vmem>>, vector<32x128xf32>
    tpu.vector_store %arg6[%c0_14, %c0_15], %27 {strides = array<i32>} : memref<32x128xf32, #tpu.memory_space<vmem>>, vector<32x128xf32>,
    return
  }
  func.func @transform_0(%arg0: i32) -> (i32, i32) {
    %c0_i32 = arith.constant 0 : i32
    %c0_i32_0 = arith.constant 0 : i32
    %c0_i32_1 = arith.constant 0 : i32
    return %c0_i32, %c0_i32_0 : i32, i32
  }
  func.func @transform_1(%arg0: i32) -> (i32, i32) {
    %c0_i32 = arith.constant 0 : i32
    %c0_i32_0 = arith.constant 0 : i32
    %c0_i32_1 = arith.constant 0 : i32
    return %c0_i32, %c0_i32_0 : i32, i32
  }
  func.func @transform_2(%arg0: i32) -> (i32, i32) {
    %c0_i32 = arith.constant 0 : i32
    %c0_i32_0 = arith.constant 0 : i32
    %c0_i32_1 = arith.constant 0 : i32
    return %c0_i32, %c0_i32_0 : i32, i32
  }
  func.func @transform_3(%arg0: i32) -> (i32, i32) {
    %c0_i32 = arith.constant 0 : i32
    %c0_i32_0 = arith.constant 0 : i32
    %c0_i32_1 = arith.constant 0 : i32
    return %c0_i32, %c0_i32_0 : i32, i32
  }
  func.func @transform_4(%arg0: i32) -> (i32, i32) {
    %c0_i32 = arith.constant 0 : i32
    %c0_i32_0 = arith.constant 0 : i32
    %c0_i32_1 = arith.constant 0 : i32
    return %c0_i32, %c0_i32_0 : i32, i32
  }
  func.func @transform_5(%arg0: i32) -> (i32, i32) {
    %c0_i32 = arith.constant 0 : i32
    %c0_i32_0 = arith.constant 0 : i32
    %c0_i32_1 = arith.constant 0 : i32
    return %c0_i32, %c0_i32_0 : i32, i32
  }
}

module attributes {stable_mosaic.version = 11 : i64} {
  func.func @kernel(%arg0: i32, %arg1: memref<32x1152xf32, #tpu.memory_space<vmem>>, %arg2: memref<1152x16xf32, #tpu.memory_space<vmem>>, %arg3: memref<32x16xf32, #tpu.memory_space<vmem>>) attributes {dimension_semantics = [#tpu.dimension_semantics<arbitrary>], iteration_bounds = array<i64: 1>, scalar_prefetch = 0 : i64, scratch_operands = 0 : i64, tpu.core_type = #tpu.core_type<tc>, window_params = [{pipeline_mode = #tpu.pipeline_mode<synchronous>, transform_indices = @transform_0, window_bounds = array<i64: 32, 1152>}, {pipeline_mode = #tpu.pipeline_mode<synchronous>, transform_indices = @transform_1, window_bounds = array<i64: 1152, 16>}, {pipeline_mode = #tpu.pipeline_mode<synchronous>, transform_indices = @transform_2, window_bounds = array<i64: 32, 16>}]} {
    %c0 = arith.constant 0 : index
    %c0_0 = arith.constant 0 : index
    %0 = vector.load %arg1[%c0, %c0_0] : memref<32x1152xf32, #tpu.memory_space<vmem>>, vector<32x1152xf32>
    %c0_1 = arith.constant 0 : index
    %c0_2 = arith.constant 0 : index
    %1 = vector.load %arg2[%c0_1, %c0_2] : memref<1152x16xf32, #tpu.memory_space<vmem>>, vector<1152x16xf32>
    %cst = arith.constant dense<0.000000e+00> : vector<32x16xf32>
    %2 = tpu.matmul %0, %1, %cst {dimension_numbers = #tpu.dot_dimension_numbers<[1], [0], [0], [1], [0, 0, 1, 1], [], []>} : vector<32x1152xf32>, vector<1152x16xf32>, vector<32x16xf32> -> vector<32x16xf32>
    %c0_3 = arith.constant 0 : index
    %c0_4 = arith.constant 0 : index
    %3 = vector.load %arg3[%c0_3, %c0_4] : memref<32x16xf32, #tpu.memory_space<vmem>>, vector<32x16xf32>
    tpu.vector_store %arg3[%c0_3, %c0_4], %2 {strides = array<i32>} : memref<32x16xf32, #tpu.memory_space<vmem>>, vector<32x16xf32>,
    return
  }
  func.func @transform_0(%arg0: i32) -> (i32, i32) {
    %c0_i32 = arith.constant 0 : i32
    %c0_i32_0 = arith.constant 0 : i32
    %c0_i32_1 = arith.constant 0 : i32
    return %c0_i32, %c0_i32_0 : i32, i32
  }
  func.func @transform_1(%arg0: i32) -> (i32, i32) {
    %c0_i32 = arith.constant 0 : i32
    %c0_i32_0 = arith.constant 0 : i32
    %c0_i32_1 = arith.constant 0 : i32
    return %c0_i32, %c0_i32_0 : i32, i32
  }
  func.func @transform_2(%arg0: i32) -> (i32, i32) {
    %c0_i32 = arith.constant 0 : i32
    %c0_i32_0 = arith.constant 0 : i32
    %c0_i32_1 = arith.constant 0 : i32
    return %c0_i32, %c0_i32_0 : i32, i32
  }
}

</mosaic_0001>

<llo_original>
// kernel: encoder_forward.8
$region0: #{encoder_forward.8}
  #allocation0 [shape = 'u32[]', space=smem, size = 0x4, offset = 0x4, fixed_abs, tag = 'smem constant byte address 0x4 - core index']
  #allocation1 [shape = 'u32[72,128]{1,0:T(1,128)}', space=vmem, size = 0x9000, scoped, tag = 'internal scratch']
  %s0 = inlined_call_operand.vmem [shape: f32[512,147], index: 0, kind: input, shape index: {}]
  %s1 = inlined_call_operand.vmem [shape: f32[147,32], index: 1, kind: input, shape index: {}]
  %s2 = inlined_call_operand.vmem [shape: f32[1,32], index: 2, kind: input, shape index: {}]
  %s3 = inlined_call_operand.vmem [shape: f32[1,32], index: 3, kind: input, shape index: {}]
  %s4 = inlined_call_operand.vmem [shape: f32[512,32], index: 4, kind: output, shape index: {}]
  %s5 = sld [smem:[#allocation0]]
  $region26: #{encoder_forward.8} parent=0
    _
  %s7 = ssub.s32 1, %s5
  %s8 = scalar_select 0, %s7, %s5
  // Predicated region
  $region2: #{encoder_forward.8} parent=0 // pred_check
    _
  $region3: #{encoder_forward.8} parent=0 // pred_check_branch
    %10 = sbr.rel (0) target = $region5
  $region4: #{encoder_forward.8} parent=0 // pred_region
    _
  $region5: #{encoder_forward.8} parent=0 // pred_fallthru
    _
  // Predicated region
  $region6: #{encoder_forward.8} parent=0 // pred_check
    _
  $region7: #{encoder_forward.8} parent=0 // pred_check_branch
    %12 = sbr.rel (0) target = $region9
  $region8: #{encoder_forward.8} parent=0 // pred_region
    _
  $region9: #{encoder_forward.8} parent=0 // pred_fallthru
    _
  // Predicated region
  $region10: #{encoder_forward.8} parent=0 // pred_check
    _
  $region11: #{encoder_forward.8} parent=0 // pred_check_branch
    %14 = sbr.rel (0) target = $region13
  $region12: #{encoder_forward.8} parent=0 // pred_region
    _
  $region13: #{encoder_forward.8} parent=0 // pred_fallthru
    _
  // Predicated region
  $region14: #{encoder_forward.8} parent=0 // pred_check
    _
  $region15: #{encoder_forward.8} parent=0 // pred_check_branch
    %16 = sbr.rel (0) target = $region17
  $region16: #{encoder_forward.8} parent=0 // pred_region
    _
  $region17: #{encoder_forward.8} parent=0 // pred_fallthru
    _
  %v17 = vld [vmem:[%s0] sm:$0xff]
  %v18 = vld [vmem:[%s0 + $0x8] sm:$0xff]
  %v19 = vld [vmem:[%s0 + $0x10] sm:$0xff]
  %v20 = vld [vmem:[%s0 + $0x18] sm:$0xff]
  %v21 = vld [vmem:[%s0 + $0x20] sm:$0xff]
  %v22 = vld [vmem:[%s0 + $0x28] sm:$0xff]
  %v23 = vld [vmem:[%s0 + $0x30] sm:$0xff]
  %v24 = vld [vmem:[%s0 + $0x38] sm:$0xff]
  %v25 = vld [vmem:[%s0 + $0x40] sm:$0xff]
  %v26 = vld [vmem:[%s0 + $0x48] sm:$0xff]
  %v27 = vld [vmem:[%s0 + $0x50] sm:$0xff]
  %v28 = vld [vmem:[%s0 + $0x58] sm:$0xff]
  %v29 = vld [vmem:[%s0 + $0x60] sm:$0xff]
  %v30 = vld [vmem:[%s0 + $0x68] sm:$0xff]
  %v31 = vld [vmem:[%s0 + $0x70] sm:$0xff]
  %v32 = vld [vmem:[%s0 + $0x78] sm:$0xff]
  %v33 = vld [vmem:[%s0 + $0x80] sm:$0xff]
  %v34 = vld [vmem:[%s0 + $0x88] sm:$0xff]
  %v35 = vld [vmem:[%s0 + $0x90] sm:$0xff]
  %v36 = vld [vmem:[%s0 + $0x98] sm:$0xff]
  %v37 = vld [vmem:[%s0 + $0xa0] sm:$0xff]
  %v38 = vld [vmem:[%s0 + $0xa8] sm:$0xff]
  %v39 = vld [vmem:[%s0 + $0xb0] sm:$0xff]
  %v40 = vld [vmem:[%s0 + $0xb8] sm:$0xff]
  %v41 = vld [vmem:[%s0 + $0xc0] sm:$0xff]
  %v42 = vld [vmem:[%s0 + $0xc8] sm:$0xff]
  %v43 = vld [vmem:[%s0 + $0xd0] sm:$0xff]
  %v44 = vld [vmem:[%s0 + $0xd8] sm:$0xff]
  %v45 = vld [vmem:[%s0 + $0xe0] sm:$0xff]
  %v46 = vld [vmem:[%s0 + $0xe8] sm:$0xff]
  %v47 = vld [vmem:[%s0 + $0xf0] sm:$0xff]
  %v48 = vld [vmem:[%s0 + $0xf8] sm:$0xff]
  %v49 = vld [vmem:[%s0 + $0x100] sm:$0xff]
  %v50 = vld [vmem:[%s0 + $0x108] sm:$0xff]
  %v51 = vld [vmem:[%s0 + $0x110] sm:$0xff]
  %v52 = vld [vmem:[%s0 + $0x118] sm:$0xff]
  %v53 = vld [vmem:[%s0 + $0x120] sm:$0xff]
  %v54 = vld [vmem:[%s0 + $0x128] sm:$0xff]
  %v55 = vld [vmem:[%s0 + $0x130] sm:$0xff]
  %v56 = vld [vmem:[%s0 + $0x138] sm:$0xff]
  %v57 = vld [vmem:[%s0 + $0x140] sm:$0xff]
  %v58 = vld [vmem:[%s0 + $0x148] sm:$0xff]
  %v59 = vld [vmem:[%s0 + $0x150] sm:$0xff]
  %v60 = vld [vmem:[%s0 + $0x158] sm:$0xff]
  %v61 = vld [vmem:[%s0 + $0x160] sm:$0xff]
  %v62 = vld [vmem:[%s0 + $0x168] sm:$0xff]
  %v63 = vld [vmem:[%s0 + $0x170] sm:$0xff]
  %v64 = vld [vmem:[%s0 + $0x178] sm:$0xff]
  %v65 = vld [vmem:[%s0 + $0x180] sm:$0xff]
  %v66 = vld [vmem:[%s0 + $0x188] sm:$0xff]
  %v67 = vld [vmem:[%s0 + $0x190] sm:$0xff]
  %v68 = vld [vmem:[%s0 + $0x198] sm:$0xff]
  %v69 = vld [vmem:[%s0 + $0x1a0] sm:$0xff]
  %v70 = vld [vmem:[%s0 + $0x1a8] sm:$0xff]
  %v71 = vld [vmem:[%s0 + $0x1b0] sm:$0xff]
  %v72 = vld [vmem:[%s0 + $0x1b8] sm:$0xff]
  %v73 = vld [vmem:[%s0 + $0x1c0] sm:$0xff]
  %v74 = vld [vmem:[%s0 + $0x1c8] sm:$0xff]
  %v75 = vld [vmem:[%s0 + $0x1d0] sm:$0xff]
  %v76 = vld [vmem:[%s0 + $0x1d8] sm:$0xff]
  %v77 = vld [vmem:[%s0 + $0x1e0] sm:$0xff]
  %v78 = vld [vmem:[%s0 + $0x1e8] sm:$0xff]
  %v79 = vld [vmem:[%s0 + $0x1f0] sm:$0xff]
  %v80 = vld [vmem:[%s0 + $0x1f8] sm:$0xff]
  %v81 = vld [vmem:[%s0 + $0x200] sm:$0xff]
  %v82 = vld [vmem:[%s0 + $0x208] sm:$0xff]
  %v83 = vld [vmem:[%s0 + $0x210] sm:$0xff]
  %v84 = vld [vmem:[%s0 + $0x218] sm:$0xff]
  %v85 = vld [vmem:[%s0 + $0x220] sm:$0xff]
  %v86 = vld [vmem:[%s0 + $0x228] sm:$0xff]
  %v87 = vld [vmem:[%s0 + $0x230] sm:$0xff]
  %v88 = vld [vmem:[%s0 + $0x238] sm:$0xff]
  %v89 = vld [vmem:[%s0 + $0x240] sm:$0xff]
  %v90 = vld [vmem:[%s0 + $0x248] sm:$0xff]
  %v91 = vld [vmem:[%s0 + $0x250] sm:$0xff]
  %v92 = vld [vmem:[%s0 + $0x258] sm:$0xff]
  %v93 = vld [vmem:[%s0 + $0x260] sm:$0xff]
  %v94 = vld [vmem:[%s0 + $0x268] sm:$0xff]
  %v95 = vld [vmem:[%s0 + $0x270] sm:$0xff]
  %v96 = vld [vmem:[%s0 + $0x278] sm:$0xff]
  %v97 = vld [vmem:[%s0 + $0x280] sm:$0xff]
  %v98 = vld [vmem:[%s0 + $0x288] sm:$0xff]
  %v99 = vld [vmem:[%s0 + $0x290] sm:$0xff]
  %v100 = vld [vmem:[%s0 + $0x298] sm:$0xff]
  %v101 = vld [vmem:[%s0 + $0x2a0] sm:$0xff]
  %v102 = vld [vmem:[%s0 + $0x2a8] sm:$0xff]
  %v103 = vld [vmem:[%s0 + $0x2b0] sm:$0xff]
  %v104 = vld [vmem:[%s0 + $0x2b8] sm:$0xff]
  %v105 = vld [vmem:[%s0 + $0x2c0] sm:$0xff]
  %v106 = vld [vmem:[%s0 + $0x2c8] sm:$0xff]
  %v107 = vld [vmem:[%s0 + $0x2d0] sm:$0xff]
  %v108 = vld [vmem:[%s0 + $0x2d8] sm:$0xff]
  %v109 = vld [vmem:[%s0 + $0x2e0] sm:$0xff]
  %v110 = vld [vmem:[%s0 + $0x2e8] sm:$0xff]
  %v111 = vld [vmem:[%s0 + $0x2f0] sm:$0xff]
  %v112 = vld [vmem:[%s0 + $0x2f8] sm:$0xff]
  %v113 = vld [vmem:[%s0 + $0x300] sm:$0xff]
  %v114 = vld [vmem:[%s0 + $0x308] sm:$0xff]
  %v115 = vld [vmem:[%s0 + $0x310] sm:$0xff]
  %v116 = vld [vmem:[%s0 + $0x318] sm:$0xff]
  %v117 = vld [vmem:[%s0 + $0x320] sm:$0xff]
  %v118 = vld [vmem:[%s0 + $0x328] sm:$0xff]
  %v119 = vld [vmem:[%s0 + $0x330] sm:$0xff]
  %v120 = vld [vmem:[%s0 + $0x338] sm:$0xff]
  %v121 = vld [vmem:[%s0 + $0x340] sm:$0xff]
  %v122 = vld [vmem:[%s0 + $0x348] sm:$0xff]
  %v123 = vld [vmem:[%s0 + $0x350] sm:$0xff]
  %v124 = vld [vmem:[%s0 + $0x358] sm:$0xff]
  %v125 = vld [vmem:[%s0 + $0x360] sm:$0xff]
  %v126 = vld [vmem:[%s0 + $0x368] sm:$0xff]
  %v127 = vld [vmem:[%s0 + $0x370] sm:$0xff]
  %v128 = vld [vmem:[%s0 + $0x378] sm:$0xff]
  %v129 = vld [vmem:[%s0 + $0x380] sm:$0xff]
  %v130 = vld [vmem:[%s0 + $0x388] sm:$0xff]
  %v131 = vld [vmem:[%s0 + $0x390] sm:$0xff]
  %v132 = vld [vmem:[%s0 + $0x398] sm:$0xff]
  %v133 = vld [vmem:[%s0 + $0x3a0] sm:$0xff]
  %v134 = vld [vmem:[%s0 + $0x3a8] sm:$0xff]
  %v135 = vld [vmem:[%s0 + $0x3b0] sm:$0xff]
  %v136 = vld [vmem:[%s0 + $0x3b8] sm:$0xff]
  %v137 = vld [vmem:[%s0 + $0x3c0] sm:$0xff]
  %v138 = vld [vmem:[%s0 + $0x3c8] sm:$0xff]
  %v139 = vld [vmem:[%s0 + $0x3d0] sm:$0xff]
  %v140 = vld [vmem:[%s0 + $0x3d8] sm:$0xff]
  %v141 = vld [vmem:[%s0 + $0x3e0] sm:$0xff]
  %v142 = vld [vmem:[%s0 + $0x3e8] sm:$0xff]
  %v143 = vld [vmem:[%s0 + $0x3f0] sm:$0xff]
  %v144 = vld [vmem:[%s0 + $0x3f8] sm:$0xff]
  %v145 = vld [vmem:[%s1] sm:$0xff]
  %v146 = vld [vmem:[%s1 + $0x8] sm:$0xff]
  %v147 = vld [vmem:[%s1 + $0x10] sm:$0xff]
  %v148 = vld [vmem:[%s1 + $0x18] sm:$0xff]
  %v149 = vld [vmem:[%s1 + $0x20] sm:$0xff]
  %v150 = vld [vmem:[%s1 + $0x28] sm:$0xff]
  %v151 = vld [vmem:[%s1 + $0x30] sm:$0xff]
  %v152 = vld [vmem:[%s1 + $0x38] sm:$0xff]
  %v153 = vld [vmem:[%s1 + $0x40] sm:$0xff]
  %v154 = vld [vmem:[%s1 + $0x48] sm:$0xff]
  %v155 = vld [vmem:[%s1 + $0x50] sm:$0xff]
  %v156 = vld [vmem:[%s1 + $0x58] sm:$0xff]
  %v157 = vld [vmem:[%s1 + $0x60] sm:$0xff]
  %v158 = vld [vmem:[%s1 + $0x68] sm:$0xff]
  %v159 = vld [vmem:[%s1 + $0x70] sm:$0xff]
  %v160 = vld [vmem:[%s1 + $0x78] sm:$0xff]
  %v161 = vld [vmem:[%s1 + $0x80] sm:$0xff]
  %v162 = vld [vmem:[%s1 + $0x88] sm:$0xff]
  %v163 = vld [vmem:[%s1 + $0x90] sm:$0x7]
  %vm164 = vcmask 154624
  %v166 = vsel %vm164, %v18, 0
  %v169 = vsel %vm164, %v20, 0
  %v172 = vsel %vm164, %v22, 0
  %v175 = vsel %vm164, %v24, 0
  %v178 = vsel %vm164, %v26, 0
  %v181 = vsel %vm164, %v28, 0
  %v184 = vsel %vm164, %v30, 0
  %v187 = vsel %vm164, %v32, 0
  %v190 = vsel %vm164, %v34, 0
  %v193 = vsel %vm164, %v36, 0
  %v196 = vsel %vm164, %v38, 0
  %v199 = vsel %vm164, %v40, 0
  %v202 = vsel %vm164, %v42, 0
  %v205 = vsel %vm164, %v44, 0
  %v208 = vsel %vm164, %v46, 0
  %v211 = vsel %vm164, %v48, 0
  %v214 = vsel %vm164, %v50, 0
  %v217 = vsel %vm164, %v52, 0
  %v220 = vsel %vm164, %v54, 0
  %v223 = vsel %vm164, %v56, 0
  %v226 = vsel %vm164, %v58, 0
  %v229 = vsel %vm164, %v60, 0
  %v232 = vsel %vm164, %v62, 0
  %v235 = vsel %vm164, %v64, 0
  %v238 = vsel %vm164, %v66, 0
  %v241 = vsel %vm164, %v68, 0
  %v244 = vsel %vm164, %v70, 0
  %v247 = vsel %vm164, %v72, 0
  %v250 = vsel %vm164, %v74, 0
  %v253 = vsel %vm164, %v76, 0
  %v256 = vsel %vm164, %v78, 0
  %v259 = vsel %vm164, %v80, 0
  %v262 = vsel %vm164, %v82, 0
  %v265 = vsel %vm164, %v84, 0
  %v268 = vsel %vm164, %v86, 0
  %v271 = vsel %vm164, %v88, 0
  %v274 = vsel %vm164, %v90, 0
  %v277 = vsel %vm164, %v92, 0
  %v280 = vsel %vm164, %v94, 0
  %v283 = vsel %vm164, %v96, 0
  %v286 = vsel %vm164, %v98, 0
  %v289 = vsel %vm164, %v100, 0
  %v292 = vsel %vm164, %v102, 0
  %v295 = vsel %vm164, %v104, 0
  %v298 = vsel %vm164, %v106, 0
  %v301 = vsel %vm164, %v108, 0
  %v304 = vsel %vm164, %v110, 0
  %v307 = vsel %vm164, %v112, 0
  %v310 = vsel %vm164, %v114, 0
  %v313 = vsel %vm164, %v116, 0
  %v316 = vsel %vm164, %v118, 0
  %v319 = vsel %vm164, %v120, 0
  %v322 = vsel %vm164, %v122, 0
  %v325 = vsel %vm164, %v124, 0
  %v328 = vsel %vm164, %v126, 0
  %v331 = vsel %vm164, %v128, 0
  %v334 = vsel %vm164, %v130, 0
  %v337 = vsel %vm164, %v132, 0
  %v340 = vsel %vm164, %v134, 0
  %v343 = vsel %vm164, %v136, 0
  %v346 = vsel %vm164, %v138, 0
  %v349 = vsel %vm164, %v140, 0
  %v352 = vsel %vm164, %v142, 0
  %v355 = vsel %vm164, %v144, 0
  %vm357 = vcmask 1042432
  %v359 = vsel %vm357, %v163, 0
  %361 = vmatpush.msra.mxu0 %v160
  %362 = vmatpush.msra.mxu0 %v159
  %363 = vmatpush.msra.mxu0 %v158
  %364 = vmatpush.msra.mxu0 %v157
  %365 = vmatpush.msra.mxu0 %v156
  %366 = vmatpush.msra.mxu0 %v155
  %367 = vmatpush.msra.mxu0 %v154
  %368 = vmatpush.msra.mxu0 %v153
  %369 = vmatpush.msra.mxu0 %v152
  %370 = vmatpush.msra.mxu0 %v151
  %371 = vmatpush.msra.mxu0 %v150
  %372 = vmatpush.msra.mxu0 %v149
  %373 = vmatpush.msra.mxu0 %v148
  %374 = vmatpush.msra.mxu0 %v147
  %375 = vmatpush.msra.mxu0 %v146
  %376 = vmatpush.msra.mxu0 %v145
  %377 = vmatmul.f32.gmra.mxu0 %v17
  %v378 = vpop.f32.mrf.mxu0
  %v379 = vadd.f32 0.0, %v378
  %380 = vmatmul.f32.gmra.mxu0 %v19
  %v381 = vpop.f32.mrf.mxu0
  %v382 = vadd.f32 0.0, %v381
  %383 = vmatmul.f32.gmra.mxu0 %v21
  %v384 = vpop.f32.mrf.mxu0
  %v385 = vadd.f32 0.0, %v384
  %386 = vmatmul.f32.gmra.mxu0 %v23
  %v387 = vpop.f32.mrf.mxu0
  %v388 = vadd.f32 0.0, %v387
  %389 = vmatmul.f32.gmra.mxu0 %v25
  %v390 = vpop.f32.mrf.mxu0
  %v391 = vadd.f32 0.0, %v390
  %392 = vmatmul.f32.gmra.mxu0 %v27
  %v393 = vpop.f32.mrf.mxu0
  %v394 = vadd.f32 0.0, %v393
  %395 = vmatmul.f32.gmra.mxu0 %v29
  %v396 = vpop.f32.mrf.mxu0
  %v397 = vadd.f32 0.0, %v396
  %398 = vmatmul.f32.gmra.mxu0 %v31
  %v399 = vpop.f32.mrf.mxu0
  %v400 = vadd.f32 0.0, %v399
  %401 = vmatmul.f32.gmra.mxu0 %v33
  %v402 = vpop.f32.mrf.mxu0
  %v403 = vadd.f32 0.0, %v402
  %404 = vmatmul.f32.gmra.mxu0 %v35
  %v405 = vpop.f32.mrf.mxu0
  %v406 = vadd.f32 0.0, %v405
  %407 = vmatmul.f32.gmra.mxu0 %v37
  %v408 = vpop.f32.mrf.mxu0
  %v409 = vadd.f32 0.0, %v408
  %410 = vmatmul.f32.gmra.mxu0 %v39
  %v411 = vpop.f32.mrf.mxu0
  %v412 = vadd.f32 0.0, %v411
  %413 = vmatmul.f32.gmra.mxu0 %v41
  %v414 = vpop.f32.mrf.mxu0
  %v415 = vadd.f32 0.0, %v414
  %416 = vmatmul.f32.gmra.mxu0 %v43
  %v417 = vpop.f32.mrf.mxu0
  %v418 = vadd.f32 0.0, %v417
  %419 = vmatmul.f32.gmra.mxu0 %v45
  %v420 = vpop.f32.mrf.mxu0
  %v421 = vadd.f32 0.0, %v420
  %422 = vmatmul.f32.gmra.mxu0 %v47
  %v423 = vpop.f32.mrf.mxu0
  %v424 = vadd.f32 0.0, %v423
  %425 = vmatmul.f32.gmra.mxu0 %v49
  %v426 = vpop.f32.mrf.mxu0
  %v427 = vadd.f32 0.0, %v426
  %428 = vmatmul.f32.gmra.mxu0 %v51
  %v429 = vpop.f32.mrf.mxu0
  %v430 = vadd.f32 0.0, %v429
  %431 = vmatmul.f32.gmra.mxu0 %v53
  %v432 = vpop.f32.mrf.mxu0
  %v433 = vadd.f32 0.0, %v432
  %434 = vmatmul.f32.gmra.mxu0 %v55
  %v435 = vpop.f32.mrf.mxu0
  %v436 = vadd.f32 0.0, %v435
  %437 = vmatmul.f32.gmra.mxu0 %v57
  %v438 = vpop.f32.mrf.mxu0
  %v439 = vadd.f32 0.0, %v438
  %440 = vmatmul.f32.gmra.mxu0 %v59
  %v441 = vpop.f32.mrf.mxu0
  %v442 = vadd.f32 0.0, %v441
  %443 = vmatmul.f32.gmra.mxu0 %v61
  %v444 = vpop.f32.mrf.mxu0
  %v445 = vadd.f32 0.0, %v444
  %446 = vmatmul.f32.gmra.mxu0 %v63
  %v447 = vpop.f32.mrf.mxu0
  %v448 = vadd.f32 0.0, %v447
  %449 = vmatmul.f32.gmra.mxu0 %v65
  %v450 = vpop.f32.mrf.mxu0
  %v451 = vadd.f32 0.0, %v450
  %452 = vmatmul.f32.gmra.mxu0 %v67
  %v453 = vpop.f32.mrf.mxu0
  %v454 = vadd.f32 0.0, %v453
  %455 = vmatmul.f32.gmra.mxu0 %v69
  %v456 = vpop.f32.mrf.mxu0
  %v457 = vadd.f32 0.0, %v456
  %458 = vmatmul.f32.gmra.mxu0 %v71
  %v459 = vpop.f32.mrf.mxu0
  %v460 = vadd.f32 0.0, %v459
  %461 = vmatmul.f32.gmra.mxu0 %v73
  %v462 = vpop.f32.mrf.mxu0
  %v463 = vadd.f32 0.0, %v462
  %464 = vmatmul.f32.gmra.mxu0 %v75
  %v465 = vpop.f32.mrf.mxu0
  %v466 = vadd.f32 0.0, %v465
  %467 = vmatmul.f32.gmra.mxu0 %v77
  %v468 = vpop.f32.mrf.mxu0
  %v469 = vadd.f32 0.0, %v468
  %470 = vmatmul.f32.gmra.mxu0 %v79
  %v471 = vpop.f32.mrf.mxu0
  %v472 = vadd.f32 0.0, %v471
  %473 = vmatmul.f32.gmra.mxu0 %v81
  %v474 = vpop.f32.mrf.mxu0
  %v475 = vadd.f32 0.0, %v474
  %476 = vmatmul.f32.gmra.mxu0 %v83
  %v477 = vpop.f32.mrf.mxu0
  %v478 = vadd.f32 0.0, %v477
  %479 = vmatmul.f32.gmra.mxu0 %v85
  %v480 = vpop.f32.mrf.mxu0
  %v481 = vadd.f32 0.0, %v480
  %482 = vmatmul.f32.gmra.mxu0 %v87
  %v483 = vpop.f32.mrf.mxu0
  %v484 = vadd.f32 0.0, %v483
  %485 = vmatmul.f32.gmra.mxu0 %v89
  %v486 = vpop.f32.mrf.mxu0
  %v487 = vadd.f32 0.0, %v486
  %488 = vmatmul.f32.gmra.mxu0 %v91
  %v489 = vpop.f32.mrf.mxu0
  %v490 = vadd.f32 0.0, %v489
  %491 = vmatmul.f32.gmra.mxu0 %v93
  %v492 = vpop.f32.mrf.mxu0
  %v493 = vadd.f32 0.0, %v492
  %494 = vmatmul.f32.gmra.mxu0 %v95
  %v495 = vpop.f32.mrf.mxu0
  %v496 = vadd.f32 0.0, %v495
  %497 = vmatmul.f32.gmra.mxu0 %v97
  %v498 = vpop.f32.mrf.mxu0
  %v499 = vadd.f32 0.0, %v498
  %500 = vmatmul.f32.gmra.mxu0 %v99
  %v501 = vpop.f32.mrf.mxu0
  %v502 = vadd.f32 0.0, %v501
  %503 = vmatmul.f32.gmra.mxu0 %v101
  %v504 = vpop.f32.mrf.mxu0
  %v505 = vadd.f32 0.0, %v504
  %506 = vmatmul.f32.gmra.mxu0 %v103
  %v507 = vpop.f32.mrf.mxu0
  %v508 = vadd.f32 0.0, %v507
  %509 = vmatmul.f32.gmra.mxu0 %v105
  %v510 = vpop.f32.mrf.mxu0
  %v511 = vadd.f32 0.0, %v510
  %512 = vmatmul.f32.gmra.mxu0 %v107
  %v513 = vpop.f32.mrf.mxu0
  %v514 = vadd.f32 0.0, %v513
  %515 = vmatmul.f32.gmra.mxu0 %v109
  %v516 = vpop.f32.mrf.mxu0
  %v517 = vadd.f32 0.0, %v516
  %518 = vmatmul.f32.gmra.mxu0 %v111
  %v519 = vpop.f32.mrf.mxu0
  %v520 = vadd.f32 0.0, %v519
  %521 = vmatmul.f32.gmra.mxu0 %v113
  %v522 = vpop.f32.mrf.mxu0
  %v523 = vadd.f32 0.0, %v522
  %524 = vmatmul.f32.gmra.mxu0 %v115
  %v525 = vpop.f32.mrf.mxu0
  %v526 = vadd.f32 0.0, %v525
  %527 = vmatmul.f32.gmra.mxu0 %v117
  %v528 = vpop.f32.mrf.mxu0
  %v529 = vadd.f32 0.0, %v528
  %530 = vmatmul.f32.gmra.mxu0 %v119
  %v531 = vpop.f32.mrf.mxu0
  %v532 = vadd.f32 0.0, %v531
  %533 = vmatmul.f32.gmra.mxu0 %v121
  %v534 = vpop.f32.mrf.mxu0
  %v535 = vadd.f32 0.0, %v534
  %536 = vmatmul.f32.gmra.mxu0 %v123
  %v537 = vpop.f32.mrf.mxu0
  %v538 = vadd.f32 0.0, %v537
  %539 = vmatmul.f32.gmra.mxu0 %v125
  %v540 = vpop.f32.mrf.mxu0
  %v541 = vadd.f32 0.0, %v540
  %542 = vmatmul.f32.gmra.mxu0 %v127
  %v543 = vpop.f32.mrf.mxu0
  %v544 = vadd.f32 0.0, %v543
  %545 = vmatmul.f32.gmra.mxu0 %v129
  %v546 = vpop.f32.mrf.mxu0
  %v547 = vadd.f32 0.0, %v546
  %548 = vmatmul.f32.gmra.mxu0 %v131
  %v549 = vpop.f32.mrf.mxu0
  %v550 = vadd.f32 0.0, %v549
  %551 = vmatmul.f32.gmra.mxu0 %v133
  %v552 = vpop.f32.mrf.mxu0
  %v553 = vadd.f32 0.0, %v552
  %554 = vmatmul.f32.gmra.mxu0 %v135
  %v555 = vpop.f32.mrf.mxu0
  %v556 = vadd.f32 0.0, %v555
  %557 = vmatmul.f32.gmra.mxu0 %v137
  %v558 = vpop.f32.mrf.mxu0
  %v559 = vadd.f32 0.0, %v558
  %560 = vmatmul.f32.gmra.mxu0 %v139
  %v561 = vpop.f32.mrf.mxu0
  %v562 = vadd.f32 0.0, %v561
  %563 = vmatmul.f32.gmra.mxu0 %v141
  %v564 = vpop.f32.mrf.mxu0
  %v565 = vadd.f32 0.0, %v564
  %566 = vmatmul.f32.gmra.mxu0 %v143
  %v567 = vpop.f32.mrf.mxu0
  %v568 = vadd.f32 0.0, %v567
  %569 = vdwg.mxu0
  %570 = vmatpush.msra.mxu0 0.0
  %571 = vmatpush.msra.mxu0 0.0
  %572 = vmatpush.msra.mxu0 0.0
  %573 = vmatpush.msra.mxu0 0.0
  %574 = vmatpush.msra.mxu0 0.0
  %575 = vmatpush.msra.mxu0 0.0
  %576 = vmatpush.msra.mxu0 0.0
  %577 = vmatpush.msra.mxu0 0.0
  %578 = vmatpush.msra.mxu0 0.0
  %579 = vmatpush.msra.mxu0 0.0
  %580 = vmatpush.msra.mxu0 0.0
  %581 = vmatpush.msra.mxu0 0.0
  %582 = vmatpush.msra.mxu0 0.0
  %583 = vmatpush.msra.mxu0 %v359
  %584 = vmatpush.msra.mxu0 %v162
  %585 = vmatpush.msra.mxu0 %v161
  %586 = vmatmul.f32.gmra.mxu0 %v166
  %v587 = vpop.f32.mrf.mxu0
  %v588 = vadd.f32 %v379, %v587
  %589 = vmatmul.f32.gmra.mxu0 %v169
  %v590 = vpop.f32.mrf.mxu0
  %v591 = vadd.f32 %v382, %v590
  %592 = vmatmul.f32.gmra.mxu0 %v172
  %v593 = vpop.f32.mrf.mxu0
  %v594 = vadd.f32 %v385, %v593
  %595 = vmatmul.f32.gmra.mxu0 %v175
  %v596 = vpop.f32.mrf.mxu0
  %v597 = vadd.f32 %v388, %v596
  %598 = vmatmul.f32.gmra.mxu0 %v178
  %v599 = vpop.f32.mrf.mxu0
  %v600 = vadd.f32 %v391, %v599
  %601 = vmatmul.f32.gmra.mxu0 %v181
  %v602 = vpop.f32.mrf.mxu0
  %v603 = vadd.f32 %v394, %v602
  %604 = vmatmul.f32.gmra.mxu0 %v184
  %v605 = vpop.f32.mrf.mxu0
  %v606 = vadd.f32 %v397, %v605
  %607 = vmatmul.f32.gmra.mxu0 %v187
  %v608 = vpop.f32.mrf.mxu0
  %v609 = vadd.f32 %v400, %v608
  %610 = vmatmul.f32.gmra.mxu0 %v190
  %v611 = vpop.f32.mrf.mxu0
  %v612 = vadd.f32 %v403, %v611
  %613 = vmatmul.f32.gmra.mxu0 %v193
  %v614 = vpop.f32.mrf.mxu0
  %v615 = vadd.f32 %v406, %v614
  %616 = vmatmul.f32.gmra.mxu0 %v196
  %v617 = vpop.f32.mrf.mxu0
  %v618 = vadd.f32 %v409, %v617
  %619 = vmatmul.f32.gmra.mxu0 %v199
  %v620 = vpop.f32.mrf.mxu0
  %v621 = vadd.f32 %v412, %v620
  %622 = vmatmul.f32.gmra.mxu0 %v202
  %v623 = vpop.f32.mrf.mxu0
  %v624 = vadd.f32 %v415, %v623
  %625 = vmatmul.f32.gmra.mxu0 %v205
  %v626 = vpop.f32.mrf.mxu0
  %v627 = vadd.f32 %v418, %v626
  %628 = vmatmul.f32.gmra.mxu0 %v208
  %v629 = vpop.f32.mrf.mxu0
  %v630 = vadd.f32 %v421, %v629
  %631 = vmatmul.f32.gmra.mxu0 %v211
  %v632 = vpop.f32.mrf.mxu0
  %v633 = vadd.f32 %v424, %v632
  %634 = vmatmul.f32.gmra.mxu0 %v214
  %v635 = vpop.f32.mrf.mxu0
  %v636 = vadd.f32 %v427, %v635
  %637 = vmatmul.f32.gmra.mxu0 %v217
  %v638 = vpop.f32.mrf.mxu0
  %v639 = vadd.f32 %v430, %v638
  %640 = vmatmul.f32.gmra.mxu0 %v220
  %v641 = vpop.f32.mrf.mxu0
  %v642 = vadd.f32 %v433, %v641
  %643 = vmatmul.f32.gmra.mxu0 %v223
  %v644 = vpop.f32.mrf.mxu0
  %v645 = vadd.f32 %v436, %v644
  %646 = vmatmul.f32.gmra.mxu0 %v226
  %v647 = vpop.f32.mrf.mxu0
  %v648 = vadd.f32 %v439, %v647
  %649 = vmatmul.f32.gmra.mxu0 %v229
  %v650 = vpop.f32.mrf.mxu0
  %v651 = vadd.f32 %v442, %v650
  %652 = vmatmul.f32.gmra.mxu0 %v232
  %v653 = vpop.f32.mrf.mxu0
  %v654 = vadd.f32 %v445, %v653
  %655 = vmatmul.f32.gmra.mxu0 %v235
  %v656 = vpop.f32.mrf.mxu0
  %v657 = vadd.f32 %v448, %v656
  %658 = vmatmul.f32.gmra.mxu0 %v238
  %v659 = vpop.f32.mrf.mxu0
  %v660 = vadd.f32 %v451, %v659
  %661 = vmatmul.f32.gmra.mxu0 %v241
  %v662 = vpop.f32.mrf.mxu0
  %v663 = vadd.f32 %v454, %v662
  %664 = vmatmul.f32.gmra.mxu0 %v244
  %v665 = vpop.f32.mrf.mxu0
  %v666 = vadd.f32 %v457, %v665
  %667 = vmatmul.f32.gmra.mxu0 %v247
  %v668 = vpop.f32.mrf.mxu0
  %v669 = vadd.f32 %v460, %v668
  %670 = vmatmul.f32.gmra.mxu0 %v250
  %v671 = vpop.f32.mrf.mxu0
  %v672 = vadd.f32 %v463, %v671
  %673 = vmatmul.f32.gmra.mxu0 %v253
  %v674 = vpop.f32.mrf.mxu0
  %v675 = vadd.f32 %v466, %v674
  %676 = vmatmul.f32.gmra.mxu0 %v256
  %v677 = vpop.f32.mrf.mxu0
  %v678 = vadd.f32 %v469, %v677
  %679 = vmatmul.f32.gmra.mxu0 %v259
  %v680 = vpop.f32.mrf.mxu0
  %v681 = vadd.f32 %v472, %v680
  %682 = vmatmul.f32.gmra.mxu0 %v262
  %v683 = vpop.f32.mrf.mxu0
  %v684 = vadd.f32 %v475, %v683
  %685 = vmatmul.f32.gmra.mxu0 %v265
  %v686 = vpop.f32.mrf.mxu0
  %v687 = vadd.f32 %v478, %v686
  %688 = vmatmul.f32.gmra.mxu0 %v268
  %v689 = vpop.f32.mrf.mxu0
  %v690 = vadd.f32 %v481, %v689
  %691 = vmatmul.f32.gmra.mxu0 %v271
  %v692 = vpop.f32.mrf.mxu0
  %v693 = vadd.f32 %v484, %v692
  %694 = vmatmul.f32.gmra.mxu0 %v274
  %v695 = vpop.f32.mrf.mxu0
  %v696 = vadd.f32 %v487, %v695
  %697 = vmatmul.f32.gmra.mxu0 %v277
  %v698 = vpop.f32.mrf.mxu0
  %v699 = vadd.f32 %v490, %v698
  %700 = vmatmul.f32.gmra.mxu0 %v280
  %v701 = vpop.f32.mrf.mxu0
  %v702 = vadd.f32 %v493, %v701
  %703 = vmatmul.f32.gmra.mxu0 %v283
  %v704 = vpop.f32.mrf.mxu0
  %v705 = vadd.f32 %v496, %v704
  %706 = vmatmul.f32.gmra.mxu0 %v286
  %v707 = vpop.f32.mrf.mxu0
  %v708 = vadd.f32 %v499, %v707
  %709 = vmatmul.f32.gmra.mxu0 %v289
  %v710 = vpop.f32.mrf.mxu0
  %v711 = vadd.f32 %v502, %v710
  %712 = vmatmul.f32.gmra.mxu0 %v292
  %v713 = vpop.f32.mrf.mxu0
  %v714 = vadd.f32 %v505, %v713
  %715 = vmatmul.f32.gmra.mxu0 %v295
  %v716 = vpop.f32.mrf.mxu0
  %v717 = vadd.f32 %v508, %v716
  %718 = vmatmul.f32.gmra.mxu0 %v298
  %v719 = vpop.f32.mrf.mxu0
  %v720 = vadd.f32 %v511, %v719
  %721 = vmatmul.f32.gmra.mxu0 %v301
  %v722 = vpop.f32.mrf.mxu0
  %v723 = vadd.f32 %v514, %v722
  %724 = vmatmul.f32.gmra.mxu0 %v304
  %v725 = vpop.f32.mrf.mxu0
  %v726 = vadd.f32 %v517, %v725
  %727 = vmatmul.f32.gmra.mxu0 %v307
  %v728 = vpop.f32.mrf.mxu0
  %v729 = vadd.f32 %v520, %v728
  %730 = vmatmul.f32.gmra.mxu0 %v310
  %v731 = vpop.f32.mrf.mxu0
  %v732 = vadd.f32 %v523, %v731
  %733 = vmatmul.f32.gmra.mxu0 %v313
  %v734 = vpop.f32.mrf.mxu0
  %v735 = vadd.f32 %v526, %v734
  %736 = vmatmul.f32.gmra.mxu0 %v316
  %v737 = vpop.f32.mrf.mxu0
  %v738 = vadd.f32 %v529, %v737
  %739 = vmatmul.f32.gmra.mxu0 %v319
  %v740 = vpop.f32.mrf.mxu0
  %v741 = vadd.f32 %v532, %v740
  %742 = vmatmul.f32.gmra.mxu0 %v322
  %v743 = vpop.f32.mrf.mxu0
  %v744 = vadd.f32 %v535, %v743
  %745 = vmatmul.f32.gmra.mxu0 %v325
  %v746 = vpop.f32.mrf.mxu0
  %v747 = vadd.f32 %v538, %v746
  %748 = vmatmul.f32.gmra.mxu0 %v328
  %v749 = vpop.f32.mrf.mxu0
  %v750 = vadd.f32 %v541, %v749
  %751 = vmatmul.f32.gmra.mxu0 %v331
  %v752 = vpop.f32.mrf.mxu0
  %v753 = vadd.f32 %v544, %v752
  %754 = vmatmul.f32.gmra.mxu0 %v334
  %v755 = vpop.f32.mrf.mxu0
  %v756 = vadd.f32 %v547, %v755
  %757 = vmatmul.f32.gmra.mxu0 %v337
  %v758 = vpop.f32.mrf.mxu0
  %v759 = vadd.f32 %v550, %v758
  %760 = vmatmul.f32.gmra.mxu0 %v340
  %v761 = vpop.f32.mrf.mxu0
  %v762 = vadd.f32 %v553, %v761
  %763 = vmatmul.f32.gmra.mxu0 %v343
  %v764 = vpop.f32.mrf.mxu0
  %v765 = vadd.f32 %v556, %v764
  %766 = vmatmul.f32.gmra.mxu0 %v346
  %v767 = vpop.f32.mrf.mxu0
  %v768 = vadd.f32 %v559, %v767
  %769 = vmatmul.f32.gmra.mxu0 %v349
  %v770 = vpop.f32.mrf.mxu0
  %v771 = vadd.f32 %v562, %v770
  %772 = vmatmul.f32.gmra.mxu0 %v352
  %v773 = vpop.f32.mrf.mxu0
  %v774 = vadd.f32 %v565, %v773
  %775 = vmatmul.f32.gmra.mxu0 %v355
  %v776 = vpop.f32.mrf.mxu0
  %v777 = vadd.f32 %v568, %v776
  %778 = vdwg.mxu0
  %vm779 = vcmask 261120
  %v780 = vsel %vm779, %v588, 0.0
  %v781 = vsel %vm779, %v591, 0.0
  %v782 = vadd.f32 %v780, %v781
  %v783 = vsel %vm779, %v594, 0.0
  %v784 = vadd.f32 %v782, %v783
  %v785 = vsel %vm779, %v597, 0.0
  %v786 = vadd.f32 %v784, %v785
  %v787 = vsel %vm779, %v600, 0.0
  %v788 = vadd.f32 %v786, %v787
  %v789 = vsel %vm779, %v603, 0.0
  %v790 = vadd.f32 %v788, %v789
  %v791 = vsel %vm779, %v606, 0.0
  %v792 = vadd.f32 %v790, %v791
  %v793 = vsel %vm779, %v609, 0.0
  %v794 = vadd.f32 %v792, %v793
  %v795 = vsel %vm779, %v612, 0.0
  %v796 = vadd.f32 %v794, %v795
  %v797 = vsel %vm779, %v615, 0.0
  %v798 = vadd.f32 %v796, %v797
  %v799 = vsel %vm779, %v618, 0.0
  %v800 = vadd.f32 %v798, %v799
  %v801 = vsel %vm779, %v621, 0.0
  %v802 = vadd.f32 %v800, %v801
  %v803 = vsel %vm779, %v624, 0.0
  %v804 = vadd.f32 %v802, %v803
  %v805 = vsel %vm779, %v627, 0.0
  %v806 = vadd.f32 %v804, %v805
  %v807 = vsel %vm779, %v630, 0.0
  %v808 = vadd.f32 %v806, %v807
  %v809 = vsel %vm779, %v633, 0.0
  %v810 = vadd.f32 %v808, %v809
  %v811 = vsel %vm779, %v636, 0.0
  %v812 = vadd.f32 %v810, %v811
  %v813 = vsel %vm779, %v639, 0.0
  %v814 = vadd.f32 %v812, %v813
  %v815 = vsel %vm779, %v642, 0.0
  %v816 = vadd.f32 %v814, %v815
  %v817 = vsel %vm779, %v645, 0.0
  %v818 = vadd.f32 %v816, %v817
  %v819 = vsel %vm779, %v648, 0.0
  %v820 = vadd.f32 %v818, %v819
  %v821 = vsel %vm779, %v651, 0.0
  %v822 = vadd.f32 %v820, %v821
  %v823 = vsel %vm779, %v654, 0.0
  %v824 = vadd.f32 %v822, %v823
  %v825 = vsel %vm779, %v657, 0.0
  %v826 = vadd.f32 %v824, %v825
  %v827 = vsel %vm779, %v660, 0.0
  %v828 = vadd.f32 %v826, %v827
  %v829 = vsel %vm779, %v663, 0.0
  %v830 = vadd.f32 %v828, %v829
  %v831 = vsel %vm779, %v666, 0.0
  %v832 = vadd.f32 %v830, %v831
  %v833 = vsel %vm779, %v669, 0.0
  %v834 = vadd.f32 %v832, %v833
  %v835 = vsel %vm779, %v672, 0.0
  %v836 = vadd.f32 %v834, %v835
  %v837 = vsel %vm779, %v675, 0.0
  %v838 = vadd.f32 %v836, %v837
  %v839 = vsel %vm779, %v678, 0.0
  %v840 = vadd.f32 %v838, %v839
  %v841 = vsel %vm779, %v681, 0.0
  %v842 = vadd.f32 %v840, %v841
  %v843 = vsel %vm779, %v684, 0.0
  %v844 = vadd.f32 %v842, %v843
  %v845 = vsel %vm779, %v687, 0.0
  %v846 = vadd.f32 %v844, %v845
  %v847 = vsel %vm779, %v690, 0.0
  %v848 = vadd.f32 %v846, %v847
  %v849 = vsel %vm779, %v693, 0.0
  %v850 = vadd.f32 %v848, %v849
  %v851 = vsel %vm779, %v696, 0.0
  %v852 = vadd.f32 %v850, %v851
  %v853 = vsel %vm779, %v699, 0.0
  %v854 = vadd.f32 %v852, %v853
  %v855 = vsel %vm779, %v702, 0.0
  %v856 = vadd.f32 %v854, %v855
  %v857 = vsel %vm779, %v705, 0.0
  %v858 = vadd.f32 %v856, %v857
  %v859 = vsel %vm779, %v708, 0.0
  %v860 = vadd.f32 %v858, %v859
  %v861 = vsel %vm779, %v711, 0.0
  %v862 = vadd.f32 %v860, %v861
  %v863 = vsel %vm779, %v714, 0.0
  %v864 = vadd.f32 %v862, %v863
  %v865 = vsel %vm779, %v717, 0.0
  %v866 = vadd.f32 %v864, %v865
  %v867 = vsel %vm779, %v720, 0.0
  %v868 = vadd.f32 %v866, %v867
  %v869 = vsel %vm779, %v723, 0.0
  %v870 = vadd.f32 %v868, %v869
  %v871 = vsel %vm779, %v726, 0.0
  %v872 = vadd.f32 %v870, %v871
  %v873 = vsel %vm779, %v729, 0.0
  %v874 = vadd.f32 %v872, %v873
  %v875 = vsel %vm779, %v732, 0.0
  %v876 = vadd.f32 %v874, %v875
  %v877 = vsel %vm779, %v735, 0.0
  %v878 = vadd.f32 %v876, %v877
  %v879 = vsel %vm779, %v738, 0.0
  %v880 = vadd.f32 %v878, %v879
  %v881 = vsel %vm779, %v741, 0.0
  %v882 = vadd.f32 %v880, %v881
  %v883 = vsel %vm779, %v744, 0.0
  %v884 = vadd.f32 %v882, %v883
  %v885 = vsel %vm779, %v747, 0.0
  %v886 = vadd.f32 %v884, %v885
  %v887 = vsel %vm779, %v750, 0.0
  %v888 = vadd.f32 %v886, %v887
  %v889 = vsel %vm779, %v753, 0.0
  %v890 = vadd.f32 %v888, %v889
  %v891 = vsel %vm779, %v756, 0.0
  %v892 = vadd.f32 %v890, %v891
  %v893 = vsel %vm779, %v759, 0.0
  %v894 = vadd.f32 %v892, %v893
  %v895 = vsel %vm779, %v762, 0.0
  %v896 = vadd.f32 %v894, %v895
  %v897 = vsel %vm779, %v765, 0.0
  %v898 = vadd.f32 %v896, %v897
  %v899 = vsel %vm779, %v768, 0.0
  %v900 = vadd.f32 %v898, %v899
  %v901 = vsel %vm779, %v771, 0.0
  %v902 = vadd.f32 %v900, %v901
  %v903 = vsel %vm779, %v774, 0.0
  %v904 = vadd.f32 %v902, %v903
  %v905 = vsel %vm779, %v777, 0.0
  %v906 = vadd.f32 %v904, %v905
  %v907 = vrot.slane %v906, 4
  %v908 = vadd.f32 %v906, %v907
  %v909 = vrot.slane %v908, 2
  %v910 = vadd.f32 %v908, %v909
  %v911 = vrot.slane %v910, 1
  %v912 = vadd.f32 %v910, %v911
  %v913 = vrcp.pop 512.0
  %v914 = vmul.f32 512.0, %v913
  %v915 = vsub.f32 1.0, %v914
  %v916 = vmul.f32 %v913, %v915
  %v917 = vadd.f32 %v913, %v916
  %vm918 = vweird.f32 %v913
  %v919 = vsel %vm918, %v913, %v917
  %v920 = vmul.f32 %v912, %v919
  %v921 = vsub.f32 %v588, %v920
  %v922 = vsub.f32 %v591, %v920
  %v923 = vsub.f32 %v594, %v920
  %v924 = vsub.f32 %v597, %v920
  %v925 = vsub.f32 %v600, %v920
  %v926 = vsub.f32 %v603, %v920
  %v927 = vsub.f32 %v606, %v920
  %v928 = vsub.f32 %v609, %v920
  %v929 = vsub.f32 %v612, %v920
  %v930 = vsub.f32 %v615, %v920
  %v931 = vsub.f32 %v618, %v920
  %v932 = vsub.f32 %v621, %v920
  %v933 = vsub.f32 %v624, %v920
  %v934 = vsub.f32 %v627, %v920
  %v935 = vsub.f32 %v630, %v920
  %v936 = vsub.f32 %v633, %v920
  %v937 = vsub.f32 %v636, %v920
  %v938 = vsub.f32 %v639, %v920
  %v939 = vsub.f32 %v642, %v920
  %v940 = vsub.f32 %v645, %v920
  %v941 = vsub.f32 %v648, %v920
  %v942 = vsub.f32 %v651, %v920
  %v943 = vsub.f32 %v654, %v920
  %v944 = vsub.f32 %v657, %v920
  %v945 = vsub.f32 %v660, %v920
  %v946 = vsub.f32 %v663, %v920
  %v947 = vsub.f32 %v666, %v920
  %v948 = vsub.f32 %v669, %v920
  %v949 = vsub.f32 %v672, %v920
  %v950 = vsub.f32 %v675, %v920
  %v951 = vsub.f32 %v678, %v920
  %v952 = vsub.f32 %v681, %v920
  %v953 = vsub.f32 %v684, %v920
  %v954 = vsub.f32 %v687, %v920
  %v955 = vsub.f32 %v690, %v920
  %v956 = vsub.f32 %v693, %v920
  %v957 = vsub.f32 %v696, %v920
  %v958 = vsub.f32 %v699, %v920
  %v959 = vsub.f32 %v702, %v920
  %v960 = vsub.f32 %v705, %v920
  %v961 = vsub.f32 %v708, %v920
  %v962 = vsub.f32 %v711, %v920
  %v963 = vsub.f32 %v714, %v920
  %v964 = vsub.f32 %v717, %v920
  %v965 = vsub.f32 %v720, %v920
  %v966 = vsub.f32 %v723, %v920
  %v967 = vsub.f32 %v726, %v920
  %v968 = vsub.f32 %v729, %v920
  %v969 = vsub.f32 %v732, %v920
  %v970 = vsub.f32 %v735, %v920
  %v971 = vsub.f32 %v738, %v920
  %v972 = vsub.f32 %v741, %v920
  %v973 = vsub.f32 %v744, %v920
  %v974 = vsub.f32 %v747, %v920
  %v975 = vsub.f32 %v750, %v920
  %v976 = vsub.f32 %v753, %v920
  %v977 = vsub.f32 %v756, %v920
  %v978 = vsub.f32 %v759, %v920
  %v979 = vsub.f32 %v762, %v920
  %v980 = vsub.f32 %v765, %v920
  %v981 = vsub.f32 %v768, %v920
  %v982 = vsub.f32 %v771, %v920
  %v983 = vsub.f32 %v774, %v920
  %v984 = vsub.f32 %v777, %v920
  %v985 = vmul.f32 %v921, %v921
  %v986 = vmul.f32 %v922, %v922
  %v987 = vmul.f32 %v923, %v923
  %v988 = vmul.f32 %v924, %v924
  %v989 = vmul.f32 %v925, %v925
  %v990 = vmul.f32 %v926, %v926
  %v991 = vmul.f32 %v927, %v927
  %v992 = vmul.f32 %v928, %v928
  %v993 = vmul.f32 %v929, %v929
  %v994 = vmul.f32 %v930, %v930
  %v995 = vmul.f32 %v931, %v931
  %v996 = vmul.f32 %v932, %v932
  %v997 = vmul.f32 %v933, %v933
  %v998 = vmul.f32 %v934, %v934
  %v999 = vmul.f32 %v935, %v935
  %v1000 = vmul.f32 %v936, %v936
  %v1001 = vmul.f32 %v937, %v937
  %v1002 = vmul.f32 %v938, %v938
  %v1003 = vmul.f32 %v939, %v939
  %v1004 = vmul.f32 %v940, %v940
  %v1005 = vmul.f32 %v941, %v941
  %v1006 = vmul.f32 %v942, %v942
  %v1007 = vmul.f32 %v943, %v943
  %v1008 = vmul.f32 %v944, %v944
  %v1009 = vmul.f32 %v945, %v945
  %v1010 = vmul.f32 %v946, %v946
  %v1011 = vmul.f32 %v947, %v947
  %v1012 = vmul.f32 %v948, %v948
  %v1013 = vmul.f32 %v949, %v949
  %v1014 = vmul.f32 %v950, %v950
  %v1015 = vmul.f32 %v951, %v951
  %v1016 = vmul.f32 %v952, %v952
  %v1017 = vmul.f32 %v953, %v953
  %v1018 = vmul.f32 %v954, %v954
  %v1019 = vmul.f32 %v955, %v955
  %v1020 = vmul.f32 %v956, %v956
  %v1021 = vmul.f32 %v957, %v957
  %v1022 = vmul.f32 %v958, %v958
  %v1023 = vmul.f32 %v959, %v959
  %v1024 = vmul.f32 %v960, %v960
  %v1025 = vmul.f32 %v961, %v961
  %v1026 = vmul.f32 %v962, %v962
  %v1027 = vmul.f32 %v963, %v963
  %v1028 = vmul.f32 %v964, %v964
  %v1029 = vmul.f32 %v965, %v965
  %v1030 = vmul.f32 %v966, %v966
  %v1031 = vmul.f32 %v967, %v967
  %v1032 = vmul.f32 %v968, %v968
  %v1033 = vmul.f32 %v969, %v969
  %v1034 = vmul.f32 %v970, %v970
  %v1035 = vmul.f32 %v971, %v971
  %v1036 = vmul.f32 %v972, %v972
  %v1037 = vmul.f32 %v973, %v973
  %v1038 = vmul.f32 %v974, %v974
  %v1039 = vmul.f32 %v975, %v975
  %v1040 = vmul.f32 %v976, %v976
  %v1041 = vmul.f32 %v977, %v977
  %v1042 = vmul.f32 %v978, %v978
  %v1043 = vmul.f32 %v979, %v979
  %v1044 = vmul.f32 %v980, %v980
  %v1045 = vmul.f32 %v981, %v981
  %v1046 = vmul.f32 %v982, %v982
  %v1047 = vmul.f32 %v983, %v983
  %v1048 = vmul.f32 %v984, %v984
  %v1049 = vsel %vm779, %v985, 0.0
  %v1050 = vsel %vm779, %v986, 0.0
  %v1051 = vadd.f32 %v1049, %v1050
  %v1052 = vsel %vm779, %v987, 0.0
  %v1053 = vadd.f32 %v1051, %v1052
  %v1054 = vsel %vm779, %v988, 0.0
  %v1055 = vadd.f32 %v1053, %v1054
  %v1056 = vsel %vm779, %v989, 0.0
  %v1057 = vadd.f32 %v1055, %v1056
  %v1058 = vsel %vm779, %v990, 0.0
  %v1059 = vadd.f32 %v1057, %v1058
  %v1060 = vsel %vm779, %v991, 0.0
  %v1061 = vadd.f32 %v1059, %v1060
  %v1062 = vsel %vm779, %v992, 0.0
  %v1063 = vadd.f32 %v1061, %v1062
  %v1064 = vsel %vm779, %v993, 0.0
  %v1065 = vadd.f32 %v1063, %v1064
  %v1066 = vsel %vm779, %v994, 0.0
  %v1067 = vadd.f32 %v1065, %v1066
  %v1068 = vsel %vm779, %v995, 0.0
  %v1069 = vadd.f32 %v1067, %v1068
  %v1070 = vsel %vm779, %v996, 0.0
  %v1071 = vadd.f32 %v1069, %v1070
  %v1072 = vsel %vm779, %v997, 0.0
  %v1073 = vadd.f32 %v1071, %v1072
  %v1074 = vsel %vm779, %v998, 0.0
  %v1075 = vadd.f32 %v1073, %v1074
  %v1076 = vsel %vm779, %v999, 0.0
  %v1077 = vadd.f32 %v1075, %v1076
  %v1078 = vsel %vm779, %v1000, 0.0
  %v1079 = vadd.f32 %v1077, %v1078
  %v1080 = vsel %vm779, %v1001, 0.0
  %v1081 = vadd.f32 %v1079, %v1080
  %v1082 = vsel %vm779, %v1002, 0.0
  %v1083 = vadd.f32 %v1081, %v1082
  %v1084 = vsel %vm779, %v1003, 0.0
  %v1085 = vadd.f32 %v1083, %v1084
  %v1086 = vsel %vm779, %v1004, 0.0
  %v1087 = vadd.f32 %v1085, %v1086
  %v1088 = vsel %vm779, %v1005, 0.0
  %v1089 = vadd.f32 %v1087, %v1088
  %v1090 = vsel %vm779, %v1006, 0.0
  %v1091 = vadd.f32 %v1089, %v1090
  %v1092 = vsel %vm779, %v1007, 0.0
  %v1093 = vadd.f32 %v1091, %v1092
  %v1094 = vsel %vm779, %v1008, 0.0
  %v1095 = vadd.f32 %v1093, %v1094
  %v1096 = vsel %vm779, %v1009, 0.0
  %v1097 = vadd.f32 %v1095, %v1096
  %v1098 = vsel %vm779, %v1010, 0.0
  %v1099 = vadd.f32 %v1097, %v1098
  %v1100 = vsel %vm779, %v1011, 0.0
  %v1101 = vadd.f32 %v1099, %v1100
  %v1102 = vsel %vm779, %v1012, 0.0
  %v1103 = vadd.f32 %v1101, %v1102
  %v1104 = vsel %vm779, %v1013, 0.0
  %v1105 = vadd.f32 %v1103, %v1104
  %v1106 = vsel %vm779, %v1014, 0.0
  %v1107 = vadd.f32 %v1105, %v1106
  %v1108 = vsel %vm779, %v1015, 0.0
  %v1109 = vadd.f32 %v1107, %v1108
  %v1110 = vsel %vm779, %v1016, 0.0
  %v1111 = vadd.f32 %v1109, %v1110
  %v1112 = vsel %vm779, %v1017, 0.0
  %v1113 = vadd.f32 %v1111, %v1112
  %v1114 = vsel %vm779, %v1018, 0.0
  %v1115 = vadd.f32 %v1113, %v1114
  %v1116 = vsel %vm779, %v1019, 0.0
  %v1117 = vadd.f32 %v1115, %v1116
  %v1118 = vsel %vm779, %v1020, 0.0
  %v1119 = vadd.f32 %v1117, %v1118
  %v1120 = vsel %vm779, %v1021, 0.0
  %v1121 = vadd.f32 %v1119, %v1120
  %v1122 = vsel %vm779, %v1022, 0.0
  %v1123 = vadd.f32 %v1121, %v1122
  %v1124 = vsel %vm779, %v1023, 0.0
  %v1125 = vadd.f32 %v1123, %v1124
  %v1126 = vsel %vm779, %v1024, 0.0
  %v1127 = vadd.f32 %v1125, %v1126
  %v1128 = vsel %vm779, %v1025, 0.0
  %v1129 = vadd.f32 %v1127, %v1128
  %v1130 = vsel %vm779, %v1026, 0.0
  %v1131 = vadd.f32 %v1129, %v1130
  %v1132 = vsel %vm779, %v1027, 0.0
  %v1133 = vadd.f32 %v1131, %v1132
  %v1134 = vsel %vm779, %v1028, 0.0
  %v1135 = vadd.f32 %v1133, %v1134
  %v1136 = vsel %vm779, %v1029, 0.0
  %v1137 = vadd.f32 %v1135, %v1136
  %v1138 = vsel %vm779, %v1030, 0.0
  %v1139 = vadd.f32 %v1137, %v1138
  %v1140 = vsel %vm779, %v1031, 0.0
  %v1141 = vadd.f32 %v1139, %v1140
  %v1142 = vsel %vm779, %v1032, 0.0
  %v1143 = vadd.f32 %v1141, %v1142
  %v1144 = vsel %vm779, %v1033, 0.0
  %v1145 = vadd.f32 %v1143, %v1144
  %v1146 = vsel %vm779, %v1034, 0.0
  %v1147 = vadd.f32 %v1145, %v1146
  %v1148 = vsel %vm779, %v1035, 0.0
  %v1149 = vadd.f32 %v1147, %v1148
  %v1150 = vsel %vm779, %v1036, 0.0
  %v1151 = vadd.f32 %v1149, %v1150
  %v1152 = vsel %vm779, %v1037, 0.0
  %v1153 = vadd.f32 %v1151, %v1152
  %v1154 = vsel %vm779, %v1038, 0.0
  %v1155 = vadd.f32 %v1153, %v1154
  %v1156 = vsel %vm779, %v1039, 0.0
  %v1157 = vadd.f32 %v1155, %v1156
  %v1158 = vsel %vm779, %v1040, 0.0
  %v1159 = vadd.f32 %v1157, %v1158
  %v1160 = vsel %vm779, %v1041, 0.0
  %v1161 = vadd.f32 %v1159, %v1160
  %v1162 = vsel %vm779, %v1042, 0.0
  %v1163 = vadd.f32 %v1161, %v1162
  %v1164 = vsel %vm779, %v1043, 0.0
  %v1165 = vadd.f32 %v1163, %v1164
  %v1166 = vsel %vm779, %v1044, 0.0
  %v1167 = vadd.f32 %v1165, %v1166
  %v1168 = vsel %vm779, %v1045, 0.0
  %v1169 = vadd.f32 %v1167, %v1168
  %v1170 = vsel %vm779, %v1046, 0.0
  %v1171 = vadd.f32 %v1169, %v1170
  %v1172 = vsel %vm779, %v1047, 0.0
  %v1173 = vadd.f32 %v1171, %v1172
  %v1174 = vsel %vm779, %v1048, 0.0
  %v1175 = vadd.f32 %v1173, %v1174
  %v1176 = vrot.slane %v1175, 4
  %v1177 = vadd.f32 %v1175, %v1176
  %v1178 = vrot.slane %v1177, 2
  %v1179 = vadd.f32 %v1177, %v1178
  %v1180 = vrot.slane %v1179, 1
  %v1181 = vadd.f32 %v1179, %v1180
  %v1182 = vmul.f32 %v1181, %v919
  %v1183 = vadd.f32 %v1182, 1e-05
  %v1184 = vrsqrt.pop %v1183
  %v1185 = vmul.f32 %v1184, %v1183
  %v1186 = vmul.f32 %v1185, %v1184
  %v1187 = vmul.f32 0.5, %v1186
  %v1188 = vsub.f32 1.5, %v1187
  %v1189 = vmul.f32 %v1184, %v1188
  %vm1190 = vweird.f32 %v1183
  %vm1191 = vweird.f32 %v1184
  %vm1192 = vmor %vm1190, %vm1191
  %v1193 = vsel %vm1192, %v1184, %v1189
  %v1194 = vld [vmem:[%s2] sm:$0x1]
  %v1195 = vmul.f32 %v1193, %v1194
  %v1196 = vperm.slane %v1195, 0
  %v1197 = vmul.f32 %v921, %v1196
  %v1198 = vmul.f32 %v922, %v1196
  %v1199 = vmul.f32 %v923, %v1196
  %v1200 = vmul.f32 %v924, %v1196
  %v1201 = vmul.f32 %v925, %v1196
  %v1202 = vmul.f32 %v926, %v1196
  %v1203 = vmul.f32 %v927, %v1196
  %v1204 = vmul.f32 %v928, %v1196
  %v1205 = vmul.f32 %v929, %v1196
  %v1206 = vmul.f32 %v930, %v1196
  %v1207 = vmul.f32 %v931, %v1196
  %v1208 = vmul.f32 %v932, %v1196
  %v1209 = vmul.f32 %v933, %v1196
  %v1210 = vmul.f32 %v934, %v1196
  %v1211 = vmul.f32 %v935, %v1196
  %v1212 = vmul.f32 %v936, %v1196
  %v1213 = vmul.f32 %v937, %v1196
  %v1214 = vmul.f32 %v938, %v1196
  %v1215 = vmul.f32 %v939, %v1196
  %v1216 = vmul.f32 %v940, %v1196
  %v1217 = vmul.f32 %v941, %v1196
  %v1218 = vmul.f32 %v942, %v1196
  %v1219 = vmul.f32 %v943, %v1196
  %v1220 = vmul.f32 %v944, %v1196
  %v1221 = vmul.f32 %v945, %v1196
  %v1222 = vmul.f32 %v946, %v1196
  %v1223 = vmul.f32 %v947, %v1196
  %v1224 = vmul.f32 %v948, %v1196
  %v1225 = vmul.f32 %v949, %v1196
  %v1226 = vmul.f32 %v950, %v1196
  %v1227 = vmul.f32 %v951, %v1196
  %v1228 = vmul.f32 %v952, %v1196
  %v1229 = vmul.f32 %v953, %v1196
  %v1230 = vmul.f32 %v954, %v1196
  %v1231 = vmul.f32 %v955, %v1196
  %v1232 = vmul.f32 %v956, %v1196
  %v1233 = vmul.f32 %v957, %v1196
  %v1234 = vmul.f32 %v958, %v1196
  %v1235 = vmul.f32 %v959, %v1196
  %v1236 = vmul.f32 %v960, %v1196
  %v1237 = vmul.f32 %v961, %v1196
  %v1238 = vmul.f32 %v962, %v1196
  %v1239 = vmul.f32 %v963, %v1196
  %v1240 = vmul.f32 %v964, %v1196
  %v1241 = vmul.f32 %v965, %v1196
  %v1242 = vmul.f32 %v966, %v1196
  %v1243 = vmul.f32 %v967, %v1196
  %v1244 = vmul.f32 %v968, %v1196
  %v1245 = vmul.f32 %v969, %v1196
  %v1246 = vmul.f32 %v970, %v1196
  %v1247 = vmul.f32 %v971, %v1196
  %v1248 = vmul.f32 %v972, %v1196
  %v1249 = vmul.f32 %v973, %v1196
  %v1250 = vmul.f32 %v974, %v1196
  %v1251 = vmul.f32 %v975, %v1196
  %v1252 = vmul.f32 %v976, %v1196
  %v1253 = vmul.f32 %v977, %v1196
  %v1254 = vmul.f32 %v978, %v1196
  %v1255 = vmul.f32 %v979, %v1196
  %v1256 = vmul.f32 %v980, %v1196
  %v1257 = vmul.f32 %v981, %v1196
  %v1258 = vmul.f32 %v982, %v1196
  %v1259 = vmul.f32 %v983, %v1196
  %v1260 = vmul.f32 %v984, %v1196
  %v1261 = vld [vmem:[%s3] sm:$0x1]
  %v1263 = vperm.slane %v1261, 0
  %v1265 = vadd.f32 %v1197, %v1263
  %v1266 = vadd.f32 %v1198, %v1263
  %v1267 = vadd.f32 %v1199, %v1263
  %v1268 = vadd.f32 %v1200, %v1263
  %v1269 = vadd.f32 %v1201, %v1263
  %v1270 = vadd.f32 %v1202, %v1263
  %v1271 = vadd.f32 %v1203, %v1263
  %v1272 = vadd.f32 %v1204, %v1263
  %v1273 = vadd.f32 %v1205, %v1263
  %v1274 = vadd.f32 %v1206, %v1263
  %v1275 = vadd.f32 %v1207, %v1263
  %v1276 = vadd.f32 %v1208, %v1263
  %v1277 = vadd.f32 %v1209, %v1263
  %v1278 = vadd.f32 %v1210, %v1263
  %v1279 = vadd.f32 %v1211, %v1263
  %v1280 = vadd.f32 %v1212, %v1263
  %v1281 = vadd.f32 %v1213, %v1263
  %v1282 = vadd.f32 %v1214, %v1263
  %v1283 = vadd.f32 %v1215, %v1263
  %v1284 = vadd.f32 %v1216, %v1263
  %v1285 = vadd.f32 %v1217, %v1263
  %v1286 = vadd.f32 %v1218, %v1263
  %v1287 = vadd.f32 %v1219, %v1263
  %v1288 = vadd.f32 %v1220, %v1263
  %v1289 = vadd.f32 %v1221, %v1263
  %v1290 = vadd.f32 %v1222, %v1263
  %v1291 = vadd.f32 %v1223, %v1263
  %v1292 = vadd.f32 %v1224, %v1263
  %v1293 = vadd.f32 %v1225, %v1263
  %v1294 = vadd.f32 %v1226, %v1263
  %v1295 = vadd.f32 %v1227, %v1263
  %v1296 = vadd.f32 %v1228, %v1263
  %v1297 = vadd.f32 %v1229, %v1263
  %v1298 = vadd.f32 %v1230, %v1263
  %v1299 = vadd.f32 %v1231, %v1263
  %v1300 = vadd.f32 %v1232, %v1263
  %v1301 = vadd.f32 %v1233, %v1263
  %v1302 = vadd.f32 %v1234, %v1263
  %v1303 = vadd.f32 %v1235, %v1263
  %v1304 = vadd.f32 %v1236, %v1263
  %v1305 = vadd.f32 %v1237, %v1263
  %v1306 = vadd.f32 %v1238, %v1263
  %v1307 = vadd.f32 %v1239, %v1263
  %v1308 = vadd.f32 %v1240, %v1263
  %v1309 = vadd.f32 %v1241, %v1263
  %v1310 = vadd.f32 %v1242, %v1263
  %v1311 = vadd.f32 %v1243, %v1263
  %v1312 = vadd.f32 %v1244, %v1263
  %v1313 = vadd.f32 %v1245, %v1263
  %v1314 = vadd.f32 %v1246, %v1263
  %v1315 = vadd.f32 %v1247, %v1263
  %v1316 = vadd.f32 %v1248, %v1263
  %v1317 = vadd.f32 %v1249, %v1263
  %v1318 = vadd.f32 %v1250, %v1263
  %v1319 = vadd.f32 %v1251, %v1263
  %v1320 = vadd.f32 %v1252, %v1263
  %v1321 = vadd.f32 %v1253, %v1263
  %v1322 = vadd.f32 %v1254, %v1263
  %v1323 = vadd.f32 %v1255, %v1263
  %v1324 = vadd.f32 %v1256, %v1263
  %v1325 = vadd.f32 %v1257, %v1263
  %v1326 = vadd.f32 %v1258, %v1263
  %v1327 = vadd.f32 %v1259, %v1263
  %v1328 = vadd.f32 %v1260, %v1263
  %v1329 = vmax.f32 %v1265, 0.0
  %v1330 = vmax.f32 %v1266, 0.0
  %v1331 = vmax.f32 %v1267, 0.0
  %v1332 = vmax.f32 %v1268, 0.0
  %v1333 = vmax.f32 %v1269, 0.0
  %v1334 = vmax.f32 %v1270, 0.0
  %v1335 = vmax.f32 %v1271, 0.0
  %v1336 = vmax.f32 %v1272, 0.0
  %v1337 = vmax.f32 %v1273, 0.0
  %v1338 = vmax.f32 %v1274, 0.0
  %v1339 = vmax.f32 %v1275, 0.0
  %v1340 = vmax.f32 %v1276, 0.0
  %v1341 = vmax.f32 %v1277, 0.0
  %v1342 = vmax.f32 %v1278, 0.0
  %v1343 = vmax.f32 %v1279, 0.0
  %v1344 = vmax.f32 %v1280, 0.0
  %v1345 = vmax.f32 %v1281, 0.0
  %v1346 = vmax.f32 %v1282, 0.0
  %v1347 = vmax.f32 %v1283, 0.0
  %v1348 = vmax.f32 %v1284, 0.0
  %v1349 = vmax.f32 %v1285, 0.0
  %v1350 = vmax.f32 %v1286, 0.0
  %v1351 = vmax.f32 %v1287, 0.0
  %v1352 = vmax.f32 %v1288, 0.0
  %v1353 = vmax.f32 %v1289, 0.0
  %v1354 = vmax.f32 %v1290, 0.0
  %v1355 = vmax.f32 %v1291, 0.0
  %v1356 = vmax.f32 %v1292, 0.0
  %v1357 = vmax.f32 %v1293, 0.0
  %v1358 = vmax.f32 %v1294, 0.0
  %v1359 = vmax.f32 %v1295, 0.0
  %v1360 = vmax.f32 %v1296, 0.0
  %v1361 = vmax.f32 %v1297, 0.0
  %v1362 = vmax.f32 %v1298, 0.0
  %v1363 = vmax.f32 %v1299, 0.0
  %v1364 = vmax.f32 %v1300, 0.0
  %v1365 = vmax.f32 %v1301, 0.0
  %v1366 = vmax.f32 %v1302, 0.0
  %v1367 = vmax.f32 %v1303, 0.0
  %v1368 = vmax.f32 %v1304, 0.0
  %v1369 = vmax.f32 %v1305, 0.0
  %v1370 = vmax.f32 %v1306, 0.0
  %v1371 = vmax.f32 %v1307, 0.0
  %v1372 = vmax.f32 %v1308, 0.0
  %v1373 = vmax.f32 %v1309, 0.0
  %v1374 = vmax.f32 %v1310, 0.0
  %v1375 = vmax.f32 %v1311, 0.0
  %v1376 = vmax.f32 %v1312, 0.0
  %v1377 = vmax.f32 %v1313, 0.0
  %v1378 = vmax.f32 %v1314, 0.0
  %v1379 = vmax.f32 %v1315, 0.0
  %v1380 = vmax.f32 %v1316, 0.0
  %v1381 = vmax.f32 %v1317, 0.0
  %v1382 = vmax.f32 %v1318, 0.0
  %v1383 = vmax.f32 %v1319, 0.0
  %v1384 = vmax.f32 %v1320, 0.0
  %v1385 = vmax.f32 %v1321, 0.0
  %v1386 = vmax.f32 %v1322, 0.0
  %v1387 = vmax.f32 %v1323, 0.0
  %v1388 = vmax.f32 %v1324, 0.0
  %v1389 = vmax.f32 %v1325, 0.0
  %v1390 = vmax.f32 %v1326, 0.0
  %v1391 = vmax.f32 %v1327, 0.0
  %v1392 = vmax.f32 %v1328, 0.0
  %1393 = vst.msk [vmem:[%s4] sm:$0xff] %vm779, %v1329
  %1394 = vst.msk [vmem:[%s4 + $0x8] sm:$0xff] %vm779, %v1330
  %1395 = vst.msk [vmem:[%s4 + $0x10] sm:$0xff] %vm779, %v1331
  %1396 = vst.msk [vmem:[%s4 + $0x18] sm:$0xff] %vm779, %v1332
  %1397 = vst.msk [vmem:[%s4 + $0x20] sm:$0xff] %vm779, %v1333
  %1398 = vst.msk [vmem:[%s4 + $0x28] sm:$0xff] %vm779, %v1334
  %1399 = vst.msk [vmem:[%s4 + $0x30] sm:$0xff] %vm779, %v1335
  %1400 = vst.msk [vmem:[%s4 + $0x38] sm:$0xff] %vm779, %v1336
  %1401 = vst.msk [vmem:[%s4 + $0x40] sm:$0xff] %vm779, %v1337
  %1402 = vst.msk [vmem:[%s4 + $0x48] sm:$0xff] %vm779, %v1338
  %1403 = vst.msk [vmem:[%s4 + $0x50] sm:$0xff] %vm779, %v1339
  %1404 = vst.msk [vmem:[%s4 + $0x58] sm:$0xff] %vm779, %v1340
  %1405 = vst.msk [vmem:[%s4 + $0x60] sm:$0xff] %vm779, %v1341
  %1406 = vst.msk [vmem:[%s4 + $0x68] sm:$0xff] %vm779, %v1342
  %1407 = vst.msk [vmem:[%s4 + $0x70] sm:$0xff] %vm779, %v1343
  %1408 = vst.msk [vmem:[%s4 + $0x78] sm:$0xff] %vm779, %v1344
  %1409 = vst.msk [vmem:[%s4 + $0x80] sm:$0xff] %vm779, %v1345
  %1410 = vst.msk [vmem:[%s4 + $0x88] sm:$0xff] %vm779, %v1346
  %1411 = vst.msk [vmem:[%s4 + $0x90] sm:$0xff] %vm779, %v1347
  %1412 = vst.msk [vmem:[%s4 + $0x98] sm:$0xff] %vm779, %v1348
  %1413 = vst.msk [vmem:[%s4 + $0xa0] sm:$0xff] %vm779, %v1349
  %1414 = vst.msk [vmem:[%s4 + $0xa8] sm:$0xff] %vm779, %v1350
  %1415 = vst.msk [vmem:[%s4 + $0xb0] sm:$0xff] %vm779, %v1351
  %1416 = vst.msk [vmem:[%s4 + $0xb8] sm:$0xff] %vm779, %v1352
  %1417 = vst.msk [vmem:[%s4 + $0xc0] sm:$0xff] %vm779, %v1353
  %1418 = vst.msk [vmem:[%s4 + $0xc8] sm:$0xff] %vm779, %v1354
  %1419 = vst.msk [vmem:[%s4 + $0xd0] sm:$0xff] %vm779, %v1355
  %1420 = vst.msk [vmem:[%s4 + $0xd8] sm:$0xff] %vm779, %v1356
  %1421 = vst.msk [vmem:[%s4 + $0xe0] sm:$0xff] %vm779, %v1357
  %1422 = vst.msk [vmem:[%s4 + $0xe8] sm:$0xff] %vm779, %v1358
  %1423 = vst.msk [vmem:[%s4 + $0xf0] sm:$0xff] %vm779, %v1359
  %1424 = vst.msk [vmem:[%s4 + $0xf8] sm:$0xff] %vm779, %v1360
  %1425 = vst.msk [vmem:[%s4 + $0x100] sm:$0xff] %vm779, %v1361
  %1426 = vst.msk [vmem:[%s4 + $0x108] sm:$0xff] %vm779, %v1362
  %1427 = vst.msk [vmem:[%s4 + $0x110] sm:$0xff] %vm779, %v1363
  %1428 = vst.msk [vmem:[%s4 + $0x118] sm:$0xff] %vm779, %v1364
  %1429 = vst.msk [vmem:[%s4 + $0x120] sm:$0xff] %vm779, %v1365
  %1430 = vst.msk [vmem:[%s4 + $0x128] sm:$0xff] %vm779, %v1366
  %1431 = vst.msk [vmem:[%s4 + $0x130] sm:$0xff] %vm779, %v1367
  %1432 = vst.msk [vmem:[%s4 + $0x138] sm:$0xff] %vm779, %v1368
  %1433 = vst.msk [vmem:[%s4 + $0x140] sm:$0xff] %vm779, %v1369
  %1434 = vst.msk [vmem:[%s4 + $0x148] sm:$0xff] %vm779, %v1370
  %1435 = vst.msk [vmem:[%s4 + $0x150] sm:$0xff] %vm779, %v1371
  %1436 = vst.msk [vmem:[%s4 + $0x158] sm:$0xff] %vm779, %v1372
  %1437 = vst.msk [vmem:[%s4 + $0x160] sm:$0xff] %vm779, %v1373
  %1438 = vst.msk [vmem:[%s4 + $0x168] sm:$0xff] %vm779, %v1374
  %1439 = vst.msk [vmem:[%s4 + $0x170] sm:$0xff] %vm779, %v1375
  %1440 = vst.msk [vmem:[%s4 + $0x178] sm:$0xff] %vm779, %v1376
  %1441 = vst.msk [vmem:[%s4 + $0x180] sm:$0xff] %vm779, %v1377
  %1442 = vst.msk [vmem:[%s4 + $0x188] sm:$0xff] %vm779, %v1378
  %1443 = vst.msk [vmem:[%s4 + $0x190] sm:$0xff] %vm779, %v1379
  %1444 = vst.msk [vmem:[%s4 + $0x198] sm:$0xff] %vm779, %v1380
  %1445 = vst.msk [vmem:[%s4 + $0x1a0] sm:$0xff] %vm779, %v1381
  %1446 = vst.msk [vmem:[%s4 + $0x1a8] sm:$0xff] %vm779, %v1382
  %1447 = vst.msk [vmem:[%s4 + $0x1b0] sm:$0xff] %vm779, %v1383
  %1448 = vst.msk [vmem:[%s4 + $0x1b8] sm:$0xff] %vm779, %v1384
  %1449 = vst.msk [vmem:[%s4 + $0x1c0] sm:$0xff] %vm779, %v1385
  %1450 = vst.msk [vmem:[%s4 + $0x1c8] sm:$0xff] %vm779, %v1386
  %1451 = vst.msk [vmem:[%s4 + $0x1d0] sm:$0xff] %vm779, %v1387
  %1452 = vst.msk [vmem:[%s4 + $0x1d8] sm:$0xff] %vm779, %v1388
  %1453 = vst.msk [vmem:[%s4 + $0x1e0] sm:$0xff] %vm779, %v1389
  %1454 = vst.msk [vmem:[%s4 + $0x1e8] sm:$0xff] %vm779, %v1390
  %1455 = vst.msk [vmem:[%s4 + $0x1f0] sm:$0xff] %vm779, %v1391
  %1456 = vst.msk [vmem:[%s4 + $0x1f8] sm:$0xff] %vm779, %v1392
  // Predicated region
  $region18: #{encoder_forward.8} parent=0 // pred_check
    _
  $region19: #{encoder_forward.8} parent=0 // pred_check_branch
    %1458 = sbr.rel (0) target = $region21
  $region20: #{encoder_forward.8} parent=0 // pred_region
    _
  $region21: #{encoder_forward.8} parent=0 // pred_fallthru
    _
  // Predicated region
  $region22: #{encoder_forward.8} parent=0 // pred_check
    _
  $region23: #{encoder_forward.8} parent=0 // pred_check_branch
    %1460 = sbr.rel (0) target = $region25
  $region24: #{encoder_forward.8} parent=0 // pred_region
    _
  $region25: #{encoder_forward.8} parent=0 // pred_fallthru
    _

// kernel: encoder_forward.9
$region0: #{encoder_forward.9}
  #allocation0 [shape = 'u32[]', space=smem, size = 0x4, offset = 0x4, fixed_abs, tag = 'smem constant byte address 0x4 - core index']
  #allocation1 [shape = 'u32[72,128]{1,0:T(1,128)}', space=vmem, size = 0x9000, scoped, tag = 'internal scratch']
  %s0 = inlined_call_operand.vmem [shape: f32[128,288], index: 0, kind: input, shape index: {}]
  %s1 = inlined_call_operand.vmem [shape: f32[288,64], index: 1, kind: input, shape index: {}]
  %s2 = inlined_call_operand.vmem [shape: f32[1,64], index: 2, kind: input, shape index: {}]
  %s3 = inlined_call_operand.vmem [shape: f32[1,64], index: 3, kind: input, shape index: {}]
  %s4 = inlined_call_operand.vmem [shape: f32[128,64], index: 4, kind: output, shape index: {}]
  %s5 = sld [smem:[#allocation0]]
  $region26: #{encoder_forward.9} parent=0
    _
  %s7 = ssub.s32 1, %s5
  %s8 = scalar_select 0, %s7, %s5
  // Predicated region
  $region2: #{encoder_forward.9} parent=0 // pred_check
    _
  $region3: #{encoder_forward.9} parent=0 // pred_check_branch
    %10 = sbr.rel (0) target = $region5
  $region4: #{encoder_forward.9} parent=0 // pred_region
    _
  $region5: #{encoder_forward.9} parent=0 // pred_fallthru
    _
  // Predicated region
  $region6: #{encoder_forward.9} parent=0 // pred_check
    _
  $region7: #{encoder_forward.9} parent=0 // pred_check_branch
    %12 = sbr.rel (0) target = $region9
  $region8: #{encoder_forward.9} parent=0 // pred_region
    _
  $region9: #{encoder_forward.9} parent=0 // pred_fallthru
    _
  // Predicated region
  $region10: #{encoder_forward.9} parent=0 // pred_check
    _
  $region11: #{encoder_forward.9} parent=0 // pred_check_branch
    %14 = sbr.rel (0) target = $region13
  $region12: #{encoder_forward.9} parent=0 // pred_region
    _
  $region13: #{encoder_forward.9} parent=0 // pred_fallthru
    _
  // Predicated region
  $region14: #{encoder_forward.9} parent=0 // pred_check
    _
  $region15: #{encoder_forward.9} parent=0 // pred_check_branch
    %16 = sbr.rel (0) target = $region17
  $region16: #{encoder_forward.9} parent=0 // pred_region
    _
  $region17: #{encoder_forward.9} parent=0 // pred_fallthru
    _
  %v17 = vld [vmem:[%s0] sm:$0xff]
  %v18 = vld [vmem:[%s0 + $0x8] sm:$0xff]
  %v19 = vld [vmem:[%s0 + $0x10] sm:$0xff]
  %v20 = vld [vmem:[%s0 + $0x18] sm:$0xff]
  %v21 = vld [vmem:[%s0 + $0x20] sm:$0xff]
  %v22 = vld [vmem:[%s0 + $0x28] sm:$0xff]
  %v23 = vld [vmem:[%s0 + $0x30] sm:$0xff]
  %v24 = vld [vmem:[%s0 + $0x38] sm:$0xff]
  %v25 = vld [vmem:[%s0 + $0x40] sm:$0xff]
  %v26 = vld [vmem:[%s0 + $0x48] sm:$0xff]
  %v27 = vld [vmem:[%s0 + $0x50] sm:$0xff]
  %v28 = vld [vmem:[%s0 + $0x58] sm:$0xff]
  %v29 = vld [vmem:[%s0 + $0x60] sm:$0xff]
  %v30 = vld [vmem:[%s0 + $0x68] sm:$0xff]
  %v31 = vld [vmem:[%s0 + $0x70] sm:$0xff]
  %v32 = vld [vmem:[%s0 + $0x78] sm:$0xff]
  %v33 = vld [vmem:[%s0 + $0x80] sm:$0xff]
  %v34 = vld [vmem:[%s0 + $0x88] sm:$0xff]
  %v35 = vld [vmem:[%s0 + $0x90] sm:$0xff]
  %v36 = vld [vmem:[%s0 + $0x98] sm:$0xff]
  %v37 = vld [vmem:[%s0 + $0xa0] sm:$0xff]
  %v38 = vld [vmem:[%s0 + $0xa8] sm:$0xff]
  %v39 = vld [vmem:[%s0 + $0xb0] sm:$0xff]
  %v40 = vld [vmem:[%s0 + $0xb8] sm:$0xff]
  %v41 = vld [vmem:[%s0 + $0xc0] sm:$0xff]
  %v42 = vld [vmem:[%s0 + $0xc8] sm:$0xff]
  %v43 = vld [vmem:[%s0 + $0xd0] sm:$0xff]
  %v44 = vld [vmem:[%s0 + $0xd8] sm:$0xff]
  %v45 = vld [vmem:[%s0 + $0xe0] sm:$0xff]
  %v46 = vld [vmem:[%s0 + $0xe8] sm:$0xff]
  %v47 = vld [vmem:[%s0 + $0xf0] sm:$0xff]
  %v48 = vld [vmem:[%s0 + $0xf8] sm:$0xff]
  %v49 = vld [vmem:[%s0 + $0x100] sm:$0xff]
  %v50 = vld [vmem:[%s0 + $0x108] sm:$0xff]
  %v51 = vld [vmem:[%s0 + $0x110] sm:$0xff]
  %v52 = vld [vmem:[%s0 + $0x118] sm:$0xff]
  %v53 = vld [vmem:[%s0 + $0x120] sm:$0xff]
  %v54 = vld [vmem:[%s0 + $0x128] sm:$0xff]
  %v55 = vld [vmem:[%s0 + $0x130] sm:$0xff]
  %v56 = vld [vmem:[%s0 + $0x138] sm:$0xff]
  %v57 = vld [vmem:[%s0 + $0x140] sm:$0xff]
  %v58 = vld [vmem:[%s0 + $0x148] sm:$0xff]
  %v59 = vld [vmem:[%s0 + $0x150] sm:$0xff]
  %v60 = vld [vmem:[%s0 + $0x158] sm:$0xff]
  %v61 = vld [vmem:[%s0 + $0x160] sm:$0xff]
  %v62 = vld [vmem:[%s0 + $0x168] sm:$0xff]
  %v63 = vld [vmem:[%s0 + $0x170] sm:$0xff]
  %v64 = vld [vmem:[%s0 + $0x178] sm:$0xff]
  %v65 = vld [vmem:[%s1] sm:$0xff]
  %v66 = vld [vmem:[%s1 + $0x8] sm:$0xff]
  %v67 = vld [vmem:[%s1 + $0x10] sm:$0xff]
  %v68 = vld [vmem:[%s1 + $0x18] sm:$0xff]
  %v69 = vld [vmem:[%s1 + $0x20] sm:$0xff]
  %v70 = vld [vmem:[%s1 + $0x28] sm:$0xff]
  %v71 = vld [vmem:[%s1 + $0x30] sm:$0xff]
  %v72 = vld [vmem:[%s1 + $0x38] sm:$0xff]
  %v73 = vld [vmem:[%s1 + $0x40] sm:$0xff]
  %v74 = vld [vmem:[%s1 + $0x48] sm:$0xff]
  %v75 = vld [vmem:[%s1 + $0x50] sm:$0xff]
  %v76 = vld [vmem:[%s1 + $0x58] sm:$0xff]
  %v77 = vld [vmem:[%s1 + $0x60] sm:$0xff]
  %v78 = vld [vmem:[%s1 + $0x68] sm:$0xff]
  %v79 = vld [vmem:[%s1 + $0x70] sm:$0xff]
  %v80 = vld [vmem:[%s1 + $0x78] sm:$0xff]
  %v81 = vld [vmem:[%s1 + $0x80] sm:$0xff]
  %v82 = vld [vmem:[%s1 + $0x88] sm:$0xff]
  %v83 = vld [vmem:[%s1 + $0x90] sm:$0xff]
  %v84 = vld [vmem:[%s1 + $0x98] sm:$0xff]
  %v85 = vld [vmem:[%s1 + $0xa0] sm:$0xff]
  %v86 = vld [vmem:[%s1 + $0xa8] sm:$0xff]
  %v87 = vld [vmem:[%s1 + $0xb0] sm:$0xff]
  %v88 = vld [vmem:[%s1 + $0xb8] sm:$0xff]
  %v89 = vld [vmem:[%s1 + $0xc0] sm:$0xff]
  %v90 = vld [vmem:[%s1 + $0xc8] sm:$0xff]
  %v91 = vld [vmem:[%s1 + $0xd0] sm:$0xff]
  %v92 = vld [vmem:[%s1 + $0xd8] sm:$0xff]
  %v93 = vld [vmem:[%s1 + $0xe0] sm:$0xff]
  %v94 = vld [vmem:[%s1 + $0xe8] sm:$0xff]
  %v95 = vld [vmem:[%s1 + $0xf0] sm:$0xff]
  %v96 = vld [vmem:[%s1 + $0xf8] sm:$0xff]
  %v97 = vld [vmem:[%s1 + $0x100] sm:$0xff]
  %v98 = vld [vmem:[%s1 + $0x108] sm:$0xff]
  %v99 = vld [vmem:[%s1 + $0x110] sm:$0xff]
  %v100 = vld [vmem:[%s1 + $0x118] sm:$0xff]
  %vm101 = vcmask 261120
  %v103 = vsel %vm101, %v19, 0
  %v106 = vsel %vm101, %v22, 0
  %v109 = vsel %vm101, %v25, 0
  %v112 = vsel %vm101, %v28, 0
  %v115 = vsel %vm101, %v31, 0
  %v118 = vsel %vm101, %v34, 0
  %v121 = vsel %vm101, %v37, 0
  %v124 = vsel %vm101, %v40, 0
  %v127 = vsel %vm101, %v43, 0
  %v130 = vsel %vm101, %v46, 0
  %v133 = vsel %vm101, %v49, 0
  %v136 = vsel %vm101, %v52, 0
  %v139 = vsel %vm101, %v55, 0
  %v142 = vsel %vm101, %v58, 0
  %v145 = vsel %vm101, %v61, 0
  %v148 = vsel %vm101, %v64, 0
  %150 = vmatpush.msra.mxu0 %v80
  %151 = vmatpush.msra.mxu0 %v79
  %152 = vmatpush.msra.mxu0 %v78
  %153 = vmatpush.msra.mxu0 %v77
  %154 = vmatpush.msra.mxu0 %v76
  %155 = vmatpush.msra.mxu0 %v75
  %156 = vmatpush.msra.mxu0 %v74
  %157 = vmatpush.msra.mxu0 %v73
  %158 = vmatpush.msra.mxu0 %v72
  %159 = vmatpush.msra.mxu0 %v71
  %160 = vmatpush.msra.mxu0 %v70
  %161 = vmatpush.msra.mxu0 %v69
  %162 = vmatpush.msra.mxu0 %v68
  %163 = vmatpush.msra.mxu0 %v67
  %164 = vmatpush.msra.mxu0 %v66
  %165 = vmatpush.msra.mxu0 %v65
  %166 = vmatmul.f32.gmra.mxu0 %v17
  %v167 = vpop.f32.mrf.mxu0
  %v168 = vadd.f32 0.0, %v167
  %169 = vmatmul.f32.gmra.mxu0 %v20
  %v170 = vpop.f32.mrf.mxu0
  %v171 = vadd.f32 0.0, %v170
  %172 = vmatmul.f32.gmra.mxu0 %v23
  %v173 = vpop.f32.mrf.mxu0
  %v174 = vadd.f32 0.0, %v173
  %175 = vmatmul.f32.gmra.mxu0 %v26
  %v176 = vpop.f32.mrf.mxu0
  %v177 = vadd.f32 0.0, %v176
  %178 = vmatmul.f32.gmra.mxu0 %v29
  %v179 = vpop.f32.mrf.mxu0
  %v180 = vadd.f32 0.0, %v179
  %181 = vmatmul.f32.gmra.mxu0 %v32
  %v182 = vpop.f32.mrf.mxu0
  %v183 = vadd.f32 0.0, %v182
  %184 = vmatmul.f32.gmra.mxu0 %v35
  %v185 = vpop.f32.mrf.mxu0
  %v186 = vadd.f32 0.0, %v185
  %187 = vmatmul.f32.gmra.mxu0 %v38
  %v188 = vpop.f32.mrf.mxu0
  %v189 = vadd.f32 0.0, %v188
  %190 = vmatmul.f32.gmra.mxu0 %v41
  %v191 = vpop.f32.mrf.mxu0
  %v192 = vadd.f32 0.0, %v191
  %193 = vmatmul.f32.gmra.mxu0 %v44
  %v194 = vpop.f32.mrf.mxu0
  %v195 = vadd.f32 0.0, %v194
  %196 = vmatmul.f32.gmra.mxu0 %v47
  %v197 = vpop.f32.mrf.mxu0
  %v198 = vadd.f32 0.0, %v197
  %199 = vmatmul.f32.gmra.mxu0 %v50
  %v200 = vpop.f32.mrf.mxu0
  %v201 = vadd.f32 0.0, %v200
  %202 = vmatmul.f32.gmra.mxu0 %v53
  %v203 = vpop.f32.mrf.mxu0
  %v204 = vadd.f32 0.0, %v203
  %205 = vmatmul.f32.gmra.mxu0 %v56
  %v206 = vpop.f32.mrf.mxu0
  %v207 = vadd.f32 0.0, %v206
  %208 = vmatmul.f32.gmra.mxu0 %v59
  %v209 = vpop.f32.mrf.mxu0
  %v210 = vadd.f32 0.0, %v209
  %211 = vmatmul.f32.gmra.mxu0 %v62
  %v212 = vpop.f32.mrf.mxu0
  %v213 = vadd.f32 0.0, %v212
  %214 = vdwg.mxu0
  %215 = vmatpush.msra.mxu0 %v96
  %216 = vmatpush.msra.mxu0 %v95
  %217 = vmatpush.msra.mxu0 %v94
  %218 = vmatpush.msra.mxu0 %v93
  %219 = vmatpush.msra.mxu0 %v92
  %220 = vmatpush.msra.mxu0 %v91
  %221 = vmatpush.msra.mxu0 %v90
  %222 = vmatpush.msra.mxu0 %v89
  %223 = vmatpush.msra.mxu0 %v88
  %224 = vmatpush.msra.mxu0 %v87
  %225 = vmatpush.msra.mxu0 %v86
  %226 = vmatpush.msra.mxu0 %v85
  %227 = vmatpush.msra.mxu0 %v84
  %228 = vmatpush.msra.mxu0 %v83
  %229 = vmatpush.msra.mxu0 %v82
  %230 = vmatpush.msra.mxu0 %v81
  %231 = vmatmul.f32.gmra.mxu0 %v18
  %v232 = vpop.f32.mrf.mxu0
  %v233 = vadd.f32 %v168, %v232
  %234 = vmatmul.f32.gmra.mxu0 %v21
  %v235 = vpop.f32.mrf.mxu0
  %v236 = vadd.f32 %v171, %v235
  %237 = vmatmul.f32.gmra.mxu0 %v24
  %v238 = vpop.f32.mrf.mxu0
  %v239 = vadd.f32 %v174, %v238
  %240 = vmatmul.f32.gmra.mxu0 %v27
  %v241 = vpop.f32.mrf.mxu0
  %v242 = vadd.f32 %v177, %v241
  %243 = vmatmul.f32.gmra.mxu0 %v30
  %v244 = vpop.f32.mrf.mxu0
  %v245 = vadd.f32 %v180, %v244
  %246 = vmatmul.f32.gmra.mxu0 %v33
  %v247 = vpop.f32.mrf.mxu0
  %v248 = vadd.f32 %v183, %v247
  %249 = vmatmul.f32.gmra.mxu0 %v36
  %v250 = vpop.f32.mrf.mxu0
  %v251 = vadd.f32 %v186, %v250
  %252 = vmatmul.f32.gmra.mxu0 %v39
  %v253 = vpop.f32.mrf.mxu0
  %v254 = vadd.f32 %v189, %v253
  %255 = vmatmul.f32.gmra.mxu0 %v42
  %v256 = vpop.f32.mrf.mxu0
  %v257 = vadd.f32 %v192, %v256
  %258 = vmatmul.f32.gmra.mxu0 %v45
  %v259 = vpop.f32.mrf.mxu0
  %v260 = vadd.f32 %v195, %v259
  %261 = vmatmul.f32.gmra.mxu0 %v48
  %v262 = vpop.f32.mrf.mxu0
  %v263 = vadd.f32 %v198, %v262
  %264 = vmatmul.f32.gmra.mxu0 %v51
  %v265 = vpop.f32.mrf.mxu0
  %v266 = vadd.f32 %v201, %v265
  %267 = vmatmul.f32.gmra.mxu0 %v54
  %v268 = vpop.f32.mrf.mxu0
  %v269 = vadd.f32 %v204, %v268
  %270 = vmatmul.f32.gmra.mxu0 %v57
  %v271 = vpop.f32.mrf.mxu0
  %v272 = vadd.f32 %v207, %v271
  %273 = vmatmul.f32.gmra.mxu0 %v60
  %v274 = vpop.f32.mrf.mxu0
  %v275 = vadd.f32 %v210, %v274
  %276 = vmatmul.f32.gmra.mxu0 %v63
  %v277 = vpop.f32.mrf.mxu0
  %v278 = vadd.f32 %v213, %v277
  %279 = vdwg.mxu0
  %280 = vmatpush.msra.mxu0 0.0
  %281 = vmatpush.msra.mxu0 0.0
  %282 = vmatpush.msra.mxu0 0.0
  %283 = vmatpush.msra.mxu0 0.0
  %284 = vmatpush.msra.mxu0 0.0
  %285 = vmatpush.msra.mxu0 0.0
  %286 = vmatpush.msra.mxu0 0.0
  %287 = vmatpush.msra.mxu0 0.0
  %288 = vmatpush.msra.mxu0 0.0
  %289 = vmatpush.msra.mxu0 0.0
  %290 = vmatpush.msra.mxu0 0.0
  %291 = vmatpush.msra.mxu0 0.0
  %292 = vmatpush.msra.mxu0 %v100
  %293 = vmatpush.msra.mxu0 %v99
  %294 = vmatpush.msra.mxu0 %v98
  %295 = vmatpush.msra.mxu0 %v97
  %296 = vmatmul.f32.gmra.mxu0 %v103
  %v297 = vpop.f32.mrf.mxu0
  %v298 = vadd.f32 %v233, %v297
  %299 = vmatmul.f32.gmra.mxu0 %v106
  %v300 = vpop.f32.mrf.mxu0
  %v301 = vadd.f32 %v236, %v300
  %302 = vmatmul.f32.gmra.mxu0 %v109
  %v303 = vpop.f32.mrf.mxu0
  %v304 = vadd.f32 %v239, %v303
  %305 = vmatmul.f32.gmra.mxu0 %v112
  %v306 = vpop.f32.mrf.mxu0
  %v307 = vadd.f32 %v242, %v306
  %308 = vmatmul.f32.gmra.mxu0 %v115
  %v309 = vpop.f32.mrf.mxu0
  %v310 = vadd.f32 %v245, %v309
  %311 = vmatmul.f32.gmra.mxu0 %v118
  %v312 = vpop.f32.mrf.mxu0
  %v313 = vadd.f32 %v248, %v312
  %314 = vmatmul.f32.gmra.mxu0 %v121
  %v315 = vpop.f32.mrf.mxu0
  %v316 = vadd.f32 %v251, %v315
  %317 = vmatmul.f32.gmra.mxu0 %v124
  %v318 = vpop.f32.mrf.mxu0
  %v319 = vadd.f32 %v254, %v318
  %320 = vmatmul.f32.gmra.mxu0 %v127
  %v321 = vpop.f32.mrf.mxu0
  %v322 = vadd.f32 %v257, %v321
  %323 = vmatmul.f32.gmra.mxu0 %v130
  %v324 = vpop.f32.mrf.mxu0
  %v325 = vadd.f32 %v260, %v324
  %326 = vmatmul.f32.gmra.mxu0 %v133
  %v327 = vpop.f32.mrf.mxu0
  %v328 = vadd.f32 %v263, %v327
  %329 = vmatmul.f32.gmra.mxu0 %v136
  %v330 = vpop.f32.mrf.mxu0
  %v331 = vadd.f32 %v266, %v330
  %332 = vmatmul.f32.gmra.mxu0 %v139
  %v333 = vpop.f32.mrf.mxu0
  %v334 = vadd.f32 %v269, %v333
  %335 = vmatmul.f32.gmra.mxu0 %v142
  %v336 = vpop.f32.mrf.mxu0
  %v337 = vadd.f32 %v272, %v336
  %338 = vmatmul.f32.gmra.mxu0 %v145
  %v339 = vpop.f32.mrf.mxu0
  %v340 = vadd.f32 %v275, %v339
  %341 = vmatmul.f32.gmra.mxu0 %v148
  %v342 = vpop.f32.mrf.mxu0
  %v343 = vadd.f32 %v278, %v342
  %344 = vdwg.mxu0
  %vm345 = vcmask 523264
  %v346 = vsel %vm345, %v298, 0.0
  %v347 = vsel %vm345, %v301, 0.0
  %v348 = vadd.f32 %v346, %v347
  %v349 = vsel %vm345, %v304, 0.0
  %v350 = vadd.f32 %v348, %v349
  %v351 = vsel %vm345, %v307, 0.0
  %v352 = vadd.f32 %v350, %v351
  %v353 = vsel %vm345, %v310, 0.0
  %v354 = vadd.f32 %v352, %v353
  %v355 = vsel %vm345, %v313, 0.0
  %v356 = vadd.f32 %v354, %v355
  %v357 = vsel %vm345, %v316, 0.0
  %v358 = vadd.f32 %v356, %v357
  %v359 = vsel %vm345, %v319, 0.0
  %v360 = vadd.f32 %v358, %v359
  %v361 = vsel %vm345, %v322, 0.0
  %v362 = vadd.f32 %v360, %v361
  %v363 = vsel %vm345, %v325, 0.0
  %v364 = vadd.f32 %v362, %v363
  %v365 = vsel %vm345, %v328, 0.0
  %v366 = vadd.f32 %v364, %v365
  %v367 = vsel %vm345, %v331, 0.0
  %v368 = vadd.f32 %v366, %v367
  %v369 = vsel %vm345, %v334, 0.0
  %v370 = vadd.f32 %v368, %v369
  %v371 = vsel %vm345, %v337, 0.0
  %v372 = vadd.f32 %v370, %v371
  %v373 = vsel %vm345, %v340, 0.0
  %v374 = vadd.f32 %v372, %v373
  %v375 = vsel %vm345, %v343, 0.0
  %v376 = vadd.f32 %v374, %v375
  %v377 = vrot.slane %v376, 4
  %v378 = vadd.f32 %v376, %v377
  %v379 = vrot.slane %v378, 2
  %v380 = vadd.f32 %v378, %v379
  %v381 = vrot.slane %v380, 1
  %v382 = vadd.f32 %v380, %v381
  %v383 = vrcp.pop 128.0
  %v384 = vmul.f32 128.0, %v383
  %v385 = vsub.f32 1.0, %v384
  %v386 = vmul.f32 %v383, %v385
  %v387 = vadd.f32 %v383, %v386
  %vm388 = vweird.f32 %v383
  %v389 = vsel %vm388, %v383, %v387
  %v390 = vmul.f32 %v382, %v389
  %v391 = vsub.f32 %v298, %v390
  %v392 = vsub.f32 %v301, %v390
  %v393 = vsub.f32 %v304, %v390
  %v394 = vsub.f32 %v307, %v390
  %v395 = vsub.f32 %v310, %v390
  %v396 = vsub.f32 %v313, %v390
  %v397 = vsub.f32 %v316, %v390
  %v398 = vsub.f32 %v319, %v390
  %v399 = vsub.f32 %v322, %v390
  %v400 = vsub.f32 %v325, %v390
  %v401 = vsub.f32 %v328, %v390
  %v402 = vsub.f32 %v331, %v390
  %v403 = vsub.f32 %v334, %v390
  %v404 = vsub.f32 %v337, %v390
  %v405 = vsub.f32 %v340, %v390
  %v406 = vsub.f32 %v343, %v390
  %v407 = vmul.f32 %v391, %v391
  %v408 = vmul.f32 %v392, %v392
  %v409 = vmul.f32 %v393, %v393
  %v410 = vmul.f32 %v394, %v394
  %v411 = vmul.f32 %v395, %v395
  %v412 = vmul.f32 %v396, %v396
  %v413 = vmul.f32 %v397, %v397
  %v414 = vmul.f32 %v398, %v398
  %v415 = vmul.f32 %v399, %v399
  %v416 = vmul.f32 %v400, %v400
  %v417 = vmul.f32 %v401, %v401
  %v418 = vmul.f32 %v402, %v402
  %v419 = vmul.f32 %v403, %v403
  %v420 = vmul.f32 %v404, %v404
  %v421 = vmul.f32 %v405, %v405
  %v422 = vmul.f32 %v406, %v406
  %v423 = vsel %vm345, %v407, 0.0
  %v424 = vsel %vm345, %v408, 0.0
  %v425 = vadd.f32 %v423, %v424
  %v426 = vsel %vm345, %v409, 0.0
  %v427 = vadd.f32 %v425, %v426
  %v428 = vsel %vm345, %v410, 0.0
  %v429 = vadd.f32 %v427, %v428
  %v430 = vsel %vm345, %v411, 0.0
  %v431 = vadd.f32 %v429, %v430
  %v432 = vsel %vm345, %v412, 0.0
  %v433 = vadd.f32 %v431, %v432
  %v434 = vsel %vm345, %v413, 0.0
  %v435 = vadd.f32 %v433, %v434
  %v436 = vsel %vm345, %v414, 0.0
  %v437 = vadd.f32 %v435, %v436
  %v438 = vsel %vm345, %v415, 0.0
  %v439 = vadd.f32 %v437, %v438
  %v440 = vsel %vm345, %v416, 0.0
  %v441 = vadd.f32 %v439, %v440
  %v442 = vsel %vm345, %v417, 0.0
  %v443 = vadd.f32 %v441, %v442
  %v444 = vsel %vm345, %v418, 0.0
  %v445 = vadd.f32 %v443, %v444
  %v446 = vsel %vm345, %v419, 0.0
  %v447 = vadd.f32 %v445, %v446
  %v448 = vsel %vm345, %v420, 0.0
  %v449 = vadd.f32 %v447, %v448
  %v450 = vsel %vm345, %v421, 0.0
  %v451 = vadd.f32 %v449, %v450
  %v452 = vsel %vm345, %v422, 0.0
  %v453 = vadd.f32 %v451, %v452
  %v454 = vrot.slane %v453, 4
  %v455 = vadd.f32 %v453, %v454
  %v456 = vrot.slane %v455, 2
  %v457 = vadd.f32 %v455, %v456
  %v458 = vrot.slane %v457, 1
  %v459 = vadd.f32 %v457, %v458
  %v460 = vmul.f32 %v459, %v389
  %v461 = vadd.f32 %v460, 1e-05
  %v462 = vrsqrt.pop %v461
  %v463 = vmul.f32 %v462, %v461
  %v464 = vmul.f32 %v463, %v462
  %v465 = vmul.f32 0.5, %v464
  %v466 = vsub.f32 1.5, %v465
  %v467 = vmul.f32 %v462, %v466
  %vm468 = vweird.f32 %v461
  %vm469 = vweird.f32 %v462
  %vm470 = vmor %vm468, %vm469
  %v471 = vsel %vm470, %v462, %v467
  %v472 = vld [vmem:[%s2] sm:$0x1]
  %v473 = vmul.f32 %v471, %v472
  %v474 = vperm.slane %v473, 0
  %v475 = vmul.f32 %v391, %v474
  %v476 = vmul.f32 %v392, %v474
  %v477 = vmul.f32 %v393, %v474
  %v478 = vmul.f32 %v394, %v474
  %v479 = vmul.f32 %v395, %v474
  %v480 = vmul.f32 %v396, %v474
  %v481 = vmul.f32 %v397, %v474
  %v482 = vmul.f32 %v398, %v474
  %v483 = vmul.f32 %v399, %v474
  %v484 = vmul.f32 %v400, %v474
  %v485 = vmul.f32 %v401, %v474
  %v486 = vmul.f32 %v402, %v474
  %v487 = vmul.f32 %v403, %v474
  %v488 = vmul.f32 %v404, %v474
  %v489 = vmul.f32 %v405, %v474
  %v490 = vmul.f32 %v406, %v474
  %v491 = vld [vmem:[%s3] sm:$0x1]
  %v493 = vperm.slane %v491, 0
  %v495 = vadd.f32 %v475, %v493
  %v496 = vadd.f32 %v476, %v493
  %v497 = vadd.f32 %v477, %v493
  %v498 = vadd.f32 %v478, %v493
  %v499 = vadd.f32 %v479, %v493
  %v500 = vadd.f32 %v480, %v493
  %v501 = vadd.f32 %v481, %v493
  %v502 = vadd.f32 %v482, %v493
  %v503 = vadd.f32 %v483, %v493
  %v504 = vadd.f32 %v484, %v493
  %v505 = vadd.f32 %v485, %v493
  %v506 = vadd.f32 %v486, %v493
  %v507 = vadd.f32 %v487, %v493
  %v508 = vadd.f32 %v488, %v493
  %v509 = vadd.f32 %v489, %v493
  %v510 = vadd.f32 %v490, %v493
  %v511 = vmax.f32 %v495, 0.0
  %v512 = vmax.f32 %v496, 0.0
  %v513 = vmax.f32 %v497, 0.0
  %v514 = vmax.f32 %v498, 0.0
  %v515 = vmax.f32 %v499, 0.0
  %v516 = vmax.f32 %v500, 0.0
  %v517 = vmax.f32 %v501, 0.0
  %v518 = vmax.f32 %v502, 0.0
  %v519 = vmax.f32 %v503, 0.0
  %v520 = vmax.f32 %v504, 0.0
  %v521 = vmax.f32 %v505, 0.0
  %v522 = vmax.f32 %v506, 0.0
  %v523 = vmax.f32 %v507, 0.0
  %v524 = vmax.f32 %v508, 0.0
  %v525 = vmax.f32 %v509, 0.0
  %v526 = vmax.f32 %v510, 0.0
  %527 = vst.msk [vmem:[%s4] sm:$0xff] %vm345, %v511
  %528 = vst.msk [vmem:[%s4 + $0x8] sm:$0xff] %vm345, %v512
  %529 = vst.msk [vmem:[%s4 + $0x10] sm:$0xff] %vm345, %v513
  %530 = vst.msk [vmem:[%s4 + $0x18] sm:$0xff] %vm345, %v514
  %531 = vst.msk [vmem:[%s4 + $0x20] sm:$0xff] %vm345, %v515
  %532 = vst.msk [vmem:[%s4 + $0x28] sm:$0xff] %vm345, %v516
  %533 = vst.msk [vmem:[%s4 + $0x30] sm:$0xff] %vm345, %v517
  %534 = vst.msk [vmem:[%s4 + $0x38] sm:$0xff] %vm345, %v518
  %535 = vst.msk [vmem:[%s4 + $0x40] sm:$0xff] %vm345, %v519
  %536 = vst.msk [vmem:[%s4 + $0x48] sm:$0xff] %vm345, %v520
  %537 = vst.msk [vmem:[%s4 + $0x50] sm:$0xff] %vm345, %v521
  %538 = vst.msk [vmem:[%s4 + $0x58] sm:$0xff] %vm345, %v522
  %539 = vst.msk [vmem:[%s4 + $0x60] sm:$0xff] %vm345, %v523
  %540 = vst.msk [vmem:[%s4 + $0x68] sm:$0xff] %vm345, %v524
  %541 = vst.msk [vmem:[%s4 + $0x70] sm:$0xff] %vm345, %v525
  %542 = vst.msk [vmem:[%s4 + $0x78] sm:$0xff] %vm345, %v526
  // Predicated region
  $region18: #{encoder_forward.9} parent=0 // pred_check
    _
  $region19: #{encoder_forward.9} parent=0 // pred_check_branch
    %544 = sbr.rel (0) target = $region21
  $region20: #{encoder_forward.9} parent=0 // pred_region
    _
  $region21: #{encoder_forward.9} parent=0 // pred_fallthru
    _
  // Predicated region
  $region22: #{encoder_forward.9} parent=0 // pred_check
    _
  $region23: #{encoder_forward.9} parent=0 // pred_check_branch
    %546 = sbr.rel (0) target = $region25
  $region24: #{encoder_forward.9} parent=0 // pred_region
    _
  $region25: #{encoder_forward.9} parent=0 // pred_fallthru
    _

// kernel: encoder_forward.10
$region0: #{encoder_forward.10}
  #allocation0 [shape = 'u32[]', space=smem, size = 0x4, offset = 0x4, fixed_abs, tag = 'smem constant byte address 0x4 - core index']
  #allocation1 [shape = 'u32[72,128]{1,0:T(1,128)}', space=vmem, size = 0x9000, scoped, tag = 'internal scratch']
  %s0 = inlined_call_operand.vmem [shape: f32[32,576], index: 0, kind: input, shape index: {}]
  %s1 = inlined_call_operand.vmem [shape: f32[576,128], index: 1, kind: input, shape index: {}]
  %s2 = inlined_call_operand.vmem [shape: f32[1,128], index: 2, kind: input, shape index: {}]
  %s3 = inlined_call_operand.vmem [shape: f32[1,128], index: 3, kind: input, shape index: {}]
  %s4 = inlined_call_operand.vmem [shape: f32[32,128], index: 4, kind: output, shape index: {}]
  %s5 = sld [smem:[#allocation0]]
  $region26: #{encoder_forward.10} parent=0
    _
  %s7 = ssub.s32 1, %s5
  %s8 = scalar_select 0, %s7, %s5
  // Predicated region
  $region2: #{encoder_forward.10} parent=0 // pred_check
    _
  $region3: #{encoder_forward.10} parent=0 // pred_check_branch
    %10 = sbr.rel (0) target = $region5
  $region4: #{encoder_forward.10} parent=0 // pred_region
    _
  $region5: #{encoder_forward.10} parent=0 // pred_fallthru
    _
  // Predicated region
  $region6: #{encoder_forward.10} parent=0 // pred_check
    _
  $region7: #{encoder_forward.10} parent=0 // pred_check_branch
    %12 = sbr.rel (0) target = $region9
  $region8: #{encoder_forward.10} parent=0 // pred_region
    _
  $region9: #{encoder_forward.10} parent=0 // pred_fallthru
    _
  // Predicated region
  $region10: #{encoder_forward.10} parent=0 // pred_check
    _
  $region11: #{encoder_forward.10} parent=0 // pred_check_branch
    %14 = sbr.rel (0) target = $region13
  $region12: #{encoder_forward.10} parent=0 // pred_region
    _
  $region13: #{encoder_forward.10} parent=0 // pred_fallthru
    _
  // Predicated region
  $region14: #{encoder_forward.10} parent=0 // pred_check
    _
  $region15: #{encoder_forward.10} parent=0 // pred_check_branch
    %16 = sbr.rel (0) target = $region17
  $region16: #{encoder_forward.10} parent=0 // pred_region
    _
  $region17: #{encoder_forward.10} parent=0 // pred_fallthru
    _
  %v17 = vld [vmem:[%s0] sm:$0xff]
  %v18 = vld [vmem:[%s0 + $0x8] sm:$0xff]
  %v19 = vld [vmem:[%s0 + $0x10] sm:$0xff]
  %v20 = vld [vmem:[%s0 + $0x18] sm:$0xff]
  %v21 = vld [vmem:[%s0 + $0x20] sm:$0xff]
  %v22 = vld [vmem:[%s0 + $0x28] sm:$0xff]
  %v23 = vld [vmem:[%s0 + $0x30] sm:$0xff]
  %v24 = vld [vmem:[%s0 + $0x38] sm:$0xff]
  %v25 = vld [vmem:[%s0 + $0x40] sm:$0xff]
  %v26 = vld [vmem:[%s0 + $0x48] sm:$0xff]
  %v27 = vld [vmem:[%s0 + $0x50] sm:$0xff]
  %v28 = vld [vmem:[%s0 + $0x58] sm:$0xff]
  %v29 = vld [vmem:[%s0 + $0x60] sm:$0xff]
  %v30 = vld [vmem:[%s0 + $0x68] sm:$0xff]
  %v31 = vld [vmem:[%s0 + $0x70] sm:$0xff]
  %v32 = vld [vmem:[%s0 + $0x78] sm:$0xff]
  %v33 = vld [vmem:[%s0 + $0x80] sm:$0xff]
  %v34 = vld [vmem:[%s0 + $0x88] sm:$0xff]
  %v35 = vld [vmem:[%s0 + $0x90] sm:$0xff]
  %v36 = vld [vmem:[%s0 + $0x98] sm:$0xff]
  %v37 = vld [vmem:[%s1] sm:$0xff]
  %v38 = vld [vmem:[%s1 + $0x8] sm:$0xff]
  %v39 = vld [vmem:[%s1 + $0x10] sm:$0xff]
  %v40 = vld [vmem:[%s1 + $0x18] sm:$0xff]
  %v41 = vld [vmem:[%s1 + $0x20] sm:$0xff]
  %v42 = vld [vmem:[%s1 + $0x28] sm:$0xff]
  %v43 = vld [vmem:[%s1 + $0x30] sm:$0xff]
  %v44 = vld [vmem:[%s1 + $0x38] sm:$0xff]
  %v45 = vld [vmem:[%s1 + $0x40] sm:$0xff]
  %v46 = vld [vmem:[%s1 + $0x48] sm:$0xff]
  %v47 = vld [vmem:[%s1 + $0x50] sm:$0xff]
  %v48 = vld [vmem:[%s1 + $0x58] sm:$0xff]
  %v49 = vld [vmem:[%s1 + $0x60] sm:$0xff]
  %v50 = vld [vmem:[%s1 + $0x68] sm:$0xff]
  %v51 = vld [vmem:[%s1 + $0x70] sm:$0xff]
  %v52 = vld [vmem:[%s1 + $0x78] sm:$0xff]
  %v53 = vld [vmem:[%s1 + $0x80] sm:$0xff]
  %v54 = vld [vmem:[%s1 + $0x88] sm:$0xff]
  %v55 = vld [vmem:[%s1 + $0x90] sm:$0xff]
  %v56 = vld [vmem:[%s1 + $0x98] sm:$0xff]
  %v57 = vld [vmem:[%s1 + $0xa0] sm:$0xff]
  %v58 = vld [vmem:[%s1 + $0xa8] sm:$0xff]
  %v59 = vld [vmem:[%s1 + $0xb0] sm:$0xff]
  %v60 = vld [vmem:[%s1 + $0xb8] sm:$0xff]
  %v61 = vld [vmem:[%s1 + $0xc0] sm:$0xff]
  %v62 = vld [vmem:[%s1 + $0xc8] sm:$0xff]
  %v63 = vld [vmem:[%s1 + $0xd0] sm:$0xff]
  %v64 = vld [vmem:[%s1 + $0xd8] sm:$0xff]
  %v65 = vld [vmem:[%s1 + $0xe0] sm:$0xff]
  %v66 = vld [vmem:[%s1 + $0xe8] sm:$0xff]
  %v67 = vld [vmem:[%s1 + $0xf0] sm:$0xff]
  %v68 = vld [vmem:[%s1 + $0xf8] sm:$0xff]
  %v69 = vld [vmem:[%s1 + $0x100] sm:$0xff]
  %v70 = vld [vmem:[%s1 + $0x108] sm:$0xff]
  %v71 = vld [vmem:[%s1 + $0x110] sm:$0xff]
  %v72 = vld [vmem:[%s1 + $0x118] sm:$0xff]
  %v73 = vld [vmem:[%s1 + $0x120] sm:$0xff]
  %v74 = vld [vmem:[%s1 + $0x128] sm:$0xff]
  %v75 = vld [vmem:[%s1 + $0x130] sm:$0xff]
  %v76 = vld [vmem:[%s1 + $0x138] sm:$0xff]
  %v77 = vld [vmem:[%s1 + $0x140] sm:$0xff]
  %v78 = vld [vmem:[%s1 + $0x148] sm:$0xff]
  %v79 = vld [vmem:[%s1 + $0x150] sm:$0xff]
  %v80 = vld [vmem:[%s1 + $0x158] sm:$0xff]
  %v81 = vld [vmem:[%s1 + $0x160] sm:$0xff]
  %v82 = vld [vmem:[%s1 + $0x168] sm:$0xff]
  %v83 = vld [vmem:[%s1 + $0x170] sm:$0xff]
  %v84 = vld [vmem:[%s1 + $0x178] sm:$0xff]
  %v85 = vld [vmem:[%s1 + $0x180] sm:$0xff]
  %v86 = vld [vmem:[%s1 + $0x188] sm:$0xff]
  %v87 = vld [vmem:[%s1 + $0x190] sm:$0xff]
  %v88 = vld [vmem:[%s1 + $0x198] sm:$0xff]
  %v89 = vld [vmem:[%s1 + $0x1a0] sm:$0xff]
  %v90 = vld [vmem:[%s1 + $0x1a8] sm:$0xff]
  %v91 = vld [vmem:[%s1 + $0x1b0] sm:$0xff]
  %v92 = vld [vmem:[%s1 + $0x1b8] sm:$0xff]
  %v93 = vld [vmem:[%s1 + $0x1c0] sm:$0xff]
  %v94 = vld [vmem:[%s1 + $0x1c8] sm:$0xff]
  %v95 = vld [vmem:[%s1 + $0x1d0] sm:$0xff]
  %v96 = vld [vmem:[%s1 + $0x1d8] sm:$0xff]
  %v97 = vld [vmem:[%s1 + $0x1e0] sm:$0xff]
  %v98 = vld [vmem:[%s1 + $0x1e8] sm:$0xff]
  %v99 = vld [vmem:[%s1 + $0x1f0] sm:$0xff]
  %v100 = vld [vmem:[%s1 + $0x1f8] sm:$0xff]
  %v101 = vld [vmem:[%s1 + $0x200] sm:$0xff]
  %v102 = vld [vmem:[%s1 + $0x208] sm:$0xff]
  %v103 = vld [vmem:[%s1 + $0x210] sm:$0xff]
  %v104 = vld [vmem:[%s1 + $0x218] sm:$0xff]
  %v105 = vld [vmem:[%s1 + $0x220] sm:$0xff]
  %v106 = vld [vmem:[%s1 + $0x228] sm:$0xff]
  %v107 = vld [vmem:[%s1 + $0x230] sm:$0xff]
  %v108 = vld [vmem:[%s1 + $0x238] sm:$0xff]
  %vm109 = vcmask 523264
  %v111 = vsel %vm109, %v21, 0
  %v114 = vsel %vm109, %v26, 0
  %v117 = vsel %vm109, %v31, 0
  %v120 = vsel %vm109, %v36, 0
  %122 = vmatpush.msra.mxu0 %v52
  %123 = vmatpush.msra.mxu0 %v51
  %124 = vmatpush.msra.mxu0 %v50
  %125 = vmatpush.msra.mxu0 %v49
  %126 = vmatpush.msra.mxu0 %v48
  %127 = vmatpush.msra.mxu0 %v47
  %128 = vmatpush.msra.mxu0 %v46
  %129 = vmatpush.msra.mxu0 %v45
  %130 = vmatpush.msra.mxu0 %v44
  %131 = vmatpush.msra.mxu0 %v43
  %132 = vmatpush.msra.mxu0 %v42
  %133 = vmatpush.msra.mxu0 %v41
  %134 = vmatpush.msra.mxu0 %v40
  %135 = vmatpush.msra.mxu0 %v39
  %136 = vmatpush.msra.mxu0 %v38
  %137 = vmatpush.msra.mxu0 %v37
  %138 = vmatmul.f32.gmra.mxu0 %v17
  %v139 = vpop.f32.mrf.mxu0
  %v140 = vadd.f32 0.0, %v139
  %141 = vmatmul.f32.gmra.mxu0 %v22
  %v142 = vpop.f32.mrf.mxu0
  %v143 = vadd.f32 0.0, %v142
  %144 = vmatmul.f32.gmra.mxu0 %v27
  %v145 = vpop.f32.mrf.mxu0
  %v146 = vadd.f32 0.0, %v145
  %147 = vmatmul.f32.gmra.mxu0 %v32
  %v148 = vpop.f32.mrf.mxu0
  %v149 = vadd.f32 0.0, %v148
  %150 = vdwg.mxu0
  %151 = vmatpush.msra.mxu0 %v68
  %152 = vmatpush.msra.mxu0 %v67
  %153 = vmatpush.msra.mxu0 %v66
  %154 = vmatpush.msra.mxu0 %v65
  %155 = vmatpush.msra.mxu0 %v64
  %156 = vmatpush.msra.mxu0 %v63
  %157 = vmatpush.msra.mxu0 %v62
  %158 = vmatpush.msra.mxu0 %v61
  %159 = vmatpush.msra.mxu0 %v60
  %160 = vmatpush.msra.mxu0 %v59
  %161 = vmatpush.msra.mxu0 %v58
  %162 = vmatpush.msra.mxu0 %v57
  %163 = vmatpush.msra.mxu0 %v56
  %164 = vmatpush.msra.mxu0 %v55
  %165 = vmatpush.msra.mxu0 %v54
  %166 = vmatpush.msra.mxu0 %v53
  %167 = vmatmul.f32.gmra.mxu0 %v18
  %v168 = vpop.f32.mrf.mxu0
  %v169 = vadd.f32 %v140, %v168
  %170 = vmatmul.f32.gmra.mxu0 %v23
  %v171 = vpop.f32.mrf.mxu0
  %v172 = vadd.f32 %v143, %v171
  %173 = vmatmul.f32.gmra.mxu0 %v28
  %v174 = vpop.f32.mrf.mxu0
  %v175 = vadd.f32 %v146, %v174
  %176 = vmatmul.f32.gmra.mxu0 %v33
  %v177 = vpop.f32.mrf.mxu0
  %v178 = vadd.f32 %v149, %v177
  %179 = vdwg.mxu0
  %180 = vmatpush.msra.mxu0 %v84
  %181 = vmatpush.msra.mxu0 %v83
  %182 = vmatpush.msra.mxu0 %v82
  %183 = vmatpush.msra.mxu0 %v81
  %184 = vmatpush.msra.mxu0 %v80
  %185 = vmatpush.msra.mxu0 %v79
  %186 = vmatpush.msra.mxu0 %v78
  %187 = vmatpush.msra.mxu0 %v77
  %188 = vmatpush.msra.mxu0 %v76
  %189 = vmatpush.msra.mxu0 %v75
  %190 = vmatpush.msra.mxu0 %v74
  %191 = vmatpush.msra.mxu0 %v73
  %192 = vmatpush.msra.mxu0 %v72
  %193 = vmatpush.msra.mxu0 %v71
  %194 = vmatpush.msra.mxu0 %v70
  %195 = vmatpush.msra.mxu0 %v69
  %196 = vmatmul.f32.gmra.mxu0 %v19
  %v197 = vpop.f32.mrf.mxu0
  %v198 = vadd.f32 %v169, %v197
  %199 = vmatmul.f32.gmra.mxu0 %v24
  %v200 = vpop.f32.mrf.mxu0
  %v201 = vadd.f32 %v172, %v200
  %202 = vmatmul.f32.gmra.mxu0 %v29
  %v203 = vpop.f32.mrf.mxu0
  %v204 = vadd.f32 %v175, %v203
  %205 = vmatmul.f32.gmra.mxu0 %v34
  %v206 = vpop.f32.mrf.mxu0
  %v207 = vadd.f32 %v178, %v206
  %208 = vdwg.mxu0
  %209 = vmatpush.msra.mxu0 %v100
  %210 = vmatpush.msra.mxu0 %v99
  %211 = vmatpush.msra.mxu0 %v98
  %212 = vmatpush.msra.mxu0 %v97
  %213 = vmatpush.msra.mxu0 %v96
  %214 = vmatpush.msra.mxu0 %v95
  %215 = vmatpush.msra.mxu0 %v94
  %216 = vmatpush.msra.mxu0 %v93
  %217 = vmatpush.msra.mxu0 %v92
  %218 = vmatpush.msra.mxu0 %v91
  %219 = vmatpush.msra.mxu0 %v90
  %220 = vmatpush.msra.mxu0 %v89
  %221 = vmatpush.msra.mxu0 %v88
  %222 = vmatpush.msra.mxu0 %v87
  %223 = vmatpush.msra.mxu0 %v86
  %224 = vmatpush.msra.mxu0 %v85
  %225 = vmatmul.f32.gmra.mxu0 %v20
  %v226 = vpop.f32.mrf.mxu0
  %v227 = vadd.f32 %v198, %v226
  %228 = vmatmul.f32.gmra.mxu0 %v25
  %v229 = vpop.f32.mrf.mxu0
  %v230 = vadd.f32 %v201, %v229
  %231 = vmatmul.f32.gmra.mxu0 %v30
  %v232 = vpop.f32.mrf.mxu0
  %v233 = vadd.f32 %v204, %v232
  %234 = vmatmul.f32.gmra.mxu0 %v35
  %v235 = vpop.f32.mrf.mxu0
  %v236 = vadd.f32 %v207, %v235
  %237 = vdwg.mxu0
  %238 = vmatpush.msra.mxu0 0.0
  %239 = vmatpush.msra.mxu0 0.0
  %240 = vmatpush.msra.mxu0 0.0
  %241 = vmatpush.msra.mxu0 0.0
  %242 = vmatpush.msra.mxu0 0.0
  %243 = vmatpush.msra.mxu0 0.0
  %244 = vmatpush.msra.mxu0 0.0
  %245 = vmatpush.msra.mxu0 0.0
  %246 = vmatpush.msra.mxu0 %v108
  %247 = vmatpush.msra.mxu0 %v107
  %248 = vmatpush.msra.mxu0 %v106
  %249 = vmatpush.msra.mxu0 %v105
  %250 = vmatpush.msra.mxu0 %v104
  %251 = vmatpush.msra.mxu0 %v103
  %252 = vmatpush.msra.mxu0 %v102
  %253 = vmatpush.msra.mxu0 %v101
  %254 = vmatmul.f32.gmra.mxu0 %v111
  %v255 = vpop.f32.mrf.mxu0
  %v256 = vadd.f32 %v227, %v255
  %257 = vmatmul.f32.gmra.mxu0 %v114
  %v258 = vpop.f32.mrf.mxu0
  %v259 = vadd.f32 %v230, %v258
  %260 = vmatmul.f32.gmra.mxu0 %v117
  %v261 = vpop.f32.mrf.mxu0
  %v262 = vadd.f32 %v233, %v261
  %263 = vmatmul.f32.gmra.mxu0 %v120
  %v264 = vpop.f32.mrf.mxu0
  %v265 = vadd.f32 %v236, %v264
  %266 = vdwg.mxu0
  %v267 = vadd.f32 %v256, %v259
  %v268 = vadd.f32 %v267, %v262
  %v269 = vadd.f32 %v268, %v265
  %v270 = vrot.slane %v269, 4
  %v271 = vadd.f32 %v269, %v270
  %v272 = vrot.slane %v271, 2
  %v273 = vadd.f32 %v271, %v272
  %v274 = vrot.slane %v273, 1
  %v275 = vadd.f32 %v273, %v274
  %v276 = vrcp.pop 32.0
  %v277 = vmul.f32 32.0, %v276
  %v278 = vsub.f32 1.0, %v277
  %v279 = vmul.f32 %v276, %v278
  %v280 = vadd.f32 %v276, %v279
  %vm281 = vweird.f32 %v276
  %v282 = vsel %vm281, %v276, %v280
  %v283 = vmul.f32 %v275, %v282
  %v284 = vsub.f32 %v256, %v283
  %v285 = vsub.f32 %v259, %v283
  %v286 = vsub.f32 %v262, %v283
  %v287 = vsub.f32 %v265, %v283
  %v288 = vmul.f32 %v284, %v284
  %v289 = vmul.f32 %v285, %v285
  %v290 = vmul.f32 %v286, %v286
  %v291 = vmul.f32 %v287, %v287
  %v292 = vadd.f32 %v288, %v289
  %v293 = vadd.f32 %v292, %v290
  %v294 = vadd.f32 %v293, %v291
  %v295 = vrot.slane %v294, 4
  %v296 = vadd.f32 %v294, %v295
  %v297 = vrot.slane %v296, 2
  %v298 = vadd.f32 %v296, %v297
  %v299 = vrot.slane %v298, 1
  %v300 = vadd.f32 %v298, %v299
  %v301 = vmul.f32 %v300, %v282
  %v302 = vadd.f32 %v301, 1e-05
  %v303 = vrsqrt.pop %v302
  %v304 = vmul.f32 %v303, %v302
  %v305 = vmul.f32 %v304, %v303
  %v306 = vmul.f32 0.5, %v305
  %v307 = vsub.f32 1.5, %v306
  %v308 = vmul.f32 %v303, %v307
  %vm309 = vweird.f32 %v302
  %vm310 = vweird.f32 %v303
  %vm311 = vmor %vm309, %vm310
  %v312 = vsel %vm311, %v303, %v308
  %v313 = vld [vmem:[%s2] sm:$0x1]
  %v314 = vmul.f32 %v312, %v313
  %v315 = vperm.slane %v314, 0
  %v316 = vmul.f32 %v284, %v315
  %v317 = vmul.f32 %v285, %v315
  %v318 = vmul.f32 %v286, %v315
  %v319 = vmul.f32 %v287, %v315
  %v320 = vld [vmem:[%s3] sm:$0x1]
  %v322 = vperm.slane %v320, 0
  %v324 = vadd.f32 %v316, %v322
  %v325 = vadd.f32 %v317, %v322
  %v326 = vadd.f32 %v318, %v322
  %v327 = vadd.f32 %v319, %v322
  %v328 = vmax.f32 %v324, 0.0
  %v329 = vmax.f32 %v325, 0.0
  %v330 = vmax.f32 %v326, 0.0
  %v331 = vmax.f32 %v327, 0.0
  %332 = vst [vmem:[%s4] sm:$0xff] %v328
  %333 = vst [vmem:[%s4 + $0x8] sm:$0xff] %v329
  %334 = vst [vmem:[%s4 + $0x10] sm:$0xff] %v330
  %335 = vst [vmem:[%s4 + $0x18] sm:$0xff] %v331
  // Predicated region
  $region18: #{encoder_forward.10} parent=0 // pred_check
    _
  $region19: #{encoder_forward.10} parent=0 // pred_check_branch
    %337 = sbr.rel (0) target = $region21
  $region20: #{encoder_forward.10} parent=0 // pred_region
    _
  $region21: #{encoder_forward.10} parent=0 // pred_fallthru
    _
  // Predicated region
  $region22: #{encoder_forward.10} parent=0 // pred_check
    _
  $region23: #{encoder_forward.10} parent=0 // pred_check_branch
    %339 = sbr.rel (0) target = $region25
  $region24: #{encoder_forward.10} parent=0 // pred_region
    _
  $region25: #{encoder_forward.10} parent=0 // pred_fallthru
    _

// kernel: encoder_forward.11
$region0: #{encoder_forward.11}
  #allocation0 [shape = 'u32[]', space=smem, size = 0x4, offset = 0x4, fixed_abs, tag = 'smem constant byte address 0x4 - core index']
  #allocation1 [shape = 'u32[72,128]{1,0:T(1,128)}', space=vmem, size = 0x9000, scoped, tag = 'internal scratch']
  %s0 = inlined_call_operand.vmem [shape: f32[32,1152], index: 0, kind: input, shape index: {}]
  %s1 = inlined_call_operand.vmem [shape: f32[1152,128], index: 1, kind: input, shape index: {}]
  %s2 = inlined_call_operand.vmem [shape: f32[1,128], index: 2, kind: input, shape index: {}]
  %s3 = inlined_call_operand.vmem [shape: f32[1,128], index: 3, kind: input, shape index: {}]
  %s4 = inlined_call_operand.vmem [shape: f32[32,128], index: 4, kind: output, shape index: {}]
  %s5 = sld [smem:[#allocation0]]
  $region26: #{encoder_forward.11} parent=0
    _
  %s7 = ssub.s32 1, %s5
  %s8 = scalar_select 0, %s7, %s5
  // Predicated region
  $region2: #{encoder_forward.11} parent=0 // pred_check
    _
  $region3: #{encoder_forward.11} parent=0 // pred_check_branch
    %10 = sbr.rel (0) target = $region5
  $region4: #{encoder_forward.11} parent=0 // pred_region
    _
  $region5: #{encoder_forward.11} parent=0 // pred_fallthru
    _
  // Predicated region
  $region6: #{encoder_forward.11} parent=0 // pred_check
    _
  $region7: #{encoder_forward.11} parent=0 // pred_check_branch
    %12 = sbr.rel (0) target = $region9
  $region8: #{encoder_forward.11} parent=0 // pred_region
    _
  $region9: #{encoder_forward.11} parent=0 // pred_fallthru
    _
  // Predicated region
  $region10: #{encoder_forward.11} parent=0 // pred_check
    _
  $region11: #{encoder_forward.11} parent=0 // pred_check_branch
    %14 = sbr.rel (0) target = $region13
  $region12: #{encoder_forward.11} parent=0 // pred_region
    _
  $region13: #{encoder_forward.11} parent=0 // pred_fallthru
    _
  // Predicated region
  $region14: #{encoder_forward.11} parent=0 // pred_check
    _
  $region15: #{encoder_forward.11} parent=0 // pred_check_branch
    %16 = sbr.rel (0) target = $region17
  $region16: #{encoder_forward.11} parent=0 // pred_region
    _
  $region17: #{encoder_forward.11} parent=0 // pred_fallthru
    _
  %v17 = vld [vmem:[%s0] sm:$0xff]
  %v18 = vld [vmem:[%s0 + $0x8] sm:$0xff]
  %v19 = vld [vmem:[%s0 + $0x10] sm:$0xff]
  %v20 = vld [vmem:[%s0 + $0x18] sm:$0xff]
  %v21 = vld [vmem:[%s0 + $0x20] sm:$0xff]
  %v22 = vld [vmem:[%s0 + $0x28] sm:$0xff]
  %v23 = vld [vmem:[%s0 + $0x30] sm:$0xff]
  %v24 = vld [vmem:[%s0 + $0x38] sm:$0xff]
  %v25 = vld [vmem:[%s0 + $0x40] sm:$0xff]
  %v26 = vld [vmem:[%s0 + $0x48] sm:$0xff]
  %v27 = vld [vmem:[%s0 + $0x50] sm:$0xff]
  %v28 = vld [vmem:[%s0 + $0x58] sm:$0xff]
  %v29 = vld [vmem:[%s0 + $0x60] sm:$0xff]
  %v30 = vld [vmem:[%s0 + $0x68] sm:$0xff]
  %v31 = vld [vmem:[%s0 + $0x70] sm:$0xff]
  %v32 = vld [vmem:[%s0 + $0x78] sm:$0xff]
  %v33 = vld [vmem:[%s0 + $0x80] sm:$0xff]
  %v34 = vld [vmem:[%s0 + $0x88] sm:$0xff]
  %v35 = vld [vmem:[%s0 + $0x90] sm:$0xff]
  %v36 = vld [vmem:[%s0 + $0x98] sm:$0xff]
  %v37 = vld [vmem:[%s0 + $0xa0] sm:$0xff]
  %v38 = vld [vmem:[%s0 + $0xa8] sm:$0xff]
  %v39 = vld [vmem:[%s0 + $0xb0] sm:$0xff]
  %v40 = vld [vmem:[%s0 + $0xb8] sm:$0xff]
  %v41 = vld [vmem:[%s0 + $0xc0] sm:$0xff]
  %v42 = vld [vmem:[%s0 + $0xc8] sm:$0xff]
  %v43 = vld [vmem:[%s0 + $0xd0] sm:$0xff]
  %v44 = vld [vmem:[%s0 + $0xd8] sm:$0xff]
  %v45 = vld [vmem:[%s0 + $0xe0] sm:$0xff]
  %v46 = vld [vmem:[%s0 + $0xe8] sm:$0xff]
  %v47 = vld [vmem:[%s0 + $0xf0] sm:$0xff]
  %v48 = vld [vmem:[%s0 + $0xf8] sm:$0xff]
  %v49 = vld [vmem:[%s0 + $0x100] sm:$0xff]
  %v50 = vld [vmem:[%s0 + $0x108] sm:$0xff]
  %v51 = vld [vmem:[%s0 + $0x110] sm:$0xff]
  %v52 = vld [vmem:[%s0 + $0x118] sm:$0xff]
  %v53 = vld [vmem:[%s1] sm:$0xff]
  %v54 = vld [vmem:[%s1 + $0x8] sm:$0xff]
  %v55 = vld [vmem:[%s1 + $0x10] sm:$0xff]
  %v56 = vld [vmem:[%s1 + $0x18] sm:$0xff]
  %v57 = vld [vmem:[%s1 + $0x20] sm:$0xff]
  %v58 = vld [vmem:[%s1 + $0x28] sm:$0xff]
  %v59 = vld [vmem:[%s1 + $0x30] sm:$0xff]
  %v60 = vld [vmem:[%s1 + $0x38] sm:$0xff]
  %v61 = vld [vmem:[%s1 + $0x40] sm:$0xff]
  %v62 = vld [vmem:[%s1 + $0x48] sm:$0xff]
  %v63 = vld [vmem:[%s1 + $0x50] sm:$0xff]
  %v64 = vld [vmem:[%s1 + $0x58] sm:$0xff]
  %v65 = vld [vmem:[%s1 + $0x60] sm:$0xff]
  %v66 = vld [vmem:[%s1 + $0x68] sm:$0xff]
  %v67 = vld [vmem:[%s1 + $0x70] sm:$0xff]
  %v68 = vld [vmem:[%s1 + $0x78] sm:$0xff]
  %v69 = vld [vmem:[%s1 + $0x80] sm:$0xff]
  %v70 = vld [vmem:[%s1 + $0x88] sm:$0xff]
  %v71 = vld [vmem:[%s1 + $0x90] sm:$0xff]
  %v72 = vld [vmem:[%s1 + $0x98] sm:$0xff]
  %v73 = vld [vmem:[%s1 + $0xa0] sm:$0xff]
  %v74 = vld [vmem:[%s1 + $0xa8] sm:$0xff]
  %v75 = vld [vmem:[%s1 + $0xb0] sm:$0xff]
  %v76 = vld [vmem:[%s1 + $0xb8] sm:$0xff]
  %v77 = vld [vmem:[%s1 + $0xc0] sm:$0xff]
  %v78 = vld [vmem:[%s1 + $0xc8] sm:$0xff]
  %v79 = vld [vmem:[%s1 + $0xd0] sm:$0xff]
  %v80 = vld [vmem:[%s1 + $0xd8] sm:$0xff]
  %v81 = vld [vmem:[%s1 + $0xe0] sm:$0xff]
  %v82 = vld [vmem:[%s1 + $0xe8] sm:$0xff]
  %v83 = vld [vmem:[%s1 + $0xf0] sm:$0xff]
  %v84 = vld [vmem:[%s1 + $0xf8] sm:$0xff]
  %v85 = vld [vmem:[%s1 + $0x100] sm:$0xff]
  %v86 = vld [vmem:[%s1 + $0x108] sm:$0xff]
  %v87 = vld [vmem:[%s1 + $0x110] sm:$0xff]
  %v88 = vld [vmem:[%s1 + $0x118] sm:$0xff]
  %v89 = vld [vmem:[%s1 + $0x120] sm:$0xff]
  %v90 = vld [vmem:[%s1 + $0x128] sm:$0xff]
  %v91 = vld [vmem:[%s1 + $0x130] sm:$0xff]
  %v92 = vld [vmem:[%s1 + $0x138] sm:$0xff]
  %v93 = vld [vmem:[%s1 + $0x140] sm:$0xff]
  %v94 = vld [vmem:[%s1 + $0x148] sm:$0xff]
  %v95 = vld [vmem:[%s1 + $0x150] sm:$0xff]
  %v96 = vld [vmem:[%s1 + $0x158] sm:$0xff]
  %v97 = vld [vmem:[%s1 + $0x160] sm:$0xff]
  %v98 = vld [vmem:[%s1 + $0x168] sm:$0xff]
  %v99 = vld [vmem:[%s1 + $0x170] sm:$0xff]
  %v100 = vld [vmem:[%s1 + $0x178] sm:$0xff]
  %v101 = vld [vmem:[%s1 + $0x180] sm:$0xff]
  %v102 = vld [vmem:[%s1 + $0x188] sm:$0xff]
  %v103 = vld [vmem:[%s1 + $0x190] sm:$0xff]
  %v104 = vld [vmem:[%s1 + $0x198] sm:$0xff]
  %v105 = vld [vmem:[%s1 + $0x1a0] sm:$0xff]
  %v106 = vld [vmem:[%s1 + $0x1a8] sm:$0xff]
  %v107 = vld [vmem:[%s1 + $0x1b0] sm:$0xff]
  %v108 = vld [vmem:[%s1 + $0x1b8] sm:$0xff]
  %v109 = vld [vmem:[%s1 + $0x1c0] sm:$0xff]
  %v110 = vld [vmem:[%s1 + $0x1c8] sm:$0xff]
  %v111 = vld [vmem:[%s1 + $0x1d0] sm:$0xff]
  %v112 = vld [vmem:[%s1 + $0x1d8] sm:$0xff]
  %v113 = vld [vmem:[%s1 + $0x1e0] sm:$0xff]
  %v114 = vld [vmem:[%s1 + $0x1e8] sm:$0xff]
  %v115 = vld [vmem:[%s1 + $0x1f0] sm:$0xff]
  %v116 = vld [vmem:[%s1 + $0x1f8] sm:$0xff]
  %v117 = vld [vmem:[%s1 + $0x200] sm:$0xff]
  %v118 = vld [vmem:[%s1 + $0x208] sm:$0xff]
  %v119 = vld [vmem:[%s1 + $0x210] sm:$0xff]
  %v120 = vld [vmem:[%s1 + $0x218] sm:$0xff]
  %v121 = vld [vmem:[%s1 + $0x220] sm:$0xff]
  %v122 = vld [vmem:[%s1 + $0x228] sm:$0xff]
  %v123 = vld [vmem:[%s1 + $0x230] sm:$0xff]
  %v124 = vld [vmem:[%s1 + $0x238] sm:$0xff]
  %v125 = vld [vmem:[%s1 + $0x240] sm:$0xff]
  %v126 = vld [vmem:[%s1 + $0x248] sm:$0xff]
  %v127 = vld [vmem:[%s1 + $0x250] sm:$0xff]
  %v128 = vld [vmem:[%s1 + $0x258] sm:$0xff]
  %v129 = vld [vmem:[%s1 + $0x260] sm:$0xff]
  %v130 = vld [vmem:[%s1 + $0x268] sm:$0xff]
  %v131 = vld [vmem:[%s1 + $0x270] sm:$0xff]
  %v132 = vld [vmem:[%s1 + $0x278] sm:$0xff]
  %v133 = vld [vmem:[%s1 + $0x280] sm:$0xff]
  %v134 = vld [vmem:[%s1 + $0x288] sm:$0xff]
  %v135 = vld [vmem:[%s1 + $0x290] sm:$0xff]
  %v136 = vld [vmem:[%s1 + $0x298] sm:$0xff]
  %v137 = vld [vmem:[%s1 + $0x2a0] sm:$0xff]
  %v138 = vld [vmem:[%s1 + $0x2a8] sm:$0xff]
  %v139 = vld [vmem:[%s1 + $0x2b0] sm:$0xff]
  %v140 = vld [vmem:[%s1 + $0x2b8] sm:$0xff]
  %v141 = vld [vmem:[%s1 + $0x2c0] sm:$0xff]
  %v142 = vld [vmem:[%s1 + $0x2c8] sm:$0xff]
  %v143 = vld [vmem:[%s1 + $0x2d0] sm:$0xff]
  %v144 = vld [vmem:[%s1 + $0x2d8] sm:$0xff]
  %v145 = vld [vmem:[%s1 + $0x2e0] sm:$0xff]
  %v146 = vld [vmem:[%s1 + $0x2e8] sm:$0xff]
  %v147 = vld [vmem:[%s1 + $0x2f0] sm:$0xff]
  %v148 = vld [vmem:[%s1 + $0x2f8] sm:$0xff]
  %v149 = vld [vmem:[%s1 + $0x300] sm:$0xff]
  %v150 = vld [vmem:[%s1 + $0x308] sm:$0xff]
  %v151 = vld [vmem:[%s1 + $0x310] sm:$0xff]
  %v152 = vld [vmem:[%s1 + $0x318] sm:$0xff]
  %v153 = vld [vmem:[%s1 + $0x320] sm:$0xff]
  %v154 = vld [vmem:[%s1 + $0x328] sm:$0xff]
  %v155 = vld [vmem:[%s1 + $0x330] sm:$0xff]
  %v156 = vld [vmem:[%s1 + $0x338] sm:$0xff]
  %v157 = vld [vmem:[%s1 + $0x340] sm:$0xff]
  %v158 = vld [vmem:[%s1 + $0x348] sm:$0xff]
  %v159 = vld [vmem:[%s1 + $0x350] sm:$0xff]
  %v160 = vld [vmem:[%s1 + $0x358] sm:$0xff]
  %v161 = vld [vmem:[%s1 + $0x360] sm:$0xff]
  %v162 = vld [vmem:[%s1 + $0x368] sm:$0xff]
  %v163 = vld [vmem:[%s1 + $0x370] sm:$0xff]
  %v164 = vld [vmem:[%s1 + $0x378] sm:$0xff]
  %v165 = vld [vmem:[%s1 + $0x380] sm:$0xff]
  %v166 = vld [vmem:[%s1 + $0x388] sm:$0xff]
  %v167 = vld [vmem:[%s1 + $0x390] sm:$0xff]
  %v168 = vld [vmem:[%s1 + $0x398] sm:$0xff]
  %v169 = vld [vmem:[%s1 + $0x3a0] sm:$0xff]
  %v170 = vld [vmem:[%s1 + $0x3a8] sm:$0xff]
  %v171 = vld [vmem:[%s1 + $0x3b0] sm:$0xff]
  %v172 = vld [vmem:[%s1 + $0x3b8] sm:$0xff]
  %v173 = vld [vmem:[%s1 + $0x3c0] sm:$0xff]
  %v174 = vld [vmem:[%s1 + $0x3c8] sm:$0xff]
  %v175 = vld [vmem:[%s1 + $0x3d0] sm:$0xff]
  %v176 = vld [vmem:[%s1 + $0x3d8] sm:$0xff]
  %v177 = vld [vmem:[%s1 + $0x3e0] sm:$0xff]
  %v178 = vld [vmem:[%s1 + $0x3e8] sm:$0xff]
  %v179 = vld [vmem:[%s1 + $0x3f0] sm:$0xff]
  %v180 = vld [vmem:[%s1 + $0x3f8] sm:$0xff]
  %v181 = vld [vmem:[%s1 + $0x400] sm:$0xff]
  %v182 = vld [vmem:[%s1 + $0x408] sm:$0xff]
  %v183 = vld [vmem:[%s1 + $0x410] sm:$0xff]
  %v184 = vld [vmem:[%s1 + $0x418] sm:$0xff]
  %v185 = vld [vmem:[%s1 + $0x420] sm:$0xff]
  %v186 = vld [vmem:[%s1 + $0x428] sm:$0xff]
  %v187 = vld [vmem:[%s1 + $0x430] sm:$0xff]
  %v188 = vld [vmem:[%s1 + $0x438] sm:$0xff]
  %v189 = vld [vmem:[%s1 + $0x440] sm:$0xff]
  %v190 = vld [vmem:[%s1 + $0x448] sm:$0xff]
  %v191 = vld [vmem:[%s1 + $0x450] sm:$0xff]
  %v192 = vld [vmem:[%s1 + $0x458] sm:$0xff]
  %v193 = vld [vmem:[%s1 + $0x460] sm:$0xff]
  %v194 = vld [vmem:[%s1 + $0x468] sm:$0xff]
  %v195 = vld [vmem:[%s1 + $0x470] sm:$0xff]
  %v196 = vld [vmem:[%s1 + $0x478] sm:$0xff]
  %197 = vmatpush.msra.mxu0 %v68
  %198 = vmatpush.msra.mxu0 %v67
  %199 = vmatpush.msra.mxu0 %v66
  %200 = vmatpush.msra.mxu0 %v65
  %201 = vmatpush.msra.mxu0 %v64
  %202 = vmatpush.msra.mxu0 %v63
  %203 = vmatpush.msra.mxu0 %v62
  %204 = vmatpush.msra.mxu0 %v61
  %205 = vmatpush.msra.mxu0 %v60
  %206 = vmatpush.msra.mxu0 %v59
  %207 = vmatpush.msra.mxu0 %v58
  %208 = vmatpush.msra.mxu0 %v57
  %209 = vmatpush.msra.mxu0 %v56
  %210 = vmatpush.msra.mxu0 %v55
  %211 = vmatpush.msra.mxu0 %v54
  %212 = vmatpush.msra.mxu0 %v53
  %213 = vmatmul.f32.gmra.mxu0 %v17
  %v214 = vpop.f32.mrf.mxu0
  %v215 = vadd.f32 0.0, %v214
  %216 = vmatmul.f32.gmra.mxu0 %v26
  %v217 = vpop.f32.mrf.mxu0
  %v218 = vadd.f32 0.0, %v217
  %219 = vmatmul.f32.gmra.mxu0 %v35
  %v220 = vpop.f32.mrf.mxu0
  %v221 = vadd.f32 0.0, %v220
  %222 = vmatmul.f32.gmra.mxu0 %v44
  %v223 = vpop.f32.mrf.mxu0
  %v224 = vadd.f32 0.0, %v223
  %225 = vdwg.mxu0
  %226 = vmatpush.msra.mxu0 %v84
  %227 = vmatpush.msra.mxu0 %v83
  %228 = vmatpush.msra.mxu0 %v82
  %229 = vmatpush.msra.mxu0 %v81
  %230 = vmatpush.msra.mxu0 %v80
  %231 = vmatpush.msra.mxu0 %v79
  %232 = vmatpush.msra.mxu0 %v78
  %233 = vmatpush.msra.mxu0 %v77
  %234 = vmatpush.msra.mxu0 %v76
  %235 = vmatpush.msra.mxu0 %v75
  %236 = vmatpush.msra.mxu0 %v74
  %237 = vmatpush.msra.mxu0 %v73
  %238 = vmatpush.msra.mxu0 %v72
  %239 = vmatpush.msra.mxu0 %v71
  %240 = vmatpush.msra.mxu0 %v70
  %241 = vmatpush.msra.mxu0 %v69
  %242 = vmatmul.f32.gmra.mxu0 %v18
  %v243 = vpop.f32.mrf.mxu0
  %v244 = vadd.f32 %v215, %v243
  %245 = vmatmul.f32.gmra.mxu0 %v27
  %v246 = vpop.f32.mrf.mxu0
  %v247 = vadd.f32 %v218, %v246
  %248 = vmatmul.f32.gmra.mxu0 %v36
  %v249 = vpop.f32.mrf.mxu0
  %v250 = vadd.f32 %v221, %v249
  %251 = vmatmul.f32.gmra.mxu0 %v45
  %v252 = vpop.f32.mrf.mxu0
  %v253 = vadd.f32 %v224, %v252
  %254 = vdwg.mxu0
  %255 = vmatpush.msra.mxu0 %v100
  %256 = vmatpush.msra.mxu0 %v99
  %257 = vmatpush.msra.mxu0 %v98
  %258 = vmatpush.msra.mxu0 %v97
  %259 = vmatpush.msra.mxu0 %v96
  %260 = vmatpush.msra.mxu0 %v95
  %261 = vmatpush.msra.mxu0 %v94
  %262 = vmatpush.msra.mxu0 %v93
  %263 = vmatpush.msra.mxu0 %v92
  %264 = vmatpush.msra.mxu0 %v91
  %265 = vmatpush.msra.mxu0 %v90
  %266 = vmatpush.msra.mxu0 %v89
  %267 = vmatpush.msra.mxu0 %v88
  %268 = vmatpush.msra.mxu0 %v87
  %269 = vmatpush.msra.mxu0 %v86
  %270 = vmatpush.msra.mxu0 %v85
  %271 = vmatmul.f32.gmra.mxu0 %v19
  %v272 = vpop.f32.mrf.mxu0
  %v273 = vadd.f32 %v244, %v272
  %274 = vmatmul.f32.gmra.mxu0 %v28
  %v275 = vpop.f32.mrf.mxu0
  %v276 = vadd.f32 %v247, %v275
  %277 = vmatmul.f32.gmra.mxu0 %v37
  %v278 = vpop.f32.mrf.mxu0
  %v279 = vadd.f32 %v250, %v278
  %280 = vmatmul.f32.gmra.mxu0 %v46
  %v281 = vpop.f32.mrf.mxu0
  %v282 = vadd.f32 %v253, %v281
  %283 = vdwg.mxu0
  %284 = vmatpush.msra.mxu0 %v116
  %285 = vmatpush.msra.mxu0 %v115
  %286 = vmatpush.msra.mxu0 %v114
  %287 = vmatpush.msra.mxu0 %v113
  %288 = vmatpush.msra.mxu0 %v112
  %289 = vmatpush.msra.mxu0 %v111
  %290 = vmatpush.msra.mxu0 %v110
  %291 = vmatpush.msra.mxu0 %v109
  %292 = vmatpush.msra.mxu0 %v108
  %293 = vmatpush.msra.mxu0 %v107
  %294 = vmatpush.msra.mxu0 %v106
  %295 = vmatpush.msra.mxu0 %v105
  %296 = vmatpush.msra.mxu0 %v104
  %297 = vmatpush.msra.mxu0 %v103
  %298 = vmatpush.msra.mxu0 %v102
  %299 = vmatpush.msra.mxu0 %v101
  %300 = vmatmul.f32.gmra.mxu0 %v20
  %v301 = vpop.f32.mrf.mxu0
  %v302 = vadd.f32 %v273, %v301
  %303 = vmatmul.f32.gmra.mxu0 %v29
  %v304 = vpop.f32.mrf.mxu0
  %v305 = vadd.f32 %v276, %v304
  %306 = vmatmul.f32.gmra.mxu0 %v38
  %v307 = vpop.f32.mrf.mxu0
  %v308 = vadd.f32 %v279, %v307
  %309 = vmatmul.f32.gmra.mxu0 %v47
  %v310 = vpop.f32.mrf.mxu0
  %v311 = vadd.f32 %v282, %v310
  %312 = vdwg.mxu0
  %313 = vmatpush.msra.mxu0 %v132
  %314 = vmatpush.msra.mxu0 %v131
  %315 = vmatpush.msra.mxu0 %v130
  %316 = vmatpush.msra.mxu0 %v129
  %317 = vmatpush.msra.mxu0 %v128
  %318 = vmatpush.msra.mxu0 %v127
  %319 = vmatpush.msra.mxu0 %v126
  %320 = vmatpush.msra.mxu0 %v125
  %321 = vmatpush.msra.mxu0 %v124
  %322 = vmatpush.msra.mxu0 %v123
  %323 = vmatpush.msra.mxu0 %v122
  %324 = vmatpush.msra.mxu0 %v121
  %325 = vmatpush.msra.mxu0 %v120
  %326 = vmatpush.msra.mxu0 %v119
  %327 = vmatpush.msra.mxu0 %v118
  %328 = vmatpush.msra.mxu0 %v117
  %329 = vmatmul.f32.gmra.mxu0 %v21
  %v330 = vpop.f32.mrf.mxu0
  %v331 = vadd.f32 %v302, %v330
  %332 = vmatmul.f32.gmra.mxu0 %v30
  %v333 = vpop.f32.mrf.mxu0
  %v334 = vadd.f32 %v305, %v333
  %335 = vmatmul.f32.gmra.mxu0 %v39
  %v336 = vpop.f32.mrf.mxu0
  %v337 = vadd.f32 %v308, %v336
  %338 = vmatmul.f32.gmra.mxu0 %v48
  %v339 = vpop.f32.mrf.mxu0
  %v340 = vadd.f32 %v311, %v339
  %341 = vdwg.mxu0
  %342 = vmatpush.msra.mxu0 %v148
  %343 = vmatpush.msra.mxu0 %v147
  %344 = vmatpush.msra.mxu0 %v146
  %345 = vmatpush.msra.mxu0 %v145
  %346 = vmatpush.msra.mxu0 %v144
  %347 = vmatpush.msra.mxu0 %v143
  %348 = vmatpush.msra.mxu0 %v142
  %349 = vmatpush.msra.mxu0 %v141
  %350 = vmatpush.msra.mxu0 %v140
  %351 = vmatpush.msra.mxu0 %v139
  %352 = vmatpush.msra.mxu0 %v138
  %353 = vmatpush.msra.mxu0 %v137
  %354 = vmatpush.msra.mxu0 %v136
  %355 = vmatpush.msra.mxu0 %v135
  %356 = vmatpush.msra.mxu0 %v134
  %357 = vmatpush.msra.mxu0 %v133
  %358 = vmatmul.f32.gmra.mxu0 %v22
  %v359 = vpop.f32.mrf.mxu0
  %v360 = vadd.f32 %v331, %v359
  %361 = vmatmul.f32.gmra.mxu0 %v31
  %v362 = vpop.f32.mrf.mxu0
  %v363 = vadd.f32 %v334, %v362
  %364 = vmatmul.f32.gmra.mxu0 %v40
  %v365 = vpop.f32.mrf.mxu0
  %v366 = vadd.f32 %v337, %v365
  %367 = vmatmul.f32.gmra.mxu0 %v49
  %v368 = vpop.f32.mrf.mxu0
  %v369 = vadd.f32 %v340, %v368
  %370 = vdwg.mxu0
  %371 = vmatpush.msra.mxu0 %v164
  %372 = vmatpush.msra.mxu0 %v163
  %373 = vmatpush.msra.mxu0 %v162
  %374 = vmatpush.msra.mxu0 %v161
  %375 = vmatpush.msra.mxu0 %v160
  %376 = vmatpush.msra.mxu0 %v159
  %377 = vmatpush.msra.mxu0 %v158
  %378 = vmatpush.msra.mxu0 %v157
  %379 = vmatpush.msra.mxu0 %v156
  %380 = vmatpush.msra.mxu0 %v155
  %381 = vmatpush.msra.mxu0 %v154
  %382 = vmatpush.msra.mxu0 %v153
  %383 = vmatpush.msra.mxu0 %v152
  %384 = vmatpush.msra.mxu0 %v151
  %385 = vmatpush.msra.mxu0 %v150
  %386 = vmatpush.msra.mxu0 %v149
  %387 = vmatmul.f32.gmra.mxu0 %v23
  %v388 = vpop.f32.mrf.mxu0
  %v389 = vadd.f32 %v360, %v388
  %390 = vmatmul.f32.gmra.mxu0 %v32
  %v391 = vpop.f32.mrf.mxu0
  %v392 = vadd.f32 %v363, %v391
  %393 = vmatmul.f32.gmra.mxu0 %v41
  %v394 = vpop.f32.mrf.mxu0
  %v395 = vadd.f32 %v366, %v394
  %396 = vmatmul.f32.gmra.mxu0 %v50
  %v397 = vpop.f32.mrf.mxu0
  %v398 = vadd.f32 %v369, %v397
  %399 = vdwg.mxu0
  %400 = vmatpush.msra.mxu0 %v180
  %401 = vmatpush.msra.mxu0 %v179
  %402 = vmatpush.msra.mxu0 %v178
  %403 = vmatpush.msra.mxu0 %v177
  %404 = vmatpush.msra.mxu0 %v176
  %405 = vmatpush.msra.mxu0 %v175
  %406 = vmatpush.msra.mxu0 %v174
  %407 = vmatpush.msra.mxu0 %v173
  %408 = vmatpush.msra.mxu0 %v172
  %409 = vmatpush.msra.mxu0 %v171
  %410 = vmatpush.msra.mxu0 %v170
  %411 = vmatpush.msra.mxu0 %v169
  %412 = vmatpush.msra.mxu0 %v168
  %413 = vmatpush.msra.mxu0 %v167
  %414 = vmatpush.msra.mxu0 %v166
  %415 = vmatpush.msra.mxu0 %v165
  %416 = vmatmul.f32.gmra.mxu0 %v24
  %v417 = vpop.f32.mrf.mxu0
  %v418 = vadd.f32 %v389, %v417
  %419 = vmatmul.f32.gmra.mxu0 %v33
  %v420 = vpop.f32.mrf.mxu0
  %v421 = vadd.f32 %v392, %v420
  %422 = vmatmul.f32.gmra.mxu0 %v42
  %v423 = vpop.f32.mrf.mxu0
  %v424 = vadd.f32 %v395, %v423
  %425 = vmatmul.f32.gmra.mxu0 %v51
  %v426 = vpop.f32.mrf.mxu0
  %v427 = vadd.f32 %v398, %v426
  %428 = vdwg.mxu0
  %429 = vmatpush.msra.mxu0 %v196
  %430 = vmatpush.msra.mxu0 %v195
  %431 = vmatpush.msra.mxu0 %v194
  %432 = vmatpush.msra.mxu0 %v193
  %433 = vmatpush.msra.mxu0 %v192
  %434 = vmatpush.msra.mxu0 %v191
  %435 = vmatpush.msra.mxu0 %v190
  %436 = vmatpush.msra.mxu0 %v189
  %437 = vmatpush.msra.mxu0 %v188
  %438 = vmatpush.msra.mxu0 %v187
  %439 = vmatpush.msra.mxu0 %v186
  %440 = vmatpush.msra.mxu0 %v185
  %441 = vmatpush.msra.mxu0 %v184
  %442 = vmatpush.msra.mxu0 %v183
  %443 = vmatpush.msra.mxu0 %v182
  %444 = vmatpush.msra.mxu0 %v181
  %445 = vmatmul.f32.gmra.mxu0 %v25
  %v446 = vpop.f32.mrf.mxu0
  %v447 = vadd.f32 %v418, %v446
  %448 = vmatmul.f32.gmra.mxu0 %v34
  %v449 = vpop.f32.mrf.mxu0
  %v450 = vadd.f32 %v421, %v449
  %451 = vmatmul.f32.gmra.mxu0 %v43
  %v452 = vpop.f32.mrf.mxu0
  %v453 = vadd.f32 %v424, %v452
  %454 = vmatmul.f32.gmra.mxu0 %v52
  %v455 = vpop.f32.mrf.mxu0
  %v456 = vadd.f32 %v427, %v455
  %457 = vdwg.mxu0
  %v458 = vadd.f32 %v447, %v450
  %v459 = vadd.f32 %v458, %v453
  %v460 = vadd.f32 %v459, %v456
  %v461 = vrot.slane %v460, 4
  %v462 = vadd.f32 %v460, %v461
  %v463 = vrot.slane %v462, 2
  %v464 = vadd.f32 %v462, %v463
  %v465 = vrot.slane %v464, 1
  %v466 = vadd.f32 %v464, %v465
  %v467 = vrcp.pop 32.0
  %v468 = vmul.f32 32.0, %v467
  %v469 = vsub.f32 1.0, %v468
  %v470 = vmul.f32 %v467, %v469
  %v471 = vadd.f32 %v467, %v470
  %vm472 = vweird.f32 %v467
  %v473 = vsel %vm472, %v467, %v471
  %v474 = vmul.f32 %v466, %v473
  %v475 = vsub.f32 %v447, %v474
  %v476 = vsub.f32 %v450, %v474
  %v477 = vsub.f32 %v453, %v474
  %v478 = vsub.f32 %v456, %v474
  %v479 = vmul.f32 %v475, %v475
  %v480 = vmul.f32 %v476, %v476
  %v481 = vmul.f32 %v477, %v477
  %v482 = vmul.f32 %v478, %v478
  %v483 = vadd.f32 %v479, %v480
  %v484 = vadd.f32 %v483, %v481
  %v485 = vadd.f32 %v484, %v482
  %v486 = vrot.slane %v485, 4
  %v487 = vadd.f32 %v485, %v486
  %v488 = vrot.slane %v487, 2
  %v489 = vadd.f32 %v487, %v488
  %v490 = vrot.slane %v489, 1
  %v491 = vadd.f32 %v489, %v490
  %v492 = vmul.f32 %v491, %v473
  %v493 = vadd.f32 %v492, 1e-05
  %v494 = vrsqrt.pop %v493
  %v495 = vmul.f32 %v494, %v493
  %v496 = vmul.f32 %v495, %v494
  %v497 = vmul.f32 0.5, %v496
  %v498 = vsub.f32 1.5, %v497
  %v499 = vmul.f32 %v494, %v498
  %vm500 = vweird.f32 %v493
  %vm501 = vweird.f32 %v494
  %vm502 = vmor %vm500, %vm501
  %v503 = vsel %vm502, %v494, %v499
  %v504 = vld [vmem:[%s2] sm:$0x1]
  %v505 = vmul.f32 %v503, %v504
  %v506 = vperm.slane %v505, 0
  %v507 = vmul.f32 %v475, %v506
  %v508 = vmul.f32 %v476, %v506
  %v509 = vmul.f32 %v477, %v506
  %v510 = vmul.f32 %v478, %v506
  %v511 = vld [vmem:[%s3] sm:$0x1]
  %v513 = vperm.slane %v511, 0
  %v515 = vadd.f32 %v507, %v513
  %v516 = vadd.f32 %v508, %v513
  %v517 = vadd.f32 %v509, %v513
  %v518 = vadd.f32 %v510, %v513
  %v519 = vmax.f32 %v515, 0.0
  %v520 = vmax.f32 %v516, 0.0
  %v521 = vmax.f32 %v517, 0.0
  %v522 = vmax.f32 %v518, 0.0
  %523 = vst [vmem:[%s4] sm:$0xff] %v519
  %524 = vst [vmem:[%s4 + $0x8] sm:$0xff] %v520
  %525 = vst [vmem:[%s4 + $0x10] sm:$0xff] %v521
  %526 = vst [vmem:[%s4 + $0x18] sm:$0xff] %v522
  // Predicated region
  $region18: #{encoder_forward.11} parent=0 // pred_check
    _
  $region19: #{encoder_forward.11} parent=0 // pred_check_branch
    %528 = sbr.rel (0) target = $region21
  $region20: #{encoder_forward.11} parent=0 // pred_region
    _
  $region21: #{encoder_forward.11} parent=0 // pred_fallthru
    _
  // Predicated region
  $region22: #{encoder_forward.11} parent=0 // pred_check
    _
  $region23: #{encoder_forward.11} parent=0 // pred_check_branch
    %530 = sbr.rel (0) target = $region25
  $region24: #{encoder_forward.11} parent=0 // pred_region
    _
  $region25: #{encoder_forward.11} parent=0 // pred_fallthru
    _

// kernel: encoder_forward.12
$region0: #{encoder_forward.12}
  #allocation0 [shape = 'u32[]', space=smem, size = 0x4, offset = 0x4, fixed_abs, tag = 'smem constant byte address 0x4 - core index']
  #allocation1 [shape = 'u32[72,128]{1,0:T(1,128)}', space=vmem, size = 0x9000, scoped, tag = 'internal scratch']
  %s0 = inlined_call_operand.vmem [shape: f32[32,1152], index: 0, kind: input, shape index: {}]
  %s1 = inlined_call_operand.vmem [shape: f32[1152,128], index: 1, kind: input, shape index: {}]
  %s2 = inlined_call_operand.vmem [shape: f32[1,128], index: 2, kind: input, shape index: {}]
  %s3 = inlined_call_operand.vmem [shape: f32[1,128], index: 3, kind: input, shape index: {}]
  %s4 = inlined_call_operand.vmem [shape: f32[32,128], index: 4, kind: input, shape index: {}]
  %s5 = inlined_call_operand.vmem [shape: f32[32,128], index: 5, kind: output, shape index: {}]
  %s6 = sld [smem:[#allocation0]]
  $region30: #{encoder_forward.12} parent=0
    _
  %s8 = ssub.s32 1, %s6
  %s9 = scalar_select 0, %s8, %s6
  // Predicated region
  $region2: #{encoder_forward.12} parent=0 // pred_check
    _
  $region3: #{encoder_forward.12} parent=0 // pred_check_branch
    %11 = sbr.rel (0) target = $region5
  $region4: #{encoder_forward.12} parent=0 // pred_region
    _
  $region5: #{encoder_forward.12} parent=0 // pred_fallthru
    _
  // Predicated region
  $region6: #{encoder_forward.12} parent=0 // pred_check
    _
  $region7: #{encoder_forward.12} parent=0 // pred_check_branch
    %13 = sbr.rel (0) target = $region9
  $region8: #{encoder_forward.12} parent=0 // pred_region
    _
  $region9: #{encoder_forward.12} parent=0 // pred_fallthru
    _
  // Predicated region
  $region10: #{encoder_forward.12} parent=0 // pred_check
    _
  $region11: #{encoder_forward.12} parent=0 // pred_check_branch
    %15 = sbr.rel (0) target = $region13
  $region12: #{encoder_forward.12} parent=0 // pred_region
    _
  $region13: #{encoder_forward.12} parent=0 // pred_fallthru
    _
  // Predicated region
  $region14: #{encoder_forward.12} parent=0 // pred_check
    _
  $region15: #{encoder_forward.12} parent=0 // pred_check_branch
    %17 = sbr.rel (0) target = $region17
  $region16: #{encoder_forward.12} parent=0 // pred_region
    _
  $region17: #{encoder_forward.12} parent=0 // pred_fallthru
    _
  // Predicated region
  $region18: #{encoder_forward.12} parent=0 // pred_check
    _
  $region19: #{encoder_forward.12} parent=0 // pred_check_branch
    %19 = sbr.rel (0) target = $region21
  $region20: #{encoder_forward.12} parent=0 // pred_region
    _
  $region21: #{encoder_forward.12} parent=0 // pred_fallthru
    _
  %v20 = vld [vmem:[%s0] sm:$0xff]
  %v21 = vld [vmem:[%s0 + $0x8] sm:$0xff]
  %v22 = vld [vmem:[%s0 + $0x10] sm:$0xff]
  %v23 = vld [vmem:[%s0 + $0x18] sm:$0xff]
  %v24 = vld [vmem:[%s0 + $0x20] sm:$0xff]
  %v25 = vld [vmem:[%s0 + $0x28] sm:$0xff]
  %v26 = vld [vmem:[%s0 + $0x30] sm:$0xff]
  %v27 = vld [vmem:[%s0 + $0x38] sm:$0xff]
  %v28 = vld [vmem:[%s0 + $0x40] sm:$0xff]
  %v29 = vld [vmem:[%s0 + $0x48] sm:$0xff]
  %v30 = vld [vmem:[%s0 + $0x50] sm:$0xff]
  %v31 = vld [vmem:[%s0 + $0x58] sm:$0xff]
  %v32 = vld [vmem:[%s0 + $0x60] sm:$0xff]
  %v33 = vld [vmem:[%s0 + $0x68] sm:$0xff]
  %v34 = vld [vmem:[%s0 + $0x70] sm:$0xff]
  %v35 = vld [vmem:[%s0 + $0x78] sm:$0xff]
  %v36 = vld [vmem:[%s0 + $0x80] sm:$0xff]
  %v37 = vld [vmem:[%s0 + $0x88] sm:$0xff]
  %v38 = vld [vmem:[%s0 + $0x90] sm:$0xff]
  %v39 = vld [vmem:[%s0 + $0x98] sm:$0xff]
  %v40 = vld [vmem:[%s0 + $0xa0] sm:$0xff]
  %v41 = vld [vmem:[%s0 + $0xa8] sm:$0xff]
  %v42 = vld [vmem:[%s0 + $0xb0] sm:$0xff]
  %v43 = vld [vmem:[%s0 + $0xb8] sm:$0xff]
  %v44 = vld [vmem:[%s0 + $0xc0] sm:$0xff]
  %v45 = vld [vmem:[%s0 + $0xc8] sm:$0xff]
  %v46 = vld [vmem:[%s0 + $0xd0] sm:$0xff]
  %v47 = vld [vmem:[%s0 + $0xd8] sm:$0xff]
  %v48 = vld [vmem:[%s0 + $0xe0] sm:$0xff]
  %v49 = vld [vmem:[%s0 + $0xe8] sm:$0xff]
  %v50 = vld [vmem:[%s0 + $0xf0] sm:$0xff]
  %v51 = vld [vmem:[%s0 + $0xf8] sm:$0xff]
  %v52 = vld [vmem:[%s0 + $0x100] sm:$0xff]
  %v53 = vld [vmem:[%s0 + $0x108] sm:$0xff]
  %v54 = vld [vmem:[%s0 + $0x110] sm:$0xff]
  %v55 = vld [vmem:[%s0 + $0x118] sm:$0xff]
  %v56 = vld [vmem:[%s1] sm:$0xff]
  %v57 = vld [vmem:[%s1 + $0x8] sm:$0xff]
  %v58 = vld [vmem:[%s1 + $0x10] sm:$0xff]
  %v59 = vld [vmem:[%s1 + $0x18] sm:$0xff]
  %v60 = vld [vmem:[%s1 + $0x20] sm:$0xff]
  %v61 = vld [vmem:[%s1 + $0x28] sm:$0xff]
  %v62 = vld [vmem:[%s1 + $0x30] sm:$0xff]
  %v63 = vld [vmem:[%s1 + $0x38] sm:$0xff]
  %v64 = vld [vmem:[%s1 + $0x40] sm:$0xff]
  %v65 = vld [vmem:[%s1 + $0x48] sm:$0xff]
  %v66 = vld [vmem:[%s1 + $0x50] sm:$0xff]
  %v67 = vld [vmem:[%s1 + $0x58] sm:$0xff]
  %v68 = vld [vmem:[%s1 + $0x60] sm:$0xff]
  %v69 = vld [vmem:[%s1 + $0x68] sm:$0xff]
  %v70 = vld [vmem:[%s1 + $0x70] sm:$0xff]
  %v71 = vld [vmem:[%s1 + $0x78] sm:$0xff]
  %v72 = vld [vmem:[%s1 + $0x80] sm:$0xff]
  %v73 = vld [vmem:[%s1 + $0x88] sm:$0xff]
  %v74 = vld [vmem:[%s1 + $0x90] sm:$0xff]
  %v75 = vld [vmem:[%s1 + $0x98] sm:$0xff]
  %v76 = vld [vmem:[%s1 + $0xa0] sm:$0xff]
  %v77 = vld [vmem:[%s1 + $0xa8] sm:$0xff]
  %v78 = vld [vmem:[%s1 + $0xb0] sm:$0xff]
  %v79 = vld [vmem:[%s1 + $0xb8] sm:$0xff]
  %v80 = vld [vmem:[%s1 + $0xc0] sm:$0xff]
  %v81 = vld [vmem:[%s1 + $0xc8] sm:$0xff]
  %v82 = vld [vmem:[%s1 + $0xd0] sm:$0xff]
  %v83 = vld [vmem:[%s1 + $0xd8] sm:$0xff]
  %v84 = vld [vmem:[%s1 + $0xe0] sm:$0xff]
  %v85 = vld [vmem:[%s1 + $0xe8] sm:$0xff]
  %v86 = vld [vmem:[%s1 + $0xf0] sm:$0xff]
  %v87 = vld [vmem:[%s1 + $0xf8] sm:$0xff]
  %v88 = vld [vmem:[%s1 + $0x100] sm:$0xff]
  %v89 = vld [vmem:[%s1 + $0x108] sm:$0xff]
  %v90 = vld [vmem:[%s1 + $0x110] sm:$0xff]
  %v91 = vld [vmem:[%s1 + $0x118] sm:$0xff]
  %v92 = vld [vmem:[%s1 + $0x120] sm:$0xff]
  %v93 = vld [vmem:[%s1 + $0x128] sm:$0xff]
  %v94 = vld [vmem:[%s1 + $0x130] sm:$0xff]
  %v95 = vld [vmem:[%s1 + $0x138] sm:$0xff]
  %v96 = vld [vmem:[%s1 + $0x140] sm:$0xff]
  %v97 = vld [vmem:[%s1 + $0x148] sm:$0xff]
  %v98 = vld [vmem:[%s1 + $0x150] sm:$0xff]
  %v99 = vld [vmem:[%s1 + $0x158] sm:$0xff]
  %v100 = vld [vmem:[%s1 + $0x160] sm:$0xff]
  %v101 = vld [vmem:[%s1 + $0x168] sm:$0xff]
  %v102 = vld [vmem:[%s1 + $0x170] sm:$0xff]
  %v103 = vld [vmem:[%s1 + $0x178] sm:$0xff]
  %v104 = vld [vmem:[%s1 + $0x180] sm:$0xff]
  %v105 = vld [vmem:[%s1 + $0x188] sm:$0xff]
  %v106 = vld [vmem:[%s1 + $0x190] sm:$0xff]
  %v107 = vld [vmem:[%s1 + $0x198] sm:$0xff]
  %v108 = vld [vmem:[%s1 + $0x1a0] sm:$0xff]
  %v109 = vld [vmem:[%s1 + $0x1a8] sm:$0xff]
  %v110 = vld [vmem:[%s1 + $0x1b0] sm:$0xff]
  %v111 = vld [vmem:[%s1 + $0x1b8] sm:$0xff]
  %v112 = vld [vmem:[%s1 + $0x1c0] sm:$0xff]
  %v113 = vld [vmem:[%s1 + $0x1c8] sm:$0xff]
  %v114 = vld [vmem:[%s1 + $0x1d0] sm:$0xff]
  %v115 = vld [vmem:[%s1 + $0x1d8] sm:$0xff]
  %v116 = vld [vmem:[%s1 + $0x1e0] sm:$0xff]
  %v117 = vld [vmem:[%s1 + $0x1e8] sm:$0xff]
  %v118 = vld [vmem:[%s1 + $0x1f0] sm:$0xff]
  %v119 = vld [vmem:[%s1 + $0x1f8] sm:$0xff]
  %v120 = vld [vmem:[%s1 + $0x200] sm:$0xff]
  %v121 = vld [vmem:[%s1 + $0x208] sm:$0xff]
  %v122 = vld [vmem:[%s1 + $0x210] sm:$0xff]
  %v123 = vld [vmem:[%s1 + $0x218] sm:$0xff]
  %v124 = vld [vmem:[%s1 + $0x220] sm:$0xff]
  %v125 = vld [vmem:[%s1 + $0x228] sm:$0xff]
  %v126 = vld [vmem:[%s1 + $0x230] sm:$0xff]
  %v127 = vld [vmem:[%s1 + $0x238] sm:$0xff]
  %v128 = vld [vmem:[%s1 + $0x240] sm:$0xff]
  %v129 = vld [vmem:[%s1 + $0x248] sm:$0xff]
  %v130 = vld [vmem:[%s1 + $0x250] sm:$0xff]
  %v131 = vld [vmem:[%s1 + $0x258] sm:$0xff]
  %v132 = vld [vmem:[%s1 + $0x260] sm:$0xff]
  %v133 = vld [vmem:[%s1 + $0x268] sm:$0xff]
  %v134 = vld [vmem:[%s1 + $0x270] sm:$0xff]
  %v135 = vld [vmem:[%s1 + $0x278] sm:$0xff]
  %v136 = vld [vmem:[%s1 + $0x280] sm:$0xff]
  %v137 = vld [vmem:[%s1 + $0x288] sm:$0xff]
  %v138 = vld [vmem:[%s1 + $0x290] sm:$0xff]
  %v139 = vld [vmem:[%s1 + $0x298] sm:$0xff]
  %v140 = vld [vmem:[%s1 + $0x2a0] sm:$0xff]
  %v141 = vld [vmem:[%s1 + $0x2a8] sm:$0xff]
  %v142 = vld [vmem:[%s1 + $0x2b0] sm:$0xff]
  %v143 = vld [vmem:[%s1 + $0x2b8] sm:$0xff]
  %v144 = vld [vmem:[%s1 + $0x2c0] sm:$0xff]
  %v145 = vld [vmem:[%s1 + $0x2c8] sm:$0xff]
  %v146 = vld [vmem:[%s1 + $0x2d0] sm:$0xff]
  %v147 = vld [vmem:[%s1 + $0x2d8] sm:$0xff]
  %v148 = vld [vmem:[%s1 + $0x2e0] sm:$0xff]
  %v149 = vld [vmem:[%s1 + $0x2e8] sm:$0xff]
  %v150 = vld [vmem:[%s1 + $0x2f0] sm:$0xff]
  %v151 = vld [vmem:[%s1 + $0x2f8] sm:$0xff]
  %v152 = vld [vmem:[%s1 + $0x300] sm:$0xff]
  %v153 = vld [vmem:[%s1 + $0x308] sm:$0xff]
  %v154 = vld [vmem:[%s1 + $0x310] sm:$0xff]
  %v155 = vld [vmem:[%s1 + $0x318] sm:$0xff]
  %v156 = vld [vmem:[%s1 + $0x320] sm:$0xff]
  %v157 = vld [vmem:[%s1 + $0x328] sm:$0xff]
  %v158 = vld [vmem:[%s1 + $0x330] sm:$0xff]
  %v159 = vld [vmem:[%s1 + $0x338] sm:$0xff]
  %v160 = vld [vmem:[%s1 + $0x340] sm:$0xff]
  %v161 = vld [vmem:[%s1 + $0x348] sm:$0xff]
  %v162 = vld [vmem:[%s1 + $0x350] sm:$0xff]
  %v163 = vld [vmem:[%s1 + $0x358] sm:$0xff]
  %v164 = vld [vmem:[%s1 + $0x360] sm:$0xff]
  %v165 = vld [vmem:[%s1 + $0x368] sm:$0xff]
  %v166 = vld [vmem:[%s1 + $0x370] sm:$0xff]
  %v167 = vld [vmem:[%s1 + $0x378] sm:$0xff]
  %v168 = vld [vmem:[%s1 + $0x380] sm:$0xff]
  %v169 = vld [vmem:[%s1 + $0x388] sm:$0xff]
  %v170 = vld [vmem:[%s1 + $0x390] sm:$0xff]
  %v171 = vld [vmem:[%s1 + $0x398] sm:$0xff]
  %v172 = vld [vmem:[%s1 + $0x3a0] sm:$0xff]
  %v173 = vld [vmem:[%s1 + $0x3a8] sm:$0xff]
  %v174 = vld [vmem:[%s1 + $0x3b0] sm:$0xff]
  %v175 = vld [vmem:[%s1 + $0x3b8] sm:$0xff]
  %v176 = vld [vmem:[%s1 + $0x3c0] sm:$0xff]
  %v177 = vld [vmem:[%s1 + $0x3c8] sm:$0xff]
  %v178 = vld [vmem:[%s1 + $0x3d0] sm:$0xff]
  %v179 = vld [vmem:[%s1 + $0x3d8] sm:$0xff]
  %v180 = vld [vmem:[%s1 + $0x3e0] sm:$0xff]
  %v181 = vld [vmem:[%s1 + $0x3e8] sm:$0xff]
  %v182 = vld [vmem:[%s1 + $0x3f0] sm:$0xff]
  %v183 = vld [vmem:[%s1 + $0x3f8] sm:$0xff]
  %v184 = vld [vmem:[%s1 + $0x400] sm:$0xff]
  %v185 = vld [vmem:[%s1 + $0x408] sm:$0xff]
  %v186 = vld [vmem:[%s1 + $0x410] sm:$0xff]
  %v187 = vld [vmem:[%s1 + $0x418] sm:$0xff]
  %v188 = vld [vmem:[%s1 + $0x420] sm:$0xff]
  %v189 = vld [vmem:[%s1 + $0x428] sm:$0xff]
  %v190 = vld [vmem:[%s1 + $0x430] sm:$0xff]
  %v191 = vld [vmem:[%s1 + $0x438] sm:$0xff]
  %v192 = vld [vmem:[%s1 + $0x440] sm:$0xff]
  %v193 = vld [vmem:[%s1 + $0x448] sm:$0xff]
  %v194 = vld [vmem:[%s1 + $0x450] sm:$0xff]
  %v195 = vld [vmem:[%s1 + $0x458] sm:$0xff]
  %v196 = vld [vmem:[%s1 + $0x460] sm:$0xff]
  %v197 = vld [vmem:[%s1 + $0x468] sm:$0xff]
  %v198 = vld [vmem:[%s1 + $0x470] sm:$0xff]
  %v199 = vld [vmem:[%s1 + $0x478] sm:$0xff]
  %200 = vmatpush.msra.mxu0 %v71
  %201 = vmatpush.msra.mxu0 %v70
  %202 = vmatpush.msra.mxu0 %v69
  %203 = vmatpush.msra.mxu0 %v68
  %204 = vmatpush.msra.mxu0 %v67
  %205 = vmatpush.msra.mxu0 %v66
  %206 = vmatpush.msra.mxu0 %v65
  %207 = vmatpush.msra.mxu0 %v64
  %208 = vmatpush.msra.mxu0 %v63
  %209 = vmatpush.msra.mxu0 %v62
  %210 = vmatpush.msra.mxu0 %v61
  %211 = vmatpush.msra.mxu0 %v60
  %212 = vmatpush.msra.mxu0 %v59
  %213 = vmatpush.msra.mxu0 %v58
  %214 = vmatpush.msra.mxu0 %v57
  %215 = vmatpush.msra.mxu0 %v56
  %216 = vmatmul.f32.gmra.mxu0 %v20
  %v217 = vpop.f32.mrf.mxu0
  %v218 = vadd.f32 0.0, %v217
  %219 = vmatmul.f32.gmra.mxu0 %v29
  %v220 = vpop.f32.mrf.mxu0
  %v221 = vadd.f32 0.0, %v220
  %222 = vmatmul.f32.gmra.mxu0 %v38
  %v223 = vpop.f32.mrf.mxu0
  %v224 = vadd.f32 0.0, %v223
  %225 = vmatmul.f32.gmra.mxu0 %v47
  %v226 = vpop.f32.mrf.mxu0
  %v227 = vadd.f32 0.0, %v226
  %228 = vdwg.mxu0
  %229 = vmatpush.msra.mxu0 %v87
  %230 = vmatpush.msra.mxu0 %v86
  %231 = vmatpush.msra.mxu0 %v85
  %232 = vmatpush.msra.mxu0 %v84
  %233 = vmatpush.msra.mxu0 %v83
  %234 = vmatpush.msra.mxu0 %v82
  %235 = vmatpush.msra.mxu0 %v81
  %236 = vmatpush.msra.mxu0 %v80
  %237 = vmatpush.msra.mxu0 %v79
  %238 = vmatpush.msra.mxu0 %v78
  %239 = vmatpush.msra.mxu0 %v77
  %240 = vmatpush.msra.mxu0 %v76
  %241 = vmatpush.msra.mxu0 %v75
  %242 = vmatpush.msra.mxu0 %v74
  %243 = vmatpush.msra.mxu0 %v73
  %244 = vmatpush.msra.mxu0 %v72
  %245 = vmatmul.f32.gmra.mxu0 %v21
  %v246 = vpop.f32.mrf.mxu0
  %v247 = vadd.f32 %v218, %v246
  %248 = vmatmul.f32.gmra.mxu0 %v30
  %v249 = vpop.f32.mrf.mxu0
  %v250 = vadd.f32 %v221, %v249
  %251 = vmatmul.f32.gmra.mxu0 %v39
  %v252 = vpop.f32.mrf.mxu0
  %v253 = vadd.f32 %v224, %v252
  %254 = vmatmul.f32.gmra.mxu0 %v48
  %v255 = vpop.f32.mrf.mxu0
  %v256 = vadd.f32 %v227, %v255
  %257 = vdwg.mxu0
  %258 = vmatpush.msra.mxu0 %v103
  %259 = vmatpush.msra.mxu0 %v102
  %260 = vmatpush.msra.mxu0 %v101
  %261 = vmatpush.msra.mxu0 %v100
  %262 = vmatpush.msra.mxu0 %v99
  %263 = vmatpush.msra.mxu0 %v98
  %264 = vmatpush.msra.mxu0 %v97
  %265 = vmatpush.msra.mxu0 %v96
  %266 = vmatpush.msra.mxu0 %v95
  %267 = vmatpush.msra.mxu0 %v94
  %268 = vmatpush.msra.mxu0 %v93
  %269 = vmatpush.msra.mxu0 %v92
  %270 = vmatpush.msra.mxu0 %v91
  %271 = vmatpush.msra.mxu0 %v90
  %272 = vmatpush.msra.mxu0 %v89
  %273 = vmatpush.msra.mxu0 %v88
  %274 = vmatmul.f32.gmra.mxu0 %v22
  %v275 = vpop.f32.mrf.mxu0
  %v276 = vadd.f32 %v247, %v275
  %277 = vmatmul.f32.gmra.mxu0 %v31
  %v278 = vpop.f32.mrf.mxu0
  %v279 = vadd.f32 %v250, %v278
  %280 = vmatmul.f32.gmra.mxu0 %v40
  %v281 = vpop.f32.mrf.mxu0
  %v282 = vadd.f32 %v253, %v281
  %283 = vmatmul.f32.gmra.mxu0 %v49
  %v284 = vpop.f32.mrf.mxu0
  %v285 = vadd.f32 %v256, %v284
  %286 = vdwg.mxu0
  %287 = vmatpush.msra.mxu0 %v119
  %288 = vmatpush.msra.mxu0 %v118
  %289 = vmatpush.msra.mxu0 %v117
  %290 = vmatpush.msra.mxu0 %v116
  %291 = vmatpush.msra.mxu0 %v115
  %292 = vmatpush.msra.mxu0 %v114
  %293 = vmatpush.msra.mxu0 %v113
  %294 = vmatpush.msra.mxu0 %v112
  %295 = vmatpush.msra.mxu0 %v111
  %296 = vmatpush.msra.mxu0 %v110
  %297 = vmatpush.msra.mxu0 %v109
  %298 = vmatpush.msra.mxu0 %v108
  %299 = vmatpush.msra.mxu0 %v107
  %300 = vmatpush.msra.mxu0 %v106
  %301 = vmatpush.msra.mxu0 %v105
  %302 = vmatpush.msra.mxu0 %v104
  %303 = vmatmul.f32.gmra.mxu0 %v23
  %v304 = vpop.f32.mrf.mxu0
  %v305 = vadd.f32 %v276, %v304
  %306 = vmatmul.f32.gmra.mxu0 %v32
  %v307 = vpop.f32.mrf.mxu0
  %v308 = vadd.f32 %v279, %v307
  %309 = vmatmul.f32.gmra.mxu0 %v41
  %v310 = vpop.f32.mrf.mxu0
  %v311 = vadd.f32 %v282, %v310
  %312 = vmatmul.f32.gmra.mxu0 %v50
  %v313 = vpop.f32.mrf.mxu0
  %v314 = vadd.f32 %v285, %v313
  %315 = vdwg.mxu0
  %316 = vmatpush.msra.mxu0 %v135
  %317 = vmatpush.msra.mxu0 %v134
  %318 = vmatpush.msra.mxu0 %v133
  %319 = vmatpush.msra.mxu0 %v132
  %320 = vmatpush.msra.mxu0 %v131
  %321 = vmatpush.msra.mxu0 %v130
  %322 = vmatpush.msra.mxu0 %v129
  %323 = vmatpush.msra.mxu0 %v128
  %324 = vmatpush.msra.mxu0 %v127
  %325 = vmatpush.msra.mxu0 %v126
  %326 = vmatpush.msra.mxu0 %v125
  %327 = vmatpush.msra.mxu0 %v124
  %328 = vmatpush.msra.mxu0 %v123
  %329 = vmatpush.msra.mxu0 %v122
  %330 = vmatpush.msra.mxu0 %v121
  %331 = vmatpush.msra.mxu0 %v120
  %332 = vmatmul.f32.gmra.mxu0 %v24
  %v333 = vpop.f32.mrf.mxu0
  %v334 = vadd.f32 %v305, %v333
  %335 = vmatmul.f32.gmra.mxu0 %v33
  %v336 = vpop.f32.mrf.mxu0
  %v337 = vadd.f32 %v308, %v336
  %338 = vmatmul.f32.gmra.mxu0 %v42
  %v339 = vpop.f32.mrf.mxu0
  %v340 = vadd.f32 %v311, %v339
  %341 = vmatmul.f32.gmra.mxu0 %v51
  %v342 = vpop.f32.mrf.mxu0
  %v343 = vadd.f32 %v314, %v342
  %344 = vdwg.mxu0
  %345 = vmatpush.msra.mxu0 %v151
  %346 = vmatpush.msra.mxu0 %v150
  %347 = vmatpush.msra.mxu0 %v149
  %348 = vmatpush.msra.mxu0 %v148
  %349 = vmatpush.msra.mxu0 %v147
  %350 = vmatpush.msra.mxu0 %v146
  %351 = vmatpush.msra.mxu0 %v145
  %352 = vmatpush.msra.mxu0 %v144
  %353 = vmatpush.msra.mxu0 %v143
  %354 = vmatpush.msra.mxu0 %v142
  %355 = vmatpush.msra.mxu0 %v141
  %356 = vmatpush.msra.mxu0 %v140
  %357 = vmatpush.msra.mxu0 %v139
  %358 = vmatpush.msra.mxu0 %v138
  %359 = vmatpush.msra.mxu0 %v137
  %360 = vmatpush.msra.mxu0 %v136
  %361 = vmatmul.f32.gmra.mxu0 %v25
  %v362 = vpop.f32.mrf.mxu0
  %v363 = vadd.f32 %v334, %v362
  %364 = vmatmul.f32.gmra.mxu0 %v34
  %v365 = vpop.f32.mrf.mxu0
  %v366 = vadd.f32 %v337, %v365
  %367 = vmatmul.f32.gmra.mxu0 %v43
  %v368 = vpop.f32.mrf.mxu0
  %v369 = vadd.f32 %v340, %v368
  %370 = vmatmul.f32.gmra.mxu0 %v52
  %v371 = vpop.f32.mrf.mxu0
  %v372 = vadd.f32 %v343, %v371
  %373 = vdwg.mxu0
  %374 = vmatpush.msra.mxu0 %v167
  %375 = vmatpush.msra.mxu0 %v166
  %376 = vmatpush.msra.mxu0 %v165
  %377 = vmatpush.msra.mxu0 %v164
  %378 = vmatpush.msra.mxu0 %v163
  %379 = vmatpush.msra.mxu0 %v162
  %380 = vmatpush.msra.mxu0 %v161
  %381 = vmatpush.msra.mxu0 %v160
  %382 = vmatpush.msra.mxu0 %v159
  %383 = vmatpush.msra.mxu0 %v158
  %384 = vmatpush.msra.mxu0 %v157
  %385 = vmatpush.msra.mxu0 %v156
  %386 = vmatpush.msra.mxu0 %v155
  %387 = vmatpush.msra.mxu0 %v154
  %388 = vmatpush.msra.mxu0 %v153
  %389 = vmatpush.msra.mxu0 %v152
  %390 = vmatmul.f32.gmra.mxu0 %v26
  %v391 = vpop.f32.mrf.mxu0
  %v392 = vadd.f32 %v363, %v391
  %393 = vmatmul.f32.gmra.mxu0 %v35
  %v394 = vpop.f32.mrf.mxu0
  %v395 = vadd.f32 %v366, %v394
  %396 = vmatmul.f32.gmra.mxu0 %v44
  %v397 = vpop.f32.mrf.mxu0
  %v398 = vadd.f32 %v369, %v397
  %399 = vmatmul.f32.gmra.mxu0 %v53
  %v400 = vpop.f32.mrf.mxu0
  %v401 = vadd.f32 %v372, %v400
  %402 = vdwg.mxu0
  %403 = vmatpush.msra.mxu0 %v183
  %404 = vmatpush.msra.mxu0 %v182
  %405 = vmatpush.msra.mxu0 %v181
  %406 = vmatpush.msra.mxu0 %v180
  %407 = vmatpush.msra.mxu0 %v179
  %408 = vmatpush.msra.mxu0 %v178
  %409 = vmatpush.msra.mxu0 %v177
  %410 = vmatpush.msra.mxu0 %v176
  %411 = vmatpush.msra.mxu0 %v175
  %412 = vmatpush.msra.mxu0 %v174
  %413 = vmatpush.msra.mxu0 %v173
  %414 = vmatpush.msra.mxu0 %v172
  %415 = vmatpush.msra.mxu0 %v171
  %416 = vmatpush.msra.mxu0 %v170
  %417 = vmatpush.msra.mxu0 %v169
  %418 = vmatpush.msra.mxu0 %v168
  %419 = vmatmul.f32.gmra.mxu0 %v27
  %v420 = vpop.f32.mrf.mxu0
  %v421 = vadd.f32 %v392, %v420
  %422 = vmatmul.f32.gmra.mxu0 %v36
  %v423 = vpop.f32.mrf.mxu0
  %v424 = vadd.f32 %v395, %v423
  %425 = vmatmul.f32.gmra.mxu0 %v45
  %v426 = vpop.f32.mrf.mxu0
  %v427 = vadd.f32 %v398, %v426
  %428 = vmatmul.f32.gmra.mxu0 %v54
  %v429 = vpop.f32.mrf.mxu0
  %v430 = vadd.f32 %v401, %v429
  %431 = vdwg.mxu0
  %432 = vmatpush.msra.mxu0 %v199
  %433 = vmatpush.msra.mxu0 %v198
  %434 = vmatpush.msra.mxu0 %v197
  %435 = vmatpush.msra.mxu0 %v196
  %436 = vmatpush.msra.mxu0 %v195
  %437 = vmatpush.msra.mxu0 %v194
  %438 = vmatpush.msra.mxu0 %v193
  %439 = vmatpush.msra.mxu0 %v192
  %440 = vmatpush.msra.mxu0 %v191
  %441 = vmatpush.msra.mxu0 %v190
  %442 = vmatpush.msra.mxu0 %v189
  %443 = vmatpush.msra.mxu0 %v188
  %444 = vmatpush.msra.mxu0 %v187
  %445 = vmatpush.msra.mxu0 %v186
  %446 = vmatpush.msra.mxu0 %v185
  %447 = vmatpush.msra.mxu0 %v184
  %448 = vmatmul.f32.gmra.mxu0 %v28
  %v449 = vpop.f32.mrf.mxu0
  %v450 = vadd.f32 %v421, %v449
  %451 = vmatmul.f32.gmra.mxu0 %v37
  %v452 = vpop.f32.mrf.mxu0
  %v453 = vadd.f32 %v424, %v452
  %454 = vmatmul.f32.gmra.mxu0 %v46
  %v455 = vpop.f32.mrf.mxu0
  %v456 = vadd.f32 %v427, %v455
  %457 = vmatmul.f32.gmra.mxu0 %v55
  %v458 = vpop.f32.mrf.mxu0
  %v459 = vadd.f32 %v430, %v458
  %460 = vdwg.mxu0
  %v461 = vadd.f32 %v450, %v453
  %v462 = vadd.f32 %v461, %v456
  %v463 = vadd.f32 %v462, %v459
  %v464 = vrot.slane %v463, 4
  %v465 = vadd.f32 %v463, %v464
  %v466 = vrot.slane %v465, 2
  %v467 = vadd.f32 %v465, %v466
  %v468 = vrot.slane %v467, 1
  %v469 = vadd.f32 %v467, %v468
  %v470 = vrcp.pop 32.0
  %v471 = vmul.f32 32.0, %v470
  %v472 = vsub.f32 1.0, %v471
  %v473 = vmul.f32 %v470, %v472
  %v474 = vadd.f32 %v470, %v473
  %vm475 = vweird.f32 %v470
  %v476 = vsel %vm475, %v470, %v474
  %v477 = vmul.f32 %v469, %v476
  %v478 = vsub.f32 %v450, %v477
  %v479 = vsub.f32 %v453, %v477
  %v480 = vsub.f32 %v456, %v477
  %v481 = vsub.f32 %v459, %v477
  %v482 = vmul.f32 %v478, %v478
  %v483 = vmul.f32 %v479, %v479
  %v484 = vmul.f32 %v480, %v480
  %v485 = vmul.f32 %v481, %v481
  %v486 = vadd.f32 %v482, %v483
  %v487 = vadd.f32 %v486, %v484
  %v488 = vadd.f32 %v487, %v485
  %v489 = vrot.slane %v488, 4
  %v490 = vadd.f32 %v488, %v489
  %v491 = vrot.slane %v490, 2
  %v492 = vadd.f32 %v490, %v491
  %v493 = vrot.slane %v492, 1
  %v494 = vadd.f32 %v492, %v493
  %v495 = vmul.f32 %v494, %v476
  %v496 = vadd.f32 %v495, 1e-05
  %v497 = vrsqrt.pop %v496
  %v498 = vmul.f32 %v497, %v496
  %v499 = vmul.f32 %v498, %v497
  %v500 = vmul.f32 0.5, %v499
  %v501 = vsub.f32 1.5, %v500
  %v502 = vmul.f32 %v497, %v501
  %vm503 = vweird.f32 %v496
  %vm504 = vweird.f32 %v497
  %vm505 = vmor %vm503, %vm504
  %v506 = vsel %vm505, %v497, %v502
  %v507 = vld [vmem:[%s2] sm:$0x1]
  %v508 = vmul.f32 %v506, %v507
  %v509 = vperm.slane %v508, 0
  %v510 = vmul.f32 %v478, %v509
  %v511 = vmul.f32 %v479, %v509
  %v512 = vmul.f32 %v480, %v509
  %v513 = vmul.f32 %v481, %v509
  %v514 = vld [vmem:[%s3] sm:$0x1]
  %v516 = vperm.slane %v514, 0
  %v518 = vadd.f32 %v510, %v516
  %v519 = vadd.f32 %v511, %v516
  %v520 = vadd.f32 %v512, %v516
  %v521 = vadd.f32 %v513, %v516
  %v522 = vld [vmem:[%s4] sm:$0xff]
  %v523 = vld [vmem:[%s4 + $0x8] sm:$0xff]
  %v524 = vld [vmem:[%s4 + $0x10] sm:$0xff]
  %v525 = vld [vmem:[%s4 + $0x18] sm:$0xff]
  %v526 = vadd.f32 %v518, %v522
  %v527 = vadd.f32 %v519, %v523
  %v528 = vadd.f32 %v520, %v524
  %v529 = vadd.f32 %v521, %v525
  %530 = vst [vmem:[%s5] sm:$0xff] %v526
  %531 = vst [vmem:[%s5 + $0x8] sm:$0xff] %v527
  %532 = vst [vmem:[%s5 + $0x10] sm:$0xff] %v528
  %533 = vst [vmem:[%s5 + $0x18] sm:$0xff] %v529
  // Predicated region
  $region22: #{encoder_forward.12} parent=0 // pred_check
    _
  $region23: #{encoder_forward.12} parent=0 // pred_check_branch
    %535 = sbr.rel (0) target = $region25
  $region24: #{encoder_forward.12} parent=0 // pred_region
    _
  $region25: #{encoder_forward.12} parent=0 // pred_fallthru
    _
  // Predicated region
  $region26: #{encoder_forward.12} parent=0 // pred_check
    _
  $region27: #{encoder_forward.12} parent=0 // pred_check_branch
    %537 = sbr.rel (0) target = $region29
  $region28: #{encoder_forward.12} parent=0 // pred_region
    _
  $region29: #{encoder_forward.12} parent=0 // pred_fallthru
    _

// kernel: encoder_forward.15
$region0: #{encoder_forward.15}
  #allocation0 [shape = 'u32[]', space=smem, size = 0x4, offset = 0x4, fixed_abs, tag = 'smem constant byte address 0x4 - core index']
  #allocation1 [shape = 'u32[72,128]{1,0:T(1,128)}', space=vmem, size = 0x9000, scoped, tag = 'internal scratch']
  %s0 = inlined_call_operand.vmem [shape: f32[32,1152], index: 0, kind: input, shape index: {}]
  %s1 = inlined_call_operand.vmem [shape: f32[1152,16], index: 1, kind: input, shape index: {}]
  %s2 = inlined_call_operand.hbm [shape: f32[32,16], index: 2, kind: output, shape index: {}]
  %s3 = sld [smem:[#allocation0]]
  $region18: #{encoder_forward.15} parent=0
    _
  %s5 = ssub.s32 1, %s3
  %s6 = scalar_select 0, %s5, %s3
  $region1: #{encoder_forward.15} parent=0
    #allocation2 [shape = 'u8[16384]{0}', space=vmem, size = 0x4000, scoped, tag = 'output window, operand 0, single buffered']
    #allocation3 [shape = 's32[1]{0}', space=sflag, size = 0x4, scoped, tag = 'scoped memory for encoder_forward.15']
    %7 = vsyncpa [#allocation3], 0
    // Predicated region
    $region2: #{encoder_forward.15} parent=1 // pred_check
      _
    $region3: #{encoder_forward.15} parent=1 // pred_check_branch
      %9 = sbr.rel (0) target = $region5
    $region4: #{encoder_forward.15} parent=1 // pred_region
      _
    $region5: #{encoder_forward.15} parent=1 // pred_fallthru
      _
    // Predicated region
    $region6: #{encoder_forward.15} parent=1 // pred_check
      _
    $region7: #{encoder_forward.15} parent=1 // pred_check_branch
      %11 = sbr.rel (0) target = $region9
    $region8: #{encoder_forward.15} parent=1 // pred_region
      _
    $region9: #{encoder_forward.15} parent=1 // pred_fallthru
      _
    %v12 = vld [vmem:[%s0] sm:$0xff]
    %v13 = vld [vmem:[%s0 + $0x8] sm:$0xff]
    %v14 = vld [vmem:[%s0 + $0x10] sm:$0xff]
    %v15 = vld [vmem:[%s0 + $0x18] sm:$0xff]
    %v16 = vld [vmem:[%s0 + $0x20] sm:$0xff]
    %v17 = vld [vmem:[%s0 + $0x28] sm:$0xff]
    %v18 = vld [vmem:[%s0 + $0x30] sm:$0xff]
    %v19 = vld [vmem:[%s0 + $0x38] sm:$0xff]
    %v20 = vld [vmem:[%s0 + $0x40] sm:$0xff]
    %v21 = vld [vmem:[%s0 + $0x48] sm:$0xff]
    %v22 = vld [vmem:[%s0 + $0x50] sm:$0xff]
    %v23 = vld [vmem:[%s0 + $0x58] sm:$0xff]
    %v24 = vld [vmem:[%s0 + $0x60] sm:$0xff]
    %v25 = vld [vmem:[%s0 + $0x68] sm:$0xff]
    %v26 = vld [vmem:[%s0 + $0x70] sm:$0xff]
    %v27 = vld [vmem:[%s0 + $0x78] sm:$0xff]
    %v28 = vld [vmem:[%s0 + $0x80] sm:$0xff]
    %v29 = vld [vmem:[%s0 + $0x88] sm:$0xff]
    %v30 = vld [vmem:[%s0 + $0x90] sm:$0xff]
    %v31 = vld [vmem:[%s0 + $0x98] sm:$0xff]
    %v32 = vld [vmem:[%s0 + $0xa0] sm:$0xff]
    %v33 = vld [vmem:[%s0 + $0xa8] sm:$0xff]
    %v34 = vld [vmem:[%s0 + $0xb0] sm:$0xff]
    %v35 = vld [vmem:[%s0 + $0xb8] sm:$0xff]
    %v36 = vld [vmem:[%s0 + $0xc0] sm:$0xff]
    %v37 = vld [vmem:[%s0 + $0xc8] sm:$0xff]
    %v38 = vld [vmem:[%s0 + $0xd0] sm:$0xff]
    %v39 = vld [vmem:[%s0 + $0xd8] sm:$0xff]
    %v40 = vld [vmem:[%s0 + $0xe0] sm:$0xff]
    %v41 = vld [vmem:[%s0 + $0xe8] sm:$0xff]
    %v42 = vld [vmem:[%s0 + $0xf0] sm:$0xff]
    %v43 = vld [vmem:[%s0 + $0xf8] sm:$0xff]
    %v44 = vld [vmem:[%s0 + $0x100] sm:$0xff]
    %v45 = vld [vmem:[%s0 + $0x108] sm:$0xff]
    %v46 = vld [vmem:[%s0 + $0x110] sm:$0xff]
    %v47 = vld [vmem:[%s0 + $0x118] sm:$0xff]
    %v48 = vld [vmem:[%s1] sm:$0xff]
    %v49 = vld [vmem:[%s1 + $0x8] sm:$0xff]
    %v50 = vld [vmem:[%s1 + $0x10] sm:$0xff]
    %v51 = vld [vmem:[%s1 + $0x18] sm:$0xff]
    %v52 = vld [vmem:[%s1 + $0x20] sm:$0xff]
    %v53 = vld [vmem:[%s1 + $0x28] sm:$0xff]
    %v54 = vld [vmem:[%s1 + $0x30] sm:$0xff]
    %v55 = vld [vmem:[%s1 + $0x38] sm:$0xff]
    %v56 = vld [vmem:[%s1 + $0x40] sm:$0xff]
    %v57 = vld [vmem:[%s1 + $0x48] sm:$0xff]
    %v58 = vld [vmem:[%s1 + $0x50] sm:$0xff]
    %v59 = vld [vmem:[%s1 + $0x58] sm:$0xff]
    %v60 = vld [vmem:[%s1 + $0x60] sm:$0xff]
    %v61 = vld [vmem:[%s1 + $0x68] sm:$0xff]
    %v62 = vld [vmem:[%s1 + $0x70] sm:$0xff]
    %v63 = vld [vmem:[%s1 + $0x78] sm:$0xff]
    %v64 = vld [vmem:[%s1 + $0x80] sm:$0xff]
    %v65 = vld [vmem:[%s1 + $0x88] sm:$0xff]
    %v66 = vld [vmem:[%s1 + $0x90] sm:$0xff]
    %v67 = vld [vmem:[%s1 + $0x98] sm:$0xff]
    %v68 = vld [vmem:[%s1 + $0xa0] sm:$0xff]
    %v69 = vld [vmem:[%s1 + $0xa8] sm:$0xff]
    %v70 = vld [vmem:[%s1 + $0xb0] sm:$0xff]
    %v71 = vld [vmem:[%s1 + $0xb8] sm:$0xff]
    %v72 = vld [vmem:[%s1 + $0xc0] sm:$0xff]
    %v73 = vld [vmem:[%s1 + $0xc8] sm:$0xff]
    %v74 = vld [vmem:[%s1 + $0xd0] sm:$0xff]
    %v75 = vld [vmem:[%s1 + $0xd8] sm:$0xff]
    %v76 = vld [vmem:[%s1 + $0xe0] sm:$0xff]
    %v77 = vld [vmem:[%s1 + $0xe8] sm:$0xff]
    %v78 = vld [vmem:[%s1 + $0xf0] sm:$0xff]
    %v79 = vld [vmem:[%s1 + $0xf8] sm:$0xff]
    %v80 = vld [vmem:[%s1 + $0x100] sm:$0xff]
    %v81 = vld [vmem:[%s1 + $0x108] sm:$0xff]
    %v82 = vld [vmem:[%s1 + $0x110] sm:$0xff]
    %v83 = vld [vmem:[%s1 + $0x118] sm:$0xff]
    %v84 = vld [vmem:[%s1 + $0x120] sm:$0xff]
    %v85 = vld [vmem:[%s1 + $0x128] sm:$0xff]
    %v86 = vld [vmem:[%s1 + $0x130] sm:$0xff]
    %v87 = vld [vmem:[%s1 + $0x138] sm:$0xff]
    %v88 = vld [vmem:[%s1 + $0x140] sm:$0xff]
    %v89 = vld [vmem:[%s1 + $0x148] sm:$0xff]
    %v90 = vld [vmem:[%s1 + $0x150] sm:$0xff]
    %v91 = vld [vmem:[%s1 + $0x158] sm:$0xff]
    %v92 = vld [vmem:[%s1 + $0x160] sm:$0xff]
    %v93 = vld [vmem:[%s1 + $0x168] sm:$0xff]
    %v94 = vld [vmem:[%s1 + $0x170] sm:$0xff]
    %v95 = vld [vmem:[%s1 + $0x178] sm:$0xff]
    %v96 = vld [vmem:[%s1 + $0x180] sm:$0xff]
    %v97 = vld [vmem:[%s1 + $0x188] sm:$0xff]
    %v98 = vld [vmem:[%s1 + $0x190] sm:$0xff]
    %v99 = vld [vmem:[%s1 + $0x198] sm:$0xff]
    %v100 = vld [vmem:[%s1 + $0x1a0] sm:$0xff]
    %v101 = vld [vmem:[%s1 + $0x1a8] sm:$0xff]
    %v102 = vld [vmem:[%s1 + $0x1b0] sm:$0xff]
    %v103 = vld [vmem:[%s1 + $0x1b8] sm:$0xff]
    %v104 = vld [vmem:[%s1 + $0x1c0] sm:$0xff]
    %v105 = vld [vmem:[%s1 + $0x1c8] sm:$0xff]
    %v106 = vld [vmem:[%s1 + $0x1d0] sm:$0xff]
    %v107 = vld [vmem:[%s1 + $0x1d8] sm:$0xff]
    %v108 = vld [vmem:[%s1 + $0x1e0] sm:$0xff]
    %v109 = vld [vmem:[%s1 + $0x1e8] sm:$0xff]
    %v110 = vld [vmem:[%s1 + $0x1f0] sm:$0xff]
    %v111 = vld [vmem:[%s1 + $0x1f8] sm:$0xff]
    %v112 = vld [vmem:[%s1 + $0x200] sm:$0xff]
    %v113 = vld [vmem:[%s1 + $0x208] sm:$0xff]
    %v114 = vld [vmem:[%s1 + $0x210] sm:$0xff]
    %v115 = vld [vmem:[%s1 + $0x218] sm:$0xff]
    %v116 = vld [vmem:[%s1 + $0x220] sm:$0xff]
    %v117 = vld [vmem:[%s1 + $0x228] sm:$0xff]
    %v118 = vld [vmem:[%s1 + $0x230] sm:$0xff]
    %v119 = vld [vmem:[%s1 + $0x238] sm:$0xff]
    %v120 = vld [vmem:[%s1 + $0x240] sm:$0xff]
    %v121 = vld [vmem:[%s1 + $0x248] sm:$0xff]
    %v122 = vld [vmem:[%s1 + $0x250] sm:$0xff]
    %v123 = vld [vmem:[%s1 + $0x258] sm:$0xff]
    %v124 = vld [vmem:[%s1 + $0x260] sm:$0xff]
    %v125 = vld [vmem:[%s1 + $0x268] sm:$0xff]
    %v126 = vld [vmem:[%s1 + $0x270] sm:$0xff]
    %v127 = vld [vmem:[%s1 + $0x278] sm:$0xff]
    %v128 = vld [vmem:[%s1 + $0x280] sm:$0xff]
    %v129 = vld [vmem:[%s1 + $0x288] sm:$0xff]
    %v130 = vld [vmem:[%s1 + $0x290] sm:$0xff]
    %v131 = vld [vmem:[%s1 + $0x298] sm:$0xff]
    %v132 = vld [vmem:[%s1 + $0x2a0] sm:$0xff]
    %v133 = vld [vmem:[%s1 + $0x2a8] sm:$0xff]
    %v134 = vld [vmem:[%s1 + $0x2b0] sm:$0xff]
    %v135 = vld [vmem:[%s1 + $0x2b8] sm:$0xff]
    %v136 = vld [vmem:[%s1 + $0x2c0] sm:$0xff]
    %v137 = vld [vmem:[%s1 + $0x2c8] sm:$0xff]
    %v138 = vld [vmem:[%s1 + $0x2d0] sm:$0xff]
    %v139 = vld [vmem:[%s1 + $0x2d8] sm:$0xff]
    %v140 = vld [vmem:[%s1 + $0x2e0] sm:$0xff]
    %v141 = vld [vmem:[%s1 + $0x2e8] sm:$0xff]
    %v142 = vld [vmem:[%s1 + $0x2f0] sm:$0xff]
    %v143 = vld [vmem:[%s1 + $0x2f8] sm:$0xff]
    %v144 = vld [vmem:[%s1 + $0x300] sm:$0xff]
    %v145 = vld [vmem:[%s1 + $0x308] sm:$0xff]
    %v146 = vld [vmem:[%s1 + $0x310] sm:$0xff]
    %v147 = vld [vmem:[%s1 + $0x318] sm:$0xff]
    %v148 = vld [vmem:[%s1 + $0x320] sm:$0xff]
    %v149 = vld [vmem:[%s1 + $0x328] sm:$0xff]
    %v150 = vld [vmem:[%s1 + $0x330] sm:$0xff]
    %v151 = vld [vmem:[%s1 + $0x338] sm:$0xff]
    %v152 = vld [vmem:[%s1 + $0x340] sm:$0xff]
    %v153 = vld [vmem:[%s1 + $0x348] sm:$0xff]
    %v154 = vld [vmem:[%s1 + $0x350] sm:$0xff]
    %v155 = vld [vmem:[%s1 + $0x358] sm:$0xff]
    %v156 = vld [vmem:[%s1 + $0x360] sm:$0xff]
    %v157 = vld [vmem:[%s1 + $0x368] sm:$0xff]
    %v158 = vld [vmem:[%s1 + $0x370] sm:$0xff]
    %v159 = vld [vmem:[%s1 + $0x378] sm:$0xff]
    %v160 = vld [vmem:[%s1 + $0x380] sm:$0xff]
    %v161 = vld [vmem:[%s1 + $0x388] sm:$0xff]
    %v162 = vld [vmem:[%s1 + $0x390] sm:$0xff]
    %v163 = vld [vmem:[%s1 + $0x398] sm:$0xff]
    %v164 = vld [vmem:[%s1 + $0x3a0] sm:$0xff]
    %v165 = vld [vmem:[%s1 + $0x3a8] sm:$0xff]
    %v166 = vld [vmem:[%s1 + $0x3b0] sm:$0xff]
    %v167 = vld [vmem:[%s1 + $0x3b8] sm:$0xff]
    %v168 = vld [vmem:[%s1 + $0x3c0] sm:$0xff]
    %v169 = vld [vmem:[%s1 + $0x3c8] sm:$0xff]
    %v170 = vld [vmem:[%s1 + $0x3d0] sm:$0xff]
    %v171 = vld [vmem:[%s1 + $0x3d8] sm:$0xff]
    %v172 = vld [vmem:[%s1 + $0x3e0] sm:$0xff]
    %v173 = vld [vmem:[%s1 + $0x3e8] sm:$0xff]
    %v174 = vld [vmem:[%s1 + $0x3f0] sm:$0xff]
    %v175 = vld [vmem:[%s1 + $0x3f8] sm:$0xff]
    %v176 = vld [vmem:[%s1 + $0x400] sm:$0xff]
    %v177 = vld [vmem:[%s1 + $0x408] sm:$0xff]
    %v178 = vld [vmem:[%s1 + $0x410] sm:$0xff]
    %v179 = vld [vmem:[%s1 + $0x418] sm:$0xff]
    %v180 = vld [vmem:[%s1 + $0x420] sm:$0xff]
    %v181 = vld [vmem:[%s1 + $0x428] sm:$0xff]
    %v182 = vld [vmem:[%s1 + $0x430] sm:$0xff]
    %v183 = vld [vmem:[%s1 + $0x438] sm:$0xff]
    %v184 = vld [vmem:[%s1 + $0x440] sm:$0xff]
    %v185 = vld [vmem:[%s1 + $0x448] sm:$0xff]
    %v186 = vld [vmem:[%s1 + $0x450] sm:$0xff]
    %v187 = vld [vmem:[%s1 + $0x458] sm:$0xff]
    %v188 = vld [vmem:[%s1 + $0x460] sm:$0xff]
    %v189 = vld [vmem:[%s1 + $0x468] sm:$0xff]
    %v190 = vld [vmem:[%s1 + $0x470] sm:$0xff]
    %v191 = vld [vmem:[%s1 + $0x478] sm:$0xff]
    %192 = vmatpush.msra.mxu0 %v63
    %193 = vmatpush.msra.mxu0 %v62
    %194 = vmatpush.msra.mxu0 %v61
    %195 = vmatpush.msra.mxu0 %v60
    %196 = vmatpush.msra.mxu0 %v59
    %197 = vmatpush.msra.mxu0 %v58
    %198 = vmatpush.msra.mxu0 %v57
    %199 = vmatpush.msra.mxu0 %v56
    %200 = vmatpush.msra.mxu0 %v55
    %201 = vmatpush.msra.mxu0 %v54
    %202 = vmatpush.msra.mxu0 %v53
    %203 = vmatpush.msra.mxu0 %v52
    %204 = vmatpush.msra.mxu0 %v51
    %205 = vmatpush.msra.mxu0 %v50
    %206 = vmatpush.msra.mxu0 %v49
    %207 = vmatpush.msra.mxu0 %v48
    %208 = vmatmul.f32.gmra.mxu0 %v12
    %v209 = vpop.f32.mrf.mxu0
    %v210 = vadd.f32 0.0, %v209
    %211 = vmatmul.f32.gmra.mxu0 %v21
    %v212 = vpop.f32.mrf.mxu0
    %v213 = vadd.f32 0.0, %v212
    %214 = vmatmul.f32.gmra.mxu0 %v30
    %v215 = vpop.f32.mrf.mxu0
    %v216 = vadd.f32 0.0, %v215
    %217 = vmatmul.f32.gmra.mxu0 %v39
    %v218 = vpop.f32.mrf.mxu0
    %v219 = vadd.f32 0.0, %v218
    %220 = vdwg.mxu0
    %221 = vmatpush.msra.mxu0 %v79
    %222 = vmatpush.msra.mxu0 %v78
    %223 = vmatpush.msra.mxu0 %v77
    %224 = vmatpush.msra.mxu0 %v76
    %225 = vmatpush.msra.mxu0 %v75
    %226 = vmatpush.msra.mxu0 %v74
    %227 = vmatpush.msra.mxu0 %v73
    %228 = vmatpush.msra.mxu0 %v72
    %229 = vmatpush.msra.mxu0 %v71
    %230 = vmatpush.msra.mxu0 %v70
    %231 = vmatpush.msra.mxu0 %v69
    %232 = vmatpush.msra.mxu0 %v68
    %233 = vmatpush.msra.mxu0 %v67
    %234 = vmatpush.msra.mxu0 %v66
    %235 = vmatpush.msra.mxu0 %v65
    %236 = vmatpush.msra.mxu0 %v64
    %237 = vmatmul.f32.gmra.mxu0 %v13
    %v238 = vpop.f32.mrf.mxu0
    %v239 = vadd.f32 %v210, %v238
    %240 = vmatmul.f32.gmra.mxu0 %v22
    %v241 = vpop.f32.mrf.mxu0
    %v242 = vadd.f32 %v213, %v241
    %243 = vmatmul.f32.gmra.mxu0 %v31
    %v244 = vpop.f32.mrf.mxu0
    %v245 = vadd.f32 %v216, %v244
    %246 = vmatmul.f32.gmra.mxu0 %v40
    %v247 = vpop.f32.mrf.mxu0
    %v248 = vadd.f32 %v219, %v247
    %249 = vdwg.mxu0
    %250 = vmatpush.msra.mxu0 %v95
    %251 = vmatpush.msra.mxu0 %v94
    %252 = vmatpush.msra.mxu0 %v93
    %253 = vmatpush.msra.mxu0 %v92
    %254 = vmatpush.msra.mxu0 %v91
    %255 = vmatpush.msra.mxu0 %v90
    %256 = vmatpush.msra.mxu0 %v89
    %257 = vmatpush.msra.mxu0 %v88
    %258 = vmatpush.msra.mxu0 %v87
    %259 = vmatpush.msra.mxu0 %v86
    %260 = vmatpush.msra.mxu0 %v85
    %261 = vmatpush.msra.mxu0 %v84
    %262 = vmatpush.msra.mxu0 %v83
    %263 = vmatpush.msra.mxu0 %v82
    %264 = vmatpush.msra.mxu0 %v81
    %265 = vmatpush.msra.mxu0 %v80
    %266 = vmatmul.f32.gmra.mxu0 %v14
    %v267 = vpop.f32.mrf.mxu0
    %v268 = vadd.f32 %v239, %v267
    %269 = vmatmul.f32.gmra.mxu0 %v23
    %v270 = vpop.f32.mrf.mxu0
    %v271 = vadd.f32 %v242, %v270
    %272 = vmatmul.f32.gmra.mxu0 %v32
    %v273 = vpop.f32.mrf.mxu0
    %v274 = vadd.f32 %v245, %v273
    %275 = vmatmul.f32.gmra.mxu0 %v41
    %v276 = vpop.f32.mrf.mxu0
    %v277 = vadd.f32 %v248, %v276
    %278 = vdwg.mxu0
    %279 = vmatpush.msra.mxu0 %v111
    %280 = vmatpush.msra.mxu0 %v110
    %281 = vmatpush.msra.mxu0 %v109
    %282 = vmatpush.msra.mxu0 %v108
    %283 = vmatpush.msra.mxu0 %v107
    %284 = vmatpush.msra.mxu0 %v106
    %285 = vmatpush.msra.mxu0 %v105
    %286 = vmatpush.msra.mxu0 %v104
    %287 = vmatpush.msra.mxu0 %v103
    %288 = vmatpush.msra.mxu0 %v102
    %289 = vmatpush.msra.mxu0 %v101
    %290 = vmatpush.msra.mxu0 %v100
    %291 = vmatpush.msra.mxu0 %v99
    %292 = vmatpush.msra.mxu0 %v98
    %293 = vmatpush.msra.mxu0 %v97
    %294 = vmatpush.msra.mxu0 %v96
    %295 = vmatmul.f32.gmra.mxu0 %v15
    %v296 = vpop.f32.mrf.mxu0
    %v297 = vadd.f32 %v268, %v296
    %298 = vmatmul.f32.gmra.mxu0 %v24
    %v299 = vpop.f32.mrf.mxu0
    %v300 = vadd.f32 %v271, %v299
    %301 = vmatmul.f32.gmra.mxu0 %v33
    %v302 = vpop.f32.mrf.mxu0
    %v303 = vadd.f32 %v274, %v302
    %304 = vmatmul.f32.gmra.mxu0 %v42
    %v305 = vpop.f32.mrf.mxu0
    %v306 = vadd.f32 %v277, %v305
    %307 = vdwg.mxu0
    %308 = vmatpush.msra.mxu0 %v127
    %309 = vmatpush.msra.mxu0 %v126
    %310 = vmatpush.msra.mxu0 %v125
    %311 = vmatpush.msra.mxu0 %v124
    %312 = vmatpush.msra.mxu0 %v123
    %313 = vmatpush.msra.mxu0 %v122
    %314 = vmatpush.msra.mxu0 %v121
    %315 = vmatpush.msra.mxu0 %v120
    %316 = vmatpush.msra.mxu0 %v119
    %317 = vmatpush.msra.mxu0 %v118
    %318 = vmatpush.msra.mxu0 %v117
    %319 = vmatpush.msra.mxu0 %v116
    %320 = vmatpush.msra.mxu0 %v115
    %321 = vmatpush.msra.mxu0 %v114
    %322 = vmatpush.msra.mxu0 %v113
    %323 = vmatpush.msra.mxu0 %v112
    %324 = vmatmul.f32.gmra.mxu0 %v16
    %v325 = vpop.f32.mrf.mxu0
    %v326 = vadd.f32 %v297, %v325
    %327 = vmatmul.f32.gmra.mxu0 %v25
    %v328 = vpop.f32.mrf.mxu0
    %v329 = vadd.f32 %v300, %v328
    %330 = vmatmul.f32.gmra.mxu0 %v34
    %v331 = vpop.f32.mrf.mxu0
    %v332 = vadd.f32 %v303, %v331
    %333 = vmatmul.f32.gmra.mxu0 %v43
    %v334 = vpop.f32.mrf.mxu0
    %v335 = vadd.f32 %v306, %v334
    %336 = vdwg.mxu0
    %337 = vmatpush.msra.mxu0 %v143
    %338 = vmatpush.msra.mxu0 %v142
    %339 = vmatpush.msra.mxu0 %v141
    %340 = vmatpush.msra.mxu0 %v140
    %341 = vmatpush.msra.mxu0 %v139
    %342 = vmatpush.msra.mxu0 %v138
    %343 = vmatpush.msra.mxu0 %v137
    %344 = vmatpush.msra.mxu0 %v136
    %345 = vmatpush.msra.mxu0 %v135
    %346 = vmatpush.msra.mxu0 %v134
    %347 = vmatpush.msra.mxu0 %v133
    %348 = vmatpush.msra.mxu0 %v132
    %349 = vmatpush.msra.mxu0 %v131
    %350 = vmatpush.msra.mxu0 %v130
    %351 = vmatpush.msra.mxu0 %v129
    %352 = vmatpush.msra.mxu0 %v128
    %353 = vmatmul.f32.gmra.mxu0 %v17
    %v354 = vpop.f32.mrf.mxu0
    %v355 = vadd.f32 %v326, %v354
    %356 = vmatmul.f32.gmra.mxu0 %v26
    %v357 = vpop.f32.mrf.mxu0
    %v358 = vadd.f32 %v329, %v357
    %359 = vmatmul.f32.gmra.mxu0 %v35
    %v360 = vpop.f32.mrf.mxu0
    %v361 = vadd.f32 %v332, %v360
    %362 = vmatmul.f32.gmra.mxu0 %v44
    %v363 = vpop.f32.mrf.mxu0
    %v364 = vadd.f32 %v335, %v363
    %365 = vdwg.mxu0
    %366 = vmatpush.msra.mxu0 %v159
    %367 = vmatpush.msra.mxu0 %v158
    %368 = vmatpush.msra.mxu0 %v157
    %369 = vmatpush.msra.mxu0 %v156
    %370 = vmatpush.msra.mxu0 %v155
    %371 = vmatpush.msra.mxu0 %v154
    %372 = vmatpush.msra.mxu0 %v153
    %373 = vmatpush.msra.mxu0 %v152
    %374 = vmatpush.msra.mxu0 %v151
    %375 = vmatpush.msra.mxu0 %v150
    %376 = vmatpush.msra.mxu0 %v149
    %377 = vmatpush.msra.mxu0 %v148
    %378 = vmatpush.msra.mxu0 %v147
    %379 = vmatpush.msra.mxu0 %v146
    %380 = vmatpush.msra.mxu0 %v145
    %381 = vmatpush.msra.mxu0 %v144
    %382 = vmatmul.f32.gmra.mxu0 %v18
    %v383 = vpop.f32.mrf.mxu0
    %v384 = vadd.f32 %v355, %v383
    %385 = vmatmul.f32.gmra.mxu0 %v27
    %v386 = vpop.f32.mrf.mxu0
    %v387 = vadd.f32 %v358, %v386
    %388 = vmatmul.f32.gmra.mxu0 %v36
    %v389 = vpop.f32.mrf.mxu0
    %v390 = vadd.f32 %v361, %v389
    %391 = vmatmul.f32.gmra.mxu0 %v45
    %v392 = vpop.f32.mrf.mxu0
    %v393 = vadd.f32 %v364, %v392
    %394 = vdwg.mxu0
    %395 = vmatpush.msra.mxu0 %v175
    %396 = vmatpush.msra.mxu0 %v174
    %397 = vmatpush.msra.mxu0 %v173
    %398 = vmatpush.msra.mxu0 %v172
    %399 = vmatpush.msra.mxu0 %v171
    %400 = vmatpush.msra.mxu0 %v170
    %401 = vmatpush.msra.mxu0 %v169
    %402 = vmatpush.msra.mxu0 %v168
    %403 = vmatpush.msra.mxu0 %v167
    %404 = vmatpush.msra.mxu0 %v166
    %405 = vmatpush.msra.mxu0 %v165
    %406 = vmatpush.msra.mxu0 %v164
    %407 = vmatpush.msra.mxu0 %v163
    %408 = vmatpush.msra.mxu0 %v162
    %409 = vmatpush.msra.mxu0 %v161
    %410 = vmatpush.msra.mxu0 %v160
    %411 = vmatmul.f32.gmra.mxu0 %v19
    %v412 = vpop.f32.mrf.mxu0
    %v413 = vadd.f32 %v384, %v412
    %414 = vmatmul.f32.gmra.mxu0 %v28
    %v415 = vpop.f32.mrf.mxu0
    %v416 = vadd.f32 %v387, %v415
    %417 = vmatmul.f32.gmra.mxu0 %v37
    %v418 = vpop.f32.mrf.mxu0
    %v419 = vadd.f32 %v390, %v418
    %420 = vmatmul.f32.gmra.mxu0 %v46
    %v421 = vpop.f32.mrf.mxu0
    %v422 = vadd.f32 %v393, %v421
    %423 = vdwg.mxu0
    %424 = vmatpush.msra.mxu0 %v191
    %425 = vmatpush.msra.mxu0 %v190
    %426 = vmatpush.msra.mxu0 %v189
    %427 = vmatpush.msra.mxu0 %v188
    %428 = vmatpush.msra.mxu0 %v187
    %429 = vmatpush.msra.mxu0 %v186
    %430 = vmatpush.msra.mxu0 %v185
    %431 = vmatpush.msra.mxu0 %v184
    %432 = vmatpush.msra.mxu0 %v183
    %433 = vmatpush.msra.mxu0 %v182
    %434 = vmatpush.msra.mxu0 %v181
    %435 = vmatpush.msra.mxu0 %v180
    %436 = vmatpush.msra.mxu0 %v179
    %437 = vmatpush.msra.mxu0 %v178
    %438 = vmatpush.msra.mxu0 %v177
    %439 = vmatpush.msra.mxu0 %v176
    %440 = vmatmul.f32.gmra.mxu0 %v20
    %v441 = vpop.f32.mrf.mxu0
    %v442 = vadd.f32 %v413, %v441
    %443 = vmatmul.f32.gmra.mxu0 %v29
    %v444 = vpop.f32.mrf.mxu0
    %v445 = vadd.f32 %v416, %v444
    %446 = vmatmul.f32.gmra.mxu0 %v38
    %v447 = vpop.f32.mrf.mxu0
    %v448 = vadd.f32 %v419, %v447
    %449 = vmatmul.f32.gmra.mxu0 %v47
    %v450 = vpop.f32.mrf.mxu0
    %v451 = vadd.f32 %v422, %v450
    %452 = vdwg.mxu0
    %vm453 = vcmask 130048
    %454 = vst.msk [vmem:[#allocation2] sm:$0xff] %vm453, %v442
    %455 = vst.msk [vmem:[#allocation2 + $0x8] sm:$0xff] %vm453, %v445
    %456 = vst.msk [vmem:[#allocation2 + $0x10] sm:$0xff] %vm453, %v448
    %457 = vst.msk [vmem:[#allocation2 + $0x18] sm:$0xff] %vm453, %v451
    // Predicated region
    $region10: #{encoder_forward.15} parent=1 // pred_check
      _
    $region11: #{encoder_forward.15} parent=1 // pred_check_branch
      %459 = sbr.rel (0) target = $region13
    $region12: #{encoder_forward.15} parent=1 // pred_region
      %461 = vsyncadd [#allocation3], 0
      %s462 = sshll.u32 [#allocation2], 4
      %s463 = int_to_ptr.vmem [resolvable:$true] %s462
      %s464 = sshll.u32 %s2, 4
      %s465 = int_to_ptr.hbm [resolvable:$true] %s464
      %470 = dma.vmem_to_hbm [thread:$0]  %s463, 512, %s465, [#allocation3], 128, 128, 8
    $region13: #{encoder_forward.15} parent=1 // pred_fallthru
      _
    // Predicated region
    $region14: #{encoder_forward.15} parent=1 // pred_check
      _
    $region15: #{encoder_forward.15} parent=1 // pred_check_branch
      %472 = sbr.rel (0) target = $region17
    $region16: #{encoder_forward.15} parent=1 // pred_region
      %474 = dma.done [#allocation3], 512
    $region17: #{encoder_forward.15} parent=1 // pred_fallthru
      _
    %475 = vsyncpa [#allocation3], 1

</llo_original>
